<compile_context>
chip_gen: v7x
topology: tpu7x:2x2x1
jax: 0.10.0
libtpu: 0.0.40
codegen_flags: <defaults>
</compile_context>

<pallas_src>
import functools

import jax
import jax.numpy as jnp
from jax.experimental import pallas as pl
from jax.experimental.pallas import tpu as pltpu  # noqa: F401  (defaults suffice at these sizes)


# ----------------------------------------------------------------------------
# Single fused forward kernel
# ----------------------------------------------------------------------------

def _birnn_fused_kernel(
    x_ref,                      # (T*B, F)   time-major rows: row t*B + b
    emb_w_ref, emb_b_ref,       # (F, E), (1, E)
    l0_wih_ref, l0_b_ref,       # (E, 8H), (1, 8H)   cols [fwd | bwd], each (i,f,o,g)
    l0_wbd_ref,                 # (2H, 8H)           blkdiag(W_hh_f, W_hh_b)
    l1_wih_f_ref, l1_b_f_ref,   # (2H, 4H), (1, 4H)
    l1_whh_f_ref,               # (H, 4H)
    l1_wih_b_ref, l1_b_b_ref,   # (2H, 4H), (1, 4H)
    cls_w_ref, cls_b_ref,       # (2H, C), (1, C)
    out_ref,                    # (B, C)
    *, hidden, seq_len, batch):
    H, T, B = hidden, seq_len, batch
    f32 = jnp.float32

    def dir_cell(gates, c):
        # gates: (B, 4H) pre-activations with column order (i, f, o, g)
        sig = jax.nn.sigmoid(gates[:, 0:3 * H])        # one EUP push over i|f|o
        g = jnp.tanh(gates[:, 3 * H:4 * H])
        c_new = sig[:, H:2 * H] * c + sig[:, 0:H] * g
        h_new = sig[:, 2 * H:3 * H] * jnp.tanh(c_new)
        return h_new, c_new

    # ---- embedding + ReLU: one MXU pass over all T*B rows -------------------
    h_in = jnp.maximum(
        jnp.dot(x_ref[...], emb_w_ref[...], preferred_element_type=f32)
        + emb_b_ref[...], 0.0)                                       # (T*B, E)

    # ---- layer 0: hoisted input projection (both directions, all steps) -----
    gx0 = (jnp.dot(h_in, l0_wih_ref[...], preferred_element_type=f32)
           + l0_b_ref[...])                                          # (T*B, 8H)

    w_bd = l0_wbd_ref[...]                                           # (2H, 8H)
    zeros_h = jnp.zeros((B, H), f32)
    h_f, c_f = zeros_h, zeros_h
    h_b, c_b = zeros_h, zeros_h
    h_cat = jnp.zeros((B, 2 * H), f32)
    fwd_out = [None] * T        # fwd_out[t] = h_f at time t
    bwd_out = [None] * T        # bwd_out[t] = h_b at time t

    for s in range(T):          # static unroll; backward walks r = T-1-s
        r = T - 1 - s
        if s == 0:
            rec = jnp.zeros((B, 8 * H), f32)     # zero state => skip the matmul
        else:
            # ONE block-diagonal MXU push covers both directions' h @ W_hh.
            rec = jnp.dot(h_cat, w_bd, preferred_element_type=f32)   # (B, 8H)
        g_f = gx0[s * B:(s + 1) * B, 0:4 * H] + rec[:, 0:4 * H]
        g_b = gx0[r * B:(r + 1) * B, 4 * H:8 * H] + rec[:, 4 * H:8 * H]
        h_f, c_f = dir_cell(g_f, c_f)
        h_b, c_b = dir_cell(g_b, c_b)
        fwd_out[s] = h_f
        bwd_out[r] = h_b
        h_cat = jnp.concatenate([h_f, h_b], axis=-1)

    # Layer-0 output sequence, time-major rows; stays in VMEM/vregs (no HBM).
    seq0 = jnp.concatenate(
        [jnp.concatenate([fwd_out[t], bwd_out[t]], axis=-1) for t in range(T)],
        axis=0)                                                      # (T*B, 2H)

    # ---- layer 1 (last): forward recurrence, keep only the final state ------
    gx1_f = (jnp.dot(seq0, l1_wih_f_ref[...], preferred_element_type=f32)
             + l1_b_f_ref[...])                                      # (T*B, 4H)
    w_hh_f1 = l1_whh_f_ref[...]
    h_f, c_f = zeros_h, zeros_h
    for s in range(T):
        gates = gx1_f[s * B:(s + 1) * B, :]
        if s > 0:
            gates = gates + jnp.dot(h_f, w_hh_f1, preferred_element_type=f32)
        h_f, c_f = dir_cell(gates, c_f)

    # Backward direction at output position T-1: exactly one step from zero
    # state on row T-1 (bit-identical to the full backward recurrence there);
    # zero state => recurrent term and f*c term are exactly zero, so skipped.
    g_b = (jnp.dot(seq0[(T - 1) * B:T * B, :], l1_wih_b_ref[...],
                   preferred_element_type=f32) + l1_b_b_ref[...])    # (B, 4H)
    sig_b = jax.nn.sigmoid(g_b[:, 0:3 * H])
    c_b = sig_b[:, 0:H] * jnp.tanh(g_b[:, 3 * H:4 * H])
    h_b = sig_b[:, 2 * H:3 * H] * jnp.tanh(c_b)

    # ---- classifier + sigmoid on out[:, -1, :] -------------------------------
    feat = jnp.concatenate([h_f, h_b], axis=-1)                      # (B, 2H)
    logits = (jnp.dot(feat, cls_w_ref[...], preferred_element_type=f32)
              + cls_b_ref[...])
    out_ref[...] = jax.nn.sigmoid(logits).astype(out_ref.dtype)


def birnn_forward(params, x):
    """x: (B, T, input_size) -> (B, num_classes), matching BiRNN.forward (eval)."""
    B, T, F = x.shape
    H = params["l1_w_hh_f"].shape[0]
    C = params["cls_w"].shape[1]
    # Go time-major once on the tiny raw input; everything else is in-kernel.
    x_tb = jnp.transpose(x, (1, 0, 2)).reshape(T * B, F)
    kernel = functools.partial(_birnn_fused_kernel, hidden=H, seq_len=T, batch=B)
    return pl.pallas_call(
        kernel,
        out_shape=jax.ShapeDtypeStruct((B, C), jnp.float32),
    )(x_tb,
      params["emb_w"], params["emb_b"],
      params["l0_w_ih_cat"], params["l0_b_cat"], params["l0_w_hh_bd"],
      params["l1_w_ih_f"], params["l1_b_f"], params["l1_w_hh_f"],
      params["l1_w_ih_b"], params["l1_b_b"],
      params["cls_w"], params["cls_b"])


# ----------------------------------------------------------------------------
# Parameter init (synthetic, nn.Linear / nn.LSTM shaped, pre-fused layouts)
# ----------------------------------------------------------------------------

def init_birnn_params(key, input_size, lstm_hidden_size, embedding_output_size,
                      num_classes):
    """LSTM weights stored transposed (for x @ W) with per-direction gate column
    order (i, f, o, g); b_ih + b_hh folded; layer-0 W_hh pre-packed block-diagonal."""
    H = lstm_hidden_size
    keys = iter(jax.random.split(key, 24))

    def uniform(shape, bound):
        return jax.random.uniform(next(keys), shape, jnp.float32, -bound, bound)

    params = {}
    k_e = 1.0 / float(input_size) ** 0.5
    params["emb_w"] = uniform((input_size, embedding_output_size), k_e)
    params["emb_b"] = uniform((1, embedding_output_size), k_e)

    k_l = 1.0 / float(H) ** 0.5

    def lstm_direction(in_dim):
        w_ih = uniform((in_dim, 4 * H), k_l)                 # cols (i, f, o, g)
        w_hh = uniform((H, 4 * H), k_l)
        b = uniform((1, 4 * H), k_l) + uniform((1, 4 * H), k_l)   # b_ih + b_hh
        return w_ih, w_hh, b

    # layer 0 (input width = embedding_output_size), both directions fused
    wih_f0, whh_f0, b_f0 = lstm_direction(embedding_output_size)
    wih_b0, whh_b0, b_b0 = lstm_direction(embedding_output_size)
    params["l0_w_ih_cat"] = jnp.concatenate([wih_f0, wih_b0], axis=1)   # (E, 8H)
    params["l0_b_cat"] = jnp.concatenate([b_f0, b_b0], axis=1)          # (1, 8H)
    z = jnp.zeros((H, 4 * H), jnp.float32)
    params["l0_w_hh_bd"] = jnp.concatenate(                             # (2H, 8H)
        [jnp.concatenate([whh_f0, z], axis=1),
         jnp.concatenate([z, whh_b0], axis=1)], axis=0)

    # layer 1 (input width = 2H, last layer)
    wih_f1, whh_f1, b_f1 = lstm_direction(2 * H)
    wih_b1, whh_b1, b_b1 = lstm_direction(2 * H)
    params["l1_w_ih_f"], params["l1_b_f"], params["l1_w_hh_f"] = wih_f1, b_f1, whh_f1
    params["l1_w_ih_b"], params["l1_b_b"] = wih_b1, b_b1
    # Kept only for nn.LSTM parameter-set parity / the reference; the fused
    # kernel never multiplies it (backward value at t = T-1 starts from zero state).
    params["l1_w_hh_b_unused"] = whh_b1

    k_c = 1.0 / float(2 * H) ** 0.5
    params["cls_w"] = uniform((2 * H, num_classes), k_c)
    params["cls_b"] = uniform((1, num_classes), k_c)
    return params


# ----------------------------------------------------------------------------
# Pure-JAX reference (validation only, no Pallas)
# ----------------------------------------------------------------------------

def birnn_reference(params, x):
    B, T, _ = x.shape
    H = params["l1_w_hh_f"].shape[0]
    hp = jax.lax.Precision.HIGHEST

    def cell(xg, h, c, w_hh):
        g = xg + jnp.dot(h, w_hh, precision=hp)
        i = jax.nn.sigmoid(g[:, 0:H])
        f = jax.nn.sigmoid(g[:, H:2 * H])
        o = jax.nn.sigmoid(g[:, 2 * H:3 * H])
        gg = jnp.tanh(g[:, 3 * H:4 * H])
        c = f * c + i * gg
        return o * jnp.tanh(c), c

    emb = jax.nn.relu(jnp.dot(x, params["emb_w"], precision=hp) + params["emb_b"])

    wih0, b0, wbd = params["l0_w_ih_cat"], params["l0_b_cat"], params["l0_w_hh_bd"]
    wih_f0, wih_b0 = wih0[:, 0:4 * H], wih0[:, 4 * H:8 * H]
    b_f0, b_b0 = b0[:, 0:4 * H], b0[:, 4 * H:8 * H]
    whh_f0, whh_b0 = wbd[0:H, 0:4 * H], wbd[H:2 * H, 4 * H:8 * H]

    hf = cf = jnp.zeros((B, H)); outs_f = []
    for t in range(T):
        hf, cf = cell(jnp.dot(emb[:, t], wih_f0, precision=hp) + b_f0, hf, cf, whh_f0)
        outs_f.append(hf)
    hb = cb = jnp.zeros((B, H)); outs_b = [None] * T
    for t in range(T - 1, -1, -1):
        hb, cb = cell(jnp.dot(emb[:, t], wih_b0, precision=hp) + b_b0, hb, cb, whh_b0)
        outs_b[t] = hb
    seq = jnp.stack([jnp.concatenate([outs_f[t], outs_b[t]], -1) for t in range(T)], axis=1)

    hf = cf = jnp.zeros((B, H))
    for t in range(T):
        hf, cf = cell(jnp.dot(seq[:, t], params["l1_w_ih_f"], precision=hp)
                      + params["l1_b_f"], hf, cf, params["l1_w_hh_f"])
    hb = cb = jnp.zeros((B, H)); hb_last = None
    for t in range(T - 1, -1, -1):
        hb, cb = cell(jnp.dot(seq[:, t], params["l1_w_ih_b"], precision=hp)
                      + params["l1_b_b"], hb, cb, params["l1_w_hh_b_unused"])
        if t == T - 1:
            hb_last = hb
    feat = jnp.concatenate([hf, hb_last], -1)
    return jax.nn.sigmoid(jnp.dot(feat, params["cls_w"], precision=hp) + params["cls_b"])


# ----------------------------------------------------------------------------
# Demo
# ----------------------------------------------------------------------------

if __name__ == "__main__":
    # batch=2, seq=8, input_size=16, embedding_output_size=32, hidden=32, classes=4
    B, T = 2, 8
    INPUT_SIZE, EMB_SIZE, HIDDEN, NUM_CLASSES = 16, 32, 32, 4

    key = jax.random.PRNGKey(0)
    k_params, k_x = jax.random.split(key)

    params = init_birnn_params(k_params, INPUT_SIZE, HIDDEN, EMB_SIZE, NUM_CLASSES)
    x = jax.random.normal(k_x, (B, T, INPUT_SIZE), dtype=jnp.float32)

    y = jax.jit(birnn_forward)(params, x)
    y = jax.block_until_ready(y)

    assert y.shape == (B, NUM_CLASSES), y.shape
    assert bool(jnp.all((y >= 0.0) & (y <= 1.0))), "sigmoid output out of range"

    y_ref = birnn_reference(params, x)
    max_err = float(jnp.max(jnp.abs(y - y_ref)))
    assert bool(jnp.allclose(y, y_ref, rtol=2e-3, atol=2e-3)), (
        f"mismatch vs pure-JAX reference: max |diff| = {max_err}")

    print("KERNEL_OK")
</pallas_src>

<mosaic_0001>
module attributes {stable_mosaic.version = 11 : i64} {
  func.func @_birnn_fused_kernel(%arg0: memref<16x16xf32, #tpu.memory_space<vmem>>, %arg1: memref<16x32xf32, #tpu.memory_space<vmem>>, %arg2: memref<1x32xf32, #tpu.memory_space<vmem>>, %arg3: memref<32x256xf32, #tpu.memory_space<vmem>>, %arg4: memref<1x256xf32, #tpu.memory_space<vmem>>, %arg5: memref<64x256xf32, #tpu.memory_space<vmem>>, %arg6: memref<64x128xf32, #tpu.memory_space<vmem>>, %arg7: memref<1x128xf32, #tpu.memory_space<vmem>>, %arg8: memref<32x128xf32, #tpu.memory_space<vmem>>, %arg9: memref<64x128xf32, #tpu.memory_space<vmem>>, %arg10: memref<1x128xf32, #tpu.memory_space<vmem>>, %arg11: memref<64x4xf32, #tpu.memory_space<vmem>>, %arg12: memref<1x4xf32, #tpu.memory_space<vmem>>, %arg13: memref<2x4xf32, #tpu.memory_space<vmem>>) attributes {dimension_semantics = [], scalar_prefetch = 0 : i64, scratch_operands = 0 : i64, tpu.core_type = #tpu.core_type<tc>} {
    %c0 = arith.constant 0 : index
    %c0_0 = arith.constant 0 : index
    %0 = vector.load %arg0[%c0, %c0_0] : memref<16x16xf32, #tpu.memory_space<vmem>>, vector<16x16xf32>
    %c0_1 = arith.constant 0 : index
    %c0_2 = arith.constant 0 : index
    %1 = vector.load %arg1[%c0_1, %c0_2] : memref<16x32xf32, #tpu.memory_space<vmem>>, vector<16x32xf32>
    %cst = arith.constant dense<0.000000e+00> : vector<16x32xf32>
    %2 = tpu.matmul %0, %1, %cst {dimension_numbers = #tpu.dot_dimension_numbers<[1], [0], [0], [1], [0, 0, 1, 1], [], []>} : vector<16x16xf32>, vector<16x32xf32>, vector<16x32xf32> -> vector<16x32xf32>
    %c0_3 = arith.constant 0 : index
    %c0_4 = arith.constant 0 : index
    %3 = vector.load %arg2[%c0_3, %c0_4] : memref<1x32xf32, #tpu.memory_space<vmem>>, vector<1x32xf32>
    %4 = vector.broadcast %3 : vector<1x32xf32> to vector<16x32xf32>
    %5 = arith.addf %2, %4 : vector<16x32xf32>
    %cst_5 = arith.constant 0.000000e+00 : f32
    %6 = vector.broadcast %cst_5 : f32 to vector<16x32xf32>
    %7 = arith.maximumf %5, %6 : vector<16x32xf32>
    %c0_6 = arith.constant 0 : index
    %c0_7 = arith.constant 0 : index
    %8 = vector.load %arg3[%c0_6, %c0_7] : memref<32x256xf32, #tpu.memory_space<vmem>>, vector<32x256xf32>
    %cst_8 = arith.constant dense<0.000000e+00> : vector<16x256xf32>
    %9 = tpu.matmul %7, %8, %cst_8 {dimension_numbers = #tpu.dot_dimension_numbers<[1], [0], [0], [1], [0, 0, 1, 1], [], []>} : vector<16x32xf32>, vector<32x256xf32>, vector<16x256xf32> -> vector<16x256xf32>
    %c0_9 = arith.constant 0 : index
    %c0_10 = arith.constant 0 : index
    %10 = vector.load %arg4[%c0_9, %c0_10] : memref<1x256xf32, #tpu.memory_space<vmem>>, vector<1x256xf32>
    %11 = vector.broadcast %10 : vector<1x256xf32> to vector<16x256xf32>
    %12 = arith.addf %9, %11 : vector<16x256xf32>
    %c0_11 = arith.constant 0 : index
    %c0_12 = arith.constant 0 : index
    %13 = vector.load %arg5[%c0_11, %c0_12] : memref<64x256xf32, #tpu.memory_space<vmem>>, vector<64x256xf32>
    %cst_13 = arith.constant 0.000000e+00 : f32
    %14 = vector.broadcast %cst_13 : f32 to vector<2x32xf32>
    %cst_14 = arith.constant 0.000000e+00 : f32
    %15 = vector.broadcast %cst_14 : f32 to vector<2x256xf32>
    %16 = vector.extract_strided_slice %12 {offsets = [0, 0], sizes = [2, 128], strides = [1, 1]} : vector<16x256xf32> to vector<2x128xf32>
    %17 = vector.extract_strided_slice %15 {offsets = [0, 0], sizes = [2, 128], strides = [1, 1]} : vector<2x256xf32> to vector<2x128xf32>
    %18 = arith.addf %16, %17 : vector<2x128xf32>
    %19 = vector.extract_strided_slice %12 {offsets = [14, 128], sizes = [2, 128], strides = [1, 1]} : vector<16x256xf32> to vector<2x128xf32>
    %20 = vector.extract_strided_slice %15 {offsets = [0, 128], sizes = [2, 128], strides = [1, 1]} : vector<2x256xf32> to vector<2x128xf32>
    %21 = arith.addf %19, %20 : vector<2x128xf32>
    %22 = vector.extract_strided_slice %18 {offsets = [0, 0], sizes = [2, 96], strides = [1, 1]} : vector<2x128xf32> to vector<2x96xf32>
    %23 = arith.negf %22 : vector<2x96xf32>
    %24 = math.exp %23 : vector<2x96xf32>
    %cst_15 = arith.constant 1.000000e+00 : f32
    %25 = vector.broadcast %cst_15 : f32 to vector<2x96xf32>
    %26 = arith.addf %25, %24 : vector<2x96xf32>
    %27 = arith.divf %25, %26 : vector<2x96xf32>
    %28 = vector.extract_strided_slice %18 {offsets = [0, 96], sizes = [2, 32], strides = [1, 1]} : vector<2x128xf32> to vector<2x32xf32>
    %29 = math.tanh %28 : vector<2x32xf32>
    %30 = vector.extract_strided_slice %27 {offsets = [0, 32], sizes = [2, 32], strides = [1, 1]} : vector<2x96xf32> to vector<2x32xf32>
    %31 = arith.mulf %30, %14 : vector<2x32xf32>
    %32 = vector.extract_strided_slice %27 {offsets = [0, 0], sizes = [2, 32], strides = [1, 1]} : vector<2x96xf32> to vector<2x32xf32>
    %33 = arith.mulf %32, %29 : vector<2x32xf32>
    %34 = arith.addf %31, %33 : vector<2x32xf32>
    %35 = vector.extract_strided_slice %27 {offsets = [0, 64], sizes = [2, 32], strides = [1, 1]} : vector<2x96xf32> to vector<2x32xf32>
    %36 = math.tanh %34 : vector<2x32xf32>
    %37 = arith.mulf %35, %36 : vector<2x32xf32>
    %38 = vector.extract_strided_slice %21 {offsets = [0, 0], sizes = [2, 96], strides = [1, 1]} : vector<2x128xf32> to vector<2x96xf32>
    %39 = arith.negf %38 : vector<2x96xf32>
    %40 = math.exp %39 : vector<2x96xf32>
    %cst_16 = arith.constant 1.000000e+00 : f32
    %41 = vector.broadcast %cst_16 : f32 to vector<2x96xf32>
    %42 = arith.addf %41, %40 : vector<2x96xf32>
    %43 = arith.divf %41, %42 : vector<2x96xf32>
    %44 = vector.extract_strided_slice %21 {offsets = [0, 96], sizes = [2, 32], strides = [1, 1]} : vector<2x128xf32> to vector<2x32xf32>
    %45 = math.tanh %44 : vector<2x32xf32>
    %46 = vector.extract_strided_slice %43 {offsets = [0, 32], sizes = [2, 32], strides = [1, 1]} : vector<2x96xf32> to vector<2x32xf32>
    %47 = arith.mulf %46, %14 : vector<2x32xf32>
    %48 = vector.extract_strided_slice %43 {offsets = [0, 0], sizes = [2, 32], strides = [1, 1]} : vector<2x96xf32> to vector<2x32xf32>
    %49 = arith.mulf %48, %45 : vector<2x32xf32>
    %50 = arith.addf %47, %49 : vector<2x32xf32>
    %51 = vector.extract_strided_slice %43 {offsets = [0, 64], sizes = [2, 32], strides = [1, 1]} : vector<2x96xf32> to vector<2x32xf32>
    %52 = math.tanh %50 : vector<2x32xf32>
    %53 = arith.mulf %51, %52 : vector<2x32xf32>
    %54 = tpu.concatenate %37, %53 in 1 : vector<2x32xf32>, vector<2x32xf32> -> vector<2x64xf32>
    %cst_17 = arith.constant dense<0.000000e+00> : vector<2x256xf32>
    %55 = tpu.matmul %54, %13, %cst_17 {dimension_numbers = #tpu.dot_dimension_numbers<[1], [0], [0], [1], [0, 0, 1, 1], [], []>} : vector<2x64xf32>, vector<64x256xf32>, vector<2x256xf32> -> vector<2x256xf32>
    %56 = vector.extract_strided_slice %12 {offsets = [2, 0], sizes = [2, 128], strides = [1, 1]} : vector<16x256xf32> to vector<2x128xf32>
    %57 = vector.extract_strided_slice %55 {offsets = [0, 0], sizes = [2, 128], strides = [1, 1]} : vector<2x256xf32> to vector<2x128xf32>
    %58 = arith.addf %56, %57 : vector<2x128xf32>
    %59 = vector.extract_strided_slice %12 {offsets = [12, 128], sizes = [2, 128], strides = [1, 1]} : vector<16x256xf32> to vector<2x128xf32>
    %60 = vector.extract_strided_slice %55 {offsets = [0, 128], sizes = [2, 128], strides = [1, 1]} : vector<2x256xf32> to vector<2x128xf32>
    %61 = arith.addf %59, %60 : vector<2x128xf32>
    %62 = vector.extract_strided_slice %58 {offsets = [0, 0], sizes = [2, 96], strides = [1, 1]} : vector<2x128xf32> to vector<2x96xf32>
    %63 = arith.negf %62 : vector<2x96xf32>
    %64 = math.exp %63 : vector<2x96xf32>
    %cst_18 = arith.constant 1.000000e+00 : f32
    %65 = vector.broadcast %cst_18 : f32 to vector<2x96xf32>
    %66 = arith.addf %65, %64 : vector<2x96xf32>
    %67 = arith.divf %65, %66 : vector<2x96xf32>
    %68 = vector.extract_strided_slice %58 {offsets = [0, 96], sizes = [2, 32], strides = [1, 1]} : vector<2x128xf32> to vector<2x32xf32>
    %69 = math.tanh %68 : vector<2x32xf32>
    %70 = vector.extract_strided_slice %67 {offsets = [0, 32], sizes = [2, 32], strides = [1, 1]} : vector<2x96xf32> to vector<2x32xf32>
    %71 = arith.mulf %70, %34 : vector<2x32xf32>
    %72 = vector.extract_strided_slice %67 {offsets = [0, 0], sizes = [2, 32], strides = [1, 1]} : vector<2x96xf32> to vector<2x32xf32>
    %73 = arith.mulf %72, %69 : vector<2x32xf32>
    %74 = arith.addf %71, %73 : vector<2x32xf32>
    %75 = vector.extract_strided_slice %67 {offsets = [0, 64], sizes = [2, 32], strides = [1, 1]} : vector<2x96xf32> to vector<2x32xf32>
    %76 = math.tanh %74 : vector<2x32xf32>
    %77 = arith.mulf %75, %76 : vector<2x32xf32>
    %78 = vector.extract_strided_slice %61 {offsets = [0, 0], sizes = [2, 96], strides = [1, 1]} : vector<2x128xf32> to vector<2x96xf32>
    %79 = arith.negf %78 : vector<2x96xf32>
    %80 = math.exp %79 : vector<2x96xf32>
    %cst_19 = arith.constant 1.000000e+00 : f32
    %81 = vector.broadcast %cst_19 : f32 to vector<2x96xf32>
    %82 = arith.addf %81, %80 : vector<2x96xf32>
    %83 = arith.divf %81, %82 : vector<2x96xf32>
    %84 = vector.extract_strided_slice %61 {offsets = [0, 96], sizes = [2, 32], strides = [1, 1]} : vector<2x128xf32> to vector<2x32xf32>
    %85 = math.tanh %84 : vector<2x32xf32>
    %86 = vector.extract_strided_slice %83 {offsets = [0, 32], sizes = [2, 32], strides = [1, 1]} : vector<2x96xf32> to vector<2x32xf32>
    %87 = arith.mulf %86, %50 : vector<2x32xf32>
    %88 = vector.extract_strided_slice %83 {offsets = [0, 0], sizes = [2, 32], strides = [1, 1]} : vector<2x96xf32> to vector<2x32xf32>
    %89 = arith.mulf %88, %85 : vector<2x32xf32>
    %90 = arith.addf %87, %89 : vector<2x32xf32>
    %91 = vector.extract_strided_slice %83 {offsets = [0, 64], sizes = [2, 32], strides = [1, 1]} : vector<2x96xf32> to vector<2x32xf32>
    %92 = math.tanh %90 : vector<2x32xf32>
    %93 = arith.mulf %91, %92 : vector<2x32xf32>
    %94 = tpu.concatenate %77, %93 in 1 : vector<2x32xf32>, vector<2x32xf32> -> vector<2x64xf32>
    %cst_20 = arith.constant dense<0.000000e+00> : vector<2x256xf32>
    %95 = tpu.matmul %94, %13, %cst_20 {dimension_numbers = #tpu.dot_dimension_numbers<[1], [0], [0], [1], [0, 0, 1, 1], [], []>} : vector<2x64xf32>, vector<64x256xf32>, vector<2x256xf32> -> vector<2x256xf32>
    %96 = vector.extract_strided_slice %12 {offsets = [4, 0], sizes = [2, 128], strides = [1, 1]} : vector<16x256xf32> to vector<2x128xf32>
    %97 = vector.extract_strided_slice %95 {offsets = [0, 0], sizes = [2, 128], strides = [1, 1]} : vector<2x256xf32> to vector<2x128xf32>
    %98 = arith.addf %96, %97 : vector<2x128xf32>
    %99 = vector.extract_strided_slice %12 {offsets = [10, 128], sizes = [2, 128], strides = [1, 1]} : vector<16x256xf32> to vector<2x128xf32>
    %100 = vector.extract_strided_slice %95 {offsets = [0, 128], sizes = [2, 128], strides = [1, 1]} : vector<2x256xf32> to vector<2x128xf32>
    %101 = arith.addf %99, %100 : vector<2x128xf32>
    %102 = vector.extract_strided_slice %98 {offsets = [0, 0], sizes = [2, 96], strides = [1, 1]} : vector<2x128xf32> to vector<2x96xf32>
    %103 = arith.negf %102 : vector<2x96xf32>
    %104 = math.exp %103 : vector<2x96xf32>
    %cst_21 = arith.constant 1.000000e+00 : f32
    %105 = vector.broadcast %cst_21 : f32 to vector<2x96xf32>
    %106 = arith.addf %105, %104 : vector<2x96xf32>
    %107 = arith.divf %105, %106 : vector<2x96xf32>
    %108 = vector.extract_strided_slice %98 {offsets = [0, 96], sizes = [2, 32], strides = [1, 1]} : vector<2x128xf32> to vector<2x32xf32>
    %109 = math.tanh %108 : vector<2x32xf32>
    %110 = vector.extract_strided_slice %107 {offsets = [0, 32], sizes = [2, 32], strides = [1, 1]} : vector<2x96xf32> to vector<2x32xf32>
    %111 = arith.mulf %110, %74 : vector<2x32xf32>
    %112 = vector.extract_strided_slice %107 {offsets = [0, 0], sizes = [2, 32], strides = [1, 1]} : vector<2x96xf32> to vector<2x32xf32>
    %113 = arith.mulf %112, %109 : vector<2x32xf32>
    %114 = arith.addf %111, %113 : vector<2x32xf32>
    %115 = vector.extract_strided_slice %107 {offsets = [0, 64], sizes = [2, 32], strides = [1, 1]} : vector<2x96xf32> to vector<2x32xf32>
    %116 = math.tanh %114 : vector<2x32xf32>
    %117 = arith.mulf %115, %116 : vector<2x32xf32>
    %118 = vector.extract_strided_slice %101 {offsets = [0, 0], sizes = [2, 96], strides = [1, 1]} : vector<2x128xf32> to vector<2x96xf32>
    %119 = arith.negf %118 : vector<2x96xf32>
    %120 = math.exp %119 : vector<2x96xf32>
    %cst_22 = arith.constant 1.000000e+00 : f32
    %121 = vector.broadcast %cst_22 : f32 to vector<2x96xf32>
    %122 = arith.addf %121, %120 : vector<2x96xf32>
    %123 = arith.divf %121, %122 : vector<2x96xf32>
    %124 = vector.extract_strided_slice %101 {offsets = [0, 96], sizes = [2, 32], strides = [1, 1]} : vector<2x128xf32> to vector<2x32xf32>
    %125 = math.tanh %124 : vector<2x32xf32>
    %126 = vector.extract_strided_slice %123 {offsets = [0, 32], sizes = [2, 32], strides = [1, 1]} : vector<2x96xf32> to vector<2x32xf32>
    %127 = arith.mulf %126, %90 : vector<2x32xf32>
    %128 = vector.extract_strided_slice %123 {offsets = [0, 0], sizes = [2, 32], strides = [1, 1]} : vector<2x96xf32> to vector<2x32xf32>
    %129 = arith.mulf %128, %125 : vector<2x32xf32>
    %130 = arith.addf %127, %129 : vector<2x32xf32>
    %131 = vector.extract_strided_slice %123 {offsets = [0, 64], sizes = [2, 32], strides = [1, 1]} : vector<2x96xf32> to vector<2x32xf32>
    %132 = math.tanh %130 : vector<2x32xf32>
    %133 = arith.mulf %131, %132 : vector<2x32xf32>
    %134 = tpu.concatenate %117, %133 in 1 : vector<2x32xf32>, vector<2x32xf32> -> vector<2x64xf32>
    %cst_23 = arith.constant dense<0.000000e+00> : vector<2x256xf32>
    %135 = tpu.matmul %134, %13, %cst_23 {dimension_numbers = #tpu.dot_dimension_numbers<[1], [0], [0], [1], [0, 0, 1, 1], [], []>} : vector<2x64xf32>, vector<64x256xf32>, vector<2x256xf32> -> vector<2x256xf32>
    %136 = vector.extract_strided_slice %12 {offsets = [6, 0], sizes = [2, 128], strides = [1, 1]} : vector<16x256xf32> to vector<2x128xf32>
    %137 = vector.extract_strided_slice %135 {offsets = [0, 0], sizes = [2, 128], strides = [1, 1]} : vector<2x256xf32> to vector<2x128xf32>
    %138 = arith.addf %136, %137 : vector<2x128xf32>
    %139 = vector.extract_strided_slice %12 {offsets = [8, 128], sizes = [2, 128], strides = [1, 1]} : vector<16x256xf32> to vector<2x128xf32>
    %140 = vector.extract_strided_slice %135 {offsets = [0, 128], sizes = [2, 128], strides = [1, 1]} : vector<2x256xf32> to vector<2x128xf32>
    %141 = arith.addf %139, %140 : vector<2x128xf32>
    %142 = vector.extract_strided_slice %138 {offsets = [0, 0], sizes = [2, 96], strides = [1, 1]} : vector<2x128xf32> to vector<2x96xf32>
    %143 = arith.negf %142 : vector<2x96xf32>
    %144 = math.exp %143 : vector<2x96xf32>
    %cst_24 = arith.constant 1.000000e+00 : f32
    %145 = vector.broadcast %cst_24 : f32 to vector<2x96xf32>
    %146 = arith.addf %145, %144 : vector<2x96xf32>
    %147 = arith.divf %145, %146 : vector<2x96xf32>
    %148 = vector.extract_strided_slice %138 {offsets = [0, 96], sizes = [2, 32], strides = [1, 1]} : vector<2x128xf32> to vector<2x32xf32>
    %149 = math.tanh %148 : vector<2x32xf32>
    %150 = vector.extract_strided_slice %147 {offsets = [0, 32], sizes = [2, 32], strides = [1, 1]} : vector<2x96xf32> to vector<2x32xf32>
    %151 = arith.mulf %150, %114 : vector<2x32xf32>
    %152 = vector.extract_strided_slice %147 {offsets = [0, 0], sizes = [2, 32], strides = [1, 1]} : vector<2x96xf32> to vector<2x32xf32>
    %153 = arith.mulf %152, %149 : vector<2x32xf32>
    %154 = arith.addf %151, %153 : vector<2x32xf32>
    %155 = vector.extract_strided_slice %147 {offsets = [0, 64], sizes = [2, 32], strides = [1, 1]} : vector<2x96xf32> to vector<2x32xf32>
    %156 = math.tanh %154 : vector<2x32xf32>
    %157 = arith.mulf %155, %156 : vector<2x32xf32>
    %158 = vector.extract_strided_slice %141 {offsets = [0, 0], sizes = [2, 96], strides = [1, 1]} : vector<2x128xf32> to vector<2x96xf32>
    %159 = arith.negf %158 : vector<2x96xf32>
    %160 = math.exp %159 : vector<2x96xf32>
    %cst_25 = arith.constant 1.000000e+00 : f32
    %161 = vector.broadcast %cst_25 : f32 to vector<2x96xf32>
    %162 = arith.addf %161, %160 : vector<2x96xf32>
    %163 = arith.divf %161, %162 : vector<2x96xf32>
    %164 = vector.extract_strided_slice %141 {offsets = [0, 96], sizes = [2, 32], strides = [1, 1]} : vector<2x128xf32> to vector<2x32xf32>
    %165 = math.tanh %164 : vector<2x32xf32>
    %166 = vector.extract_strided_slice %163 {offsets = [0, 32], sizes = [2, 32], strides = [1, 1]} : vector<2x96xf32> to vector<2x32xf32>
    %167 = arith.mulf %166, %130 : vector<2x32xf32>
    %168 = vector.extract_strided_slice %163 {offsets = [0, 0], sizes = [2, 32], strides = [1, 1]} : vector<2x96xf32> to vector<2x32xf32>
    %169 = arith.mulf %168, %165 : vector<2x32xf32>
    %170 = arith.addf %167, %169 : vector<2x32xf32>
    %171 = vector.extract_strided_slice %163 {offsets = [0, 64], sizes = [2, 32], strides = [1, 1]} : vector<2x96xf32> to vector<2x32xf32>
    %172 = math.tanh %170 : vector<2x32xf32>
    %173 = arith.mulf %171, %172 : vector<2x32xf32>
    %174 = tpu.concatenate %157, %173 in 1 : vector<2x32xf32>, vector<2x32xf32> -> vector<2x64xf32>
    %cst_26 = arith.constant dense<0.000000e+00> : vector<2x256xf32>
    %175 = tpu.matmul %174, %13, %cst_26 {dimension_numbers = #tpu.dot_dimension_numbers<[1], [0], [0], [1], [0, 0, 1, 1], [], []>} : vector<2x64xf32>, vector<64x256xf32>, vector<2x256xf32> -> vector<2x256xf32>
    %176 = vector.extract_strided_slice %12 {offsets = [8, 0], sizes = [2, 128], strides = [1, 1]} : vector<16x256xf32> to vector<2x128xf32>
    %177 = vector.extract_strided_slice %175 {offsets = [0, 0], sizes = [2, 128], strides = [1, 1]} : vector<2x256xf32> to vector<2x128xf32>
    %178 = arith.addf %176, %177 : vector<2x128xf32>
    %179 = vector.extract_strided_slice %12 {offsets = [6, 128], sizes = [2, 128], strides = [1, 1]} : vector<16x256xf32> to vector<2x128xf32>
    %180 = vector.extract_strided_slice %175 {offsets = [0, 128], sizes = [2, 128], strides = [1, 1]} : vector<2x256xf32> to vector<2x128xf32>
    %181 = arith.addf %179, %180 : vector<2x128xf32>
    %182 = vector.extract_strided_slice %178 {offsets = [0, 0], sizes = [2, 96], strides = [1, 1]} : vector<2x128xf32> to vector<2x96xf32>
    %183 = arith.negf %182 : vector<2x96xf32>
    %184 = math.exp %183 : vector<2x96xf32>
    %cst_27 = arith.constant 1.000000e+00 : f32
    %185 = vector.broadcast %cst_27 : f32 to vector<2x96xf32>
    %186 = arith.addf %185, %184 : vector<2x96xf32>
    %187 = arith.divf %185, %186 : vector<2x96xf32>
    %188 = vector.extract_strided_slice %178 {offsets = [0, 96], sizes = [2, 32], strides = [1, 1]} : vector<2x128xf32> to vector<2x32xf32>
    %189 = math.tanh %188 : vector<2x32xf32>
    %190 = vector.extract_strided_slice %187 {offsets = [0, 32], sizes = [2, 32], strides = [1, 1]} : vector<2x96xf32> to vector<2x32xf32>
    %191 = arith.mulf %190, %154 : vector<2x32xf32>
    %192 = vector.extract_strided_slice %187 {offsets = [0, 0], sizes = [2, 32], strides = [1, 1]} : vector<2x96xf32> to vector<2x32xf32>
    %193 = arith.mulf %192, %189 : vector<2x32xf32>
    %194 = arith.addf %191, %193 : vector<2x32xf32>
    %195 = vector.extract_strided_slice %187 {offsets = [0, 64], sizes = [2, 32], strides = [1, 1]} : vector<2x96xf32> to vector<2x32xf32>
    %196 = math.tanh %194 : vector<2x32xf32>
    %197 = arith.mulf %195, %196 : vector<2x32xf32>
    %198 = vector.extract_strided_slice %181 {offsets = [0, 0], sizes = [2, 96], strides = [1, 1]} : vector<2x128xf32> to vector<2x96xf32>
    %199 = arith.negf %198 : vector<2x96xf32>
    %200 = math.exp %199 : vector<2x96xf32>
    %cst_28 = arith.constant 1.000000e+00 : f32
    %201 = vector.broadcast %cst_28 : f32 to vector<2x96xf32>
    %202 = arith.addf %201, %200 : vector<2x96xf32>
    %203 = arith.divf %201, %202 : vector<2x96xf32>
    %204 = vector.extract_strided_slice %181 {offsets = [0, 96], sizes = [2, 32], strides = [1, 1]} : vector<2x128xf32> to vector<2x32xf32>
    %205 = math.tanh %204 : vector<2x32xf32>
    %206 = vector.extract_strided_slice %203 {offsets = [0, 32], sizes = [2, 32], strides = [1, 1]} : vector<2x96xf32> to vector<2x32xf32>
    %207 = arith.mulf %206, %170 : vector<2x32xf32>
    %208 = vector.extract_strided_slice %203 {offsets = [0, 0], sizes = [2, 32], strides = [1, 1]} : vector<2x96xf32> to vector<2x32xf32>
    %209 = arith.mulf %208, %205 : vector<2x32xf32>
    %210 = arith.addf %207, %209 : vector<2x32xf32>
    %211 = vector.extract_strided_slice %203 {offsets = [0, 64], sizes = [2, 32], strides = [1, 1]} : vector<2x96xf32> to vector<2x32xf32>
    %212 = math.tanh %210 : vector<2x32xf32>
    %213 = arith.mulf %211, %212 : vector<2x32xf32>
    %214 = tpu.concatenate %197, %213 in 1 : vector<2x32xf32>, vector<2x32xf32> -> vector<2x64xf32>
    %cst_29 = arith.constant dense<0.000000e+00> : vector<2x256xf32>
    %215 = tpu.matmul %214, %13, %cst_29 {dimension_numbers = #tpu.dot_dimension_numbers<[1], [0], [0], [1], [0, 0, 1, 1], [], []>} : vector<2x64xf32>, vector<64x256xf32>, vector<2x256xf32> -> vector<2x256xf32>
    %216 = vector.extract_strided_slice %12 {offsets = [10, 0], sizes = [2, 128], strides = [1, 1]} : vector<16x256xf32> to vector<2x128xf32>
    %217 = vector.extract_strided_slice %215 {offsets = [0, 0], sizes = [2, 128], strides = [1, 1]} : vector<2x256xf32> to vector<2x128xf32>
    %218 = arith.addf %216, %217 : vector<2x128xf32>
    %219 = vector.extract_strided_slice %12 {offsets = [4, 128], sizes = [2, 128], strides = [1, 1]} : vector<16x256xf32> to vector<2x128xf32>
    %220 = vector.extract_strided_slice %215 {offsets = [0, 128], sizes = [2, 128], strides = [1, 1]} : vector<2x256xf32> to vector<2x128xf32>
    %221 = arith.addf %219, %220 : vector<2x128xf32>
    %222 = vector.extract_strided_slice %218 {offsets = [0, 0], sizes = [2, 96], strides = [1, 1]} : vector<2x128xf32> to vector<2x96xf32>
    %223 = arith.negf %222 : vector<2x96xf32>
    %224 = math.exp %223 : vector<2x96xf32>
    %cst_30 = arith.constant 1.000000e+00 : f32
    %225 = vector.broadcast %cst_30 : f32 to vector<2x96xf32>
    %226 = arith.addf %225, %224 : vector<2x96xf32>
    %227 = arith.divf %225, %226 : vector<2x96xf32>
    %228 = vector.extract_strided_slice %218 {offsets = [0, 96], sizes = [2, 32], strides = [1, 1]} : vector<2x128xf32> to vector<2x32xf32>
    %229 = math.tanh %228 : vector<2x32xf32>
    %230 = vector.extract_strided_slice %227 {offsets = [0, 32], sizes = [2, 32], strides = [1, 1]} : vector<2x96xf32> to vector<2x32xf32>
    %231 = arith.mulf %230, %194 : vector<2x32xf32>
    %232 = vector.extract_strided_slice %227 {offsets = [0, 0], sizes = [2, 32], strides = [1, 1]} : vector<2x96xf32> to vector<2x32xf32>
    %233 = arith.mulf %232, %229 : vector<2x32xf32>
    %234 = arith.addf %231, %233 : vector<2x32xf32>
    %235 = vector.extract_strided_slice %227 {offsets = [0, 64], sizes = [2, 32], strides = [1, 1]} : vector<2x96xf32> to vector<2x32xf32>
    %236 = math.tanh %234 : vector<2x32xf32>
    %237 = arith.mulf %235, %236 : vector<2x32xf32>
    %238 = vector.extract_strided_slice %221 {offsets = [0, 0], sizes = [2, 96], strides = [1, 1]} : vector<2x128xf32> to vector<2x96xf32>
    %239 = arith.negf %238 : vector<2x96xf32>
    %240 = math.exp %239 : vector<2x96xf32>
    %cst_31 = arith.constant 1.000000e+00 : f32
    %241 = vector.broadcast %cst_31 : f32 to vector<2x96xf32>
    %242 = arith.addf %241, %240 : vector<2x96xf32>
    %243 = arith.divf %241, %242 : vector<2x96xf32>
    %244 = vector.extract_strided_slice %221 {offsets = [0, 96], sizes = [2, 32], strides = [1, 1]} : vector<2x128xf32> to vector<2x32xf32>
    %245 = math.tanh %244 : vector<2x32xf32>
    %246 = vector.extract_strided_slice %243 {offsets = [0, 32], sizes = [2, 32], strides = [1, 1]} : vector<2x96xf32> to vector<2x32xf32>
    %247 = arith.mulf %246, %210 : vector<2x32xf32>
    %248 = vector.extract_strided_slice %243 {offsets = [0, 0], sizes = [2, 32], strides = [1, 1]} : vector<2x96xf32> to vector<2x32xf32>
    %249 = arith.mulf %248, %245 : vector<2x32xf32>
    %250 = arith.addf %247, %249 : vector<2x32xf32>
    %251 = vector.extract_strided_slice %243 {offsets = [0, 64], sizes = [2, 32], strides = [1, 1]} : vector<2x96xf32> to vector<2x32xf32>
    %252 = math.tanh %250 : vector<2x32xf32>
    %253 = arith.mulf %251, %252 : vector<2x32xf32>
    %254 = tpu.concatenate %237, %253 in 1 : vector<2x32xf32>, vector<2x32xf32> -> vector<2x64xf32>
    %cst_32 = arith.constant dense<0.000000e+00> : vector<2x256xf32>
    %255 = tpu.matmul %254, %13, %cst_32 {dimension_numbers = #tpu.dot_dimension_numbers<[1], [0], [0], [1], [0, 0, 1, 1], [], []>} : vector<2x64xf32>, vector<64x256xf32>, vector<2x256xf32> -> vector<2x256xf32>
    %256 = vector.extract_strided_slice %12 {offsets = [12, 0], sizes = [2, 128], strides = [1, 1]} : vector<16x256xf32> to vector<2x128xf32>
    %257 = vector.extract_strided_slice %255 {offsets = [0, 0], sizes = [2, 128], strides = [1, 1]} : vector<2x256xf32> to vector<2x128xf32>
    %258 = arith.addf %256, %257 : vector<2x128xf32>
    %259 = vector.extract_strided_slice %12 {offsets = [2, 128], sizes = [2, 128], strides = [1, 1]} : vector<16x256xf32> to vector<2x128xf32>
    %260 = vector.extract_strided_slice %255 {offsets = [0, 128], sizes = [2, 128], strides = [1, 1]} : vector<2x256xf32> to vector<2x128xf32>
    %261 = arith.addf %259, %260 : vector<2x128xf32>
    %262 = vector.extract_strided_slice %258 {offsets = [0, 0], sizes = [2, 96], strides = [1, 1]} : vector<2x128xf32> to vector<2x96xf32>
    %263 = arith.negf %262 : vector<2x96xf32>
    %264 = math.exp %263 : vector<2x96xf32>
    %cst_33 = arith.constant 1.000000e+00 : f32
    %265 = vector.broadcast %cst_33 : f32 to vector<2x96xf32>
    %266 = arith.addf %265, %264 : vector<2x96xf32>
    %267 = arith.divf %265, %266 : vector<2x96xf32>
    %268 = vector.extract_strided_slice %258 {offsets = [0, 96], sizes = [2, 32], strides = [1, 1]} : vector<2x128xf32> to vector<2x32xf32>
    %269 = math.tanh %268 : vector<2x32xf32>
    %270 = vector.extract_strided_slice %267 {offsets = [0, 32], sizes = [2, 32], strides = [1, 1]} : vector<2x96xf32> to vector<2x32xf32>
    %271 = arith.mulf %270, %234 : vector<2x32xf32>
    %272 = vector.extract_strided_slice %267 {offsets = [0, 0], sizes = [2, 32], strides = [1, 1]} : vector<2x96xf32> to vector<2x32xf32>
    %273 = arith.mulf %272, %269 : vector<2x32xf32>
    %274 = arith.addf %271, %273 : vector<2x32xf32>
    %275 = vector.extract_strided_slice %267 {offsets = [0, 64], sizes = [2, 32], strides = [1, 1]} : vector<2x96xf32> to vector<2x32xf32>
    %276 = math.tanh %274 : vector<2x32xf32>
    %277 = arith.mulf %275, %276 : vector<2x32xf32>
    %278 = vector.extract_strided_slice %261 {offsets = [0, 0], sizes = [2, 96], strides = [1, 1]} : vector<2x128xf32> to vector<2x96xf32>
    %279 = arith.negf %278 : vector<2x96xf32>
    %280 = math.exp %279 : vector<2x96xf32>
    %cst_34 = arith.constant 1.000000e+00 : f32
    %281 = vector.broadcast %cst_34 : f32 to vector<2x96xf32>
    %282 = arith.addf %281, %280 : vector<2x96xf32>
    %283 = arith.divf %281, %282 : vector<2x96xf32>
    %284 = vector.extract_strided_slice %261 {offsets = [0, 96], sizes = [2, 32], strides = [1, 1]} : vector<2x128xf32> to vector<2x32xf32>
    %285 = math.tanh %284 : vector<2x32xf32>
    %286 = vector.extract_strided_slice %283 {offsets = [0, 32], sizes = [2, 32], strides = [1, 1]} : vector<2x96xf32> to vector<2x32xf32>
    %287 = arith.mulf %286, %250 : vector<2x32xf32>
    %288 = vector.extract_strided_slice %283 {offsets = [0, 0], sizes = [2, 32], strides = [1, 1]} : vector<2x96xf32> to vector<2x32xf32>
    %289 = arith.mulf %288, %285 : vector<2x32xf32>
    %290 = arith.addf %287, %289 : vector<2x32xf32>
    %291 = vector.extract_strided_slice %283 {offsets = [0, 64], sizes = [2, 32], strides = [1, 1]} : vector<2x96xf32> to vector<2x32xf32>
    %292 = math.tanh %290 : vector<2x32xf32>
    %293 = arith.mulf %291, %292 : vector<2x32xf32>
    %294 = tpu.concatenate %277, %293 in 1 : vector<2x32xf32>, vector<2x32xf32> -> vector<2x64xf32>
    %cst_35 = arith.constant dense<0.000000e+00> : vector<2x256xf32>
    %295 = tpu.matmul %294, %13, %cst_35 {dimension_numbers = #tpu.dot_dimension_numbers<[1], [0], [0], [1], [0, 0, 1, 1], [], []>} : vector<2x64xf32>, vector<64x256xf32>, vector<2x256xf32> -> vector<2x256xf32>
    %296 = vector.extract_strided_slice %12 {offsets = [14, 0], sizes = [2, 128], strides = [1, 1]} : vector<16x256xf32> to vector<2x128xf32>
    %297 = vector.extract_strided_slice %295 {offsets = [0, 0], sizes = [2, 128], strides = [1, 1]} : vector<2x256xf32> to vector<2x128xf32>
    %298 = arith.addf %296, %297 : vector<2x128xf32>
    %299 = vector.extract_strided_slice %12 {offsets = [0, 128], sizes = [2, 128], strides = [1, 1]} : vector<16x256xf32> to vector<2x128xf32>
    %300 = vector.extract_strided_slice %295 {offsets = [0, 128], sizes = [2, 128], strides = [1, 1]} : vector<2x256xf32> to vector<2x128xf32>
    %301 = arith.addf %299, %300 : vector<2x128xf32>
    %302 = vector.extract_strided_slice %298 {offsets = [0, 0], sizes = [2, 96], strides = [1, 1]} : vector<2x128xf32> to vector<2x96xf32>
    %303 = arith.negf %302 : vector<2x96xf32>
    %304 = math.exp %303 : vector<2x96xf32>
    %cst_36 = arith.constant 1.000000e+00 : f32
    %305 = vector.broadcast %cst_36 : f32 to vector<2x96xf32>
    %306 = arith.addf %305, %304 : vector<2x96xf32>
    %307 = arith.divf %305, %306 : vector<2x96xf32>
    %308 = vector.extract_strided_slice %298 {offsets = [0, 96], sizes = [2, 32], strides = [1, 1]} : vector<2x128xf32> to vector<2x32xf32>
    %309 = math.tanh %308 : vector<2x32xf32>
    %310 = vector.extract_strided_slice %307 {offsets = [0, 32], sizes = [2, 32], strides = [1, 1]} : vector<2x96xf32> to vector<2x32xf32>
    %311 = arith.mulf %310, %274 : vector<2x32xf32>
    %312 = vector.extract_strided_slice %307 {offsets = [0, 0], sizes = [2, 32], strides = [1, 1]} : vector<2x96xf32> to vector<2x32xf32>
    %313 = arith.mulf %312, %309 : vector<2x32xf32>
    %314 = arith.addf %311, %313 : vector<2x32xf32>
    %315 = vector.extract_strided_slice %307 {offsets = [0, 64], sizes = [2, 32], strides = [1, 1]} : vector<2x96xf32> to vector<2x32xf32>
    %316 = math.tanh %314 : vector<2x32xf32>
    %317 = arith.mulf %315, %316 : vector<2x32xf32>
    %318 = vector.extract_strided_slice %301 {offsets = [0, 0], sizes = [2, 96], strides = [1, 1]} : vector<2x128xf32> to vector<2x96xf32>
    %319 = arith.negf %318 : vector<2x96xf32>
    %320 = math.exp %319 : vector<2x96xf32>
    %cst_37 = arith.constant 1.000000e+00 : f32
    %321 = vector.broadcast %cst_37 : f32 to vector<2x96xf32>
    %322 = arith.addf %321, %320 : vector<2x96xf32>
    %323 = arith.divf %321, %322 : vector<2x96xf32>
    %324 = vector.extract_strided_slice %301 {offsets = [0, 96], sizes = [2, 32], strides = [1, 1]} : vector<2x128xf32> to vector<2x32xf32>
    %325 = math.tanh %324 : vector<2x32xf32>
    %326 = vector.extract_strided_slice %323 {offsets = [0, 32], sizes = [2, 32], strides = [1, 1]} : vector<2x96xf32> to vector<2x32xf32>
    %327 = arith.mulf %326, %290 : vector<2x32xf32>
    %328 = vector.extract_strided_slice %323 {offsets = [0, 0], sizes = [2, 32], strides = [1, 1]} : vector<2x96xf32> to vector<2x32xf32>
    %329 = arith.mulf %328, %325 : vector<2x32xf32>
    %330 = arith.addf %327, %329 : vector<2x32xf32>
    %331 = vector.extract_strided_slice %323 {offsets = [0, 64], sizes = [2, 32], strides = [1, 1]} : vector<2x96xf32> to vector<2x32xf32>
    %332 = math.tanh %330 : vector<2x32xf32>
    %333 = arith.mulf %331, %332 : vector<2x32xf32>
    %334 = tpu.concatenate %37, %333 in 1 : vector<2x32xf32>, vector<2x32xf32> -> vector<2x64xf32>
    %335 = tpu.concatenate %77, %293 in 1 : vector<2x32xf32>, vector<2x32xf32> -> vector<2x64xf32>
    %336 = tpu.concatenate %117, %253 in 1 : vector<2x32xf32>, vector<2x32xf32> -> vector<2x64xf32>
    %337 = tpu.concatenate %157, %213 in 1 : vector<2x32xf32>, vector<2x32xf32> -> vector<2x64xf32>
    %338 = tpu.concatenate %197, %173 in 1 : vector<2x32xf32>, vector<2x32xf32> -> vector<2x64xf32>
    %339 = tpu.concatenate %237, %133 in 1 : vector<2x32xf32>, vector<2x32xf32> -> vector<2x64xf32>
    %340 = tpu.concatenate %277, %93 in 1 : vector<2x32xf32>, vector<2x32xf32> -> vector<2x64xf32>
    %341 = tpu.concatenate %317, %53 in 1 : vector<2x32xf32>, vector<2x32xf32> -> vector<2x64xf32>
    %342 = tpu.concatenate %334, %335, %336, %337, %338, %339, %340, %341 in 0 : vector<2x64xf32>, vector<2x64xf32>, vector<2x64xf32>, vector<2x64xf32>, vector<2x64xf32>, vector<2x64xf32>, vector<2x64xf32>, vector<2x64xf32> -> vector<16x64xf32>
    %c0_38 = arith.constant 0 : index
    %c0_39 = arith.constant 0 : index
    %343 = vector.load %arg6[%c0_38, %c0_39] : memref<64x128xf32, #tpu.memory_space<vmem>>, vector<64x128xf32>
    %cst_40 = arith.constant dense<0.000000e+00> : vector<16x128xf32>
    %344 = tpu.matmul %342, %343, %cst_40 {dimension_numbers = #tpu.dot_dimension_numbers<[1], [0], [0], [1], [0, 0, 1, 1], [], []>} : vector<16x64xf32>, vector<64x128xf32>, vector<16x128xf32> -> vector<16x128xf32>
    %c0_41 = arith.constant 0 : index
    %c0_42 = arith.constant 0 : index
    %345 = vector.load %arg7[%c0_41, %c0_42] : memref<1x128xf32, #tpu.memory_space<vmem>>, vector<1x128xf32>
    %346 = vector.broadcast %345 : vector<1x128xf32> to vector<16x128xf32>
    %347 = arith.addf %344, %346 : vector<16x128xf32>
    %c0_43 = arith.constant 0 : index
    %c0_44 = arith.constant 0 : index
    %348 = vector.load %arg8[%c0_43, %c0_44] : memref<32x128xf32, #tpu.memory_space<vmem>>, vector<32x128xf32>
    %349 = vector.extract_strided_slice %347 {offsets = [0, 0], sizes = [2, 128], strides = [1, 1]} : vector<16x128xf32> to vector<2x128xf32>
    %350 = vector.extract_strided_slice %349 {offsets = [0, 0], sizes = [2, 96], strides = [1, 1]} : vector<2x128xf32> to vector<2x96xf32>
    %351 = arith.negf %350 : vector<2x96xf32>
    %352 = math.exp %351 : vector<2x96xf32>
    %cst_45 = arith.constant 1.000000e+00 : f32
    %353 = vector.broadcast %cst_45 : f32 to vector<2x96xf32>
    %354 = arith.addf %353, %352 : vector<2x96xf32>
    %355 = arith.divf %353, %354 : vector<2x96xf32>
    %356 = vector.extract_strided_slice %349 {offsets = [0, 96], sizes = [2, 32], strides = [1, 1]} : vector<2x128xf32> to vector<2x32xf32>
    %357 = math.tanh %356 : vector<2x32xf32>
    %358 = vector.extract_strided_slice %355 {offsets = [0, 32], sizes = [2, 32], strides = [1, 1]} : vector<2x96xf32> to vector<2x32xf32>
    %359 = arith.mulf %358, %14 : vector<2x32xf32>
    %360 = vector.extract_strided_slice %355 {offsets = [0, 0], sizes = [2, 32], strides = [1, 1]} : vector<2x96xf32> to vector<2x32xf32>
    %361 = arith.mulf %360, %357 : vector<2x32xf32>
    %362 = arith.addf %359, %361 : vector<2x32xf32>
    %363 = vector.extract_strided_slice %355 {offsets = [0, 64], sizes = [2, 32], strides = [1, 1]} : vector<2x96xf32> to vector<2x32xf32>
    %364 = math.tanh %362 : vector<2x32xf32>
    %365 = arith.mulf %363, %364 : vector<2x32xf32>
    %366 = vector.extract_strided_slice %347 {offsets = [2, 0], sizes = [2, 128], strides = [1, 1]} : vector<16x128xf32> to vector<2x128xf32>
    %cst_46 = arith.constant dense<0.000000e+00> : vector<2x128xf32>
    %367 = tpu.matmul %365, %348, %cst_46 {dimension_numbers = #tpu.dot_dimension_numbers<[1], [0], [0], [1], [0, 0, 1, 1], [], []>} : vector<2x32xf32>, vector<32x128xf32>, vector<2x128xf32> -> vector<2x128xf32>
    %368 = arith.addf %366, %367 : vector<2x128xf32>
    %369 = vector.extract_strided_slice %368 {offsets = [0, 0], sizes = [2, 96], strides = [1, 1]} : vector<2x128xf32> to vector<2x96xf32>
    %370 = arith.negf %369 : vector<2x96xf32>
    %371 = math.exp %370 : vector<2x96xf32>
    %cst_47 = arith.constant 1.000000e+00 : f32
    %372 = vector.broadcast %cst_47 : f32 to vector<2x96xf32>
    %373 = arith.addf %372, %371 : vector<2x96xf32>
    %374 = arith.divf %372, %373 : vector<2x96xf32>
    %375 = vector.extract_strided_slice %368 {offsets = [0, 96], sizes = [2, 32], strides = [1, 1]} : vector<2x128xf32> to vector<2x32xf32>
    %376 = math.tanh %375 : vector<2x32xf32>
    %377 = vector.extract_strided_slice %374 {offsets = [0, 32], sizes = [2, 32], strides = [1, 1]} : vector<2x96xf32> to vector<2x32xf32>
    %378 = arith.mulf %377, %362 : vector<2x32xf32>
    %379 = vector.extract_strided_slice %374 {offsets = [0, 0], sizes = [2, 32], strides = [1, 1]} : vector<2x96xf32> to vector<2x32xf32>
    %380 = arith.mulf %379, %376 : vector<2x32xf32>
    %381 = arith.addf %378, %380 : vector<2x32xf32>
    %382 = vector.extract_strided_slice %374 {offsets = [0, 64], sizes = [2, 32], strides = [1, 1]} : vector<2x96xf32> to vector<2x32xf32>
    %383 = math.tanh %381 : vector<2x32xf32>
    %384 = arith.mulf %382, %383 : vector<2x32xf32>
    %385 = vector.extract_strided_slice %347 {offsets = [4, 0], sizes = [2, 128], strides = [1, 1]} : vector<16x128xf32> to vector<2x128xf32>
    %cst_48 = arith.constant dense<0.000000e+00> : vector<2x128xf32>
    %386 = tpu.matmul %384, %348, %cst_48 {dimension_numbers = #tpu.dot_dimension_numbers<[1], [0], [0], [1], [0, 0, 1, 1], [], []>} : vector<2x32xf32>, vector<32x128xf32>, vector<2x128xf32> -> vector<2x128xf32>
    %387 = arith.addf %385, %386 : vector<2x128xf32>
    %388 = vector.extract_strided_slice %387 {offsets = [0, 0], sizes = [2, 96], strides = [1, 1]} : vector<2x128xf32> to vector<2x96xf32>
    %389 = arith.negf %388 : vector<2x96xf32>
    %390 = math.exp %389 : vector<2x96xf32>
    %cst_49 = arith.constant 1.000000e+00 : f32
    %391 = vector.broadcast %cst_49 : f32 to vector<2x96xf32>
    %392 = arith.addf %391, %390 : vector<2x96xf32>
    %393 = arith.divf %391, %392 : vector<2x96xf32>
    %394 = vector.extract_strided_slice %387 {offsets = [0, 96], sizes = [2, 32], strides = [1, 1]} : vector<2x128xf32> to vector<2x32xf32>
    %395 = math.tanh %394 : vector<2x32xf32>
    %396 = vector.extract_strided_slice %393 {offsets = [0, 32], sizes = [2, 32], strides = [1, 1]} : vector<2x96xf32> to vector<2x32xf32>
    %397 = arith.mulf %396, %381 : vector<2x32xf32>
    %398 = vector.extract_strided_slice %393 {offsets = [0, 0], sizes = [2, 32], strides = [1, 1]} : vector<2x96xf32> to vector<2x32xf32>
    %399 = arith.mulf %398, %395 : vector<2x32xf32>
    %400 = arith.addf %397, %399 : vector<2x32xf32>
    %401 = vector.extract_strided_slice %393 {offsets = [0, 64], sizes = [2, 32], strides = [1, 1]} : vector<2x96xf32> to vector<2x32xf32>
    %402 = math.tanh %400 : vector<2x32xf32>
    %403 = arith.mulf %401, %402 : vector<2x32xf32>
    %404 = vector.extract_strided_slice %347 {offsets = [6, 0], sizes = [2, 128], strides = [1, 1]} : vector<16x128xf32> to vector<2x128xf32>
    %cst_50 = arith.constant dense<0.000000e+00> : vector<2x128xf32>
    %405 = tpu.matmul %403, %348, %cst_50 {dimension_numbers = #tpu.dot_dimension_numbers<[1], [0], [0], [1], [0, 0, 1, 1], [], []>} : vector<2x32xf32>, vector<32x128xf32>, vector<2x128xf32> -> vector<2x128xf32>
    %406 = arith.addf %404, %405 : vector<2x128xf32>
    %407 = vector.extract_strided_slice %406 {offsets = [0, 0], sizes = [2, 96], strides = [1, 1]} : vector<2x128xf32> to vector<2x96xf32>
    %408 = arith.negf %407 : vector<2x96xf32>
    %409 = math.exp %408 : vector<2x96xf32>
    %cst_51 = arith.constant 1.000000e+00 : f32
    %410 = vector.broadcast %cst_51 : f32 to vector<2x96xf32>
    %411 = arith.addf %410, %409 : vector<2x96xf32>
    %412 = arith.divf %410, %411 : vector<2x96xf32>
    %413 = vector.extract_strided_slice %406 {offsets = [0, 96], sizes = [2, 32], strides = [1, 1]} : vector<2x128xf32> to vector<2x32xf32>
    %414 = math.tanh %413 : vector<2x32xf32>
    %415 = vector.extract_strided_slice %412 {offsets = [0, 32], sizes = [2, 32], strides = [1, 1]} : vector<2x96xf32> to vector<2x32xf32>
    %416 = arith.mulf %415, %400 : vector<2x32xf32>
    %417 = vector.extract_strided_slice %412 {offsets = [0, 0], sizes = [2, 32], strides = [1, 1]} : vector<2x96xf32> to vector<2x32xf32>
    %418 = arith.mulf %417, %414 : vector<2x32xf32>
    %419 = arith.addf %416, %418 : vector<2x32xf32>
    %420 = vector.extract_strided_slice %412 {offsets = [0, 64], sizes = [2, 32], strides = [1, 1]} : vector<2x96xf32> to vector<2x32xf32>
    %421 = math.tanh %419 : vector<2x32xf32>
    %422 = arith.mulf %420, %421 : vector<2x32xf32>
    %423 = vector.extract_strided_slice %347 {offsets = [8, 0], sizes = [2, 128], strides = [1, 1]} : vector<16x128xf32> to vector<2x128xf32>
    %cst_52 = arith.constant dense<0.000000e+00> : vector<2x128xf32>
    %424 = tpu.matmul %422, %348, %cst_52 {dimension_numbers = #tpu.dot_dimension_numbers<[1], [0], [0], [1], [0, 0, 1, 1], [], []>} : vector<2x32xf32>, vector<32x128xf32>, vector<2x128xf32> -> vector<2x128xf32>
    %425 = arith.addf %423, %424 : vector<2x128xf32>
    %426 = vector.extract_strided_slice %425 {offsets = [0, 0], sizes = [2, 96], strides = [1, 1]} : vector<2x128xf32> to vector<2x96xf32>
    %427 = arith.negf %426 : vector<2x96xf32>
    %428 = math.exp %427 : vector<2x96xf32>
    %cst_53 = arith.constant 1.000000e+00 : f32
    %429 = vector.broadcast %cst_53 : f32 to vector<2x96xf32>
    %430 = arith.addf %429, %428 : vector<2x96xf32>
    %431 = arith.divf %429, %430 : vector<2x96xf32>
    %432 = vector.extract_strided_slice %425 {offsets = [0, 96], sizes = [2, 32], strides = [1, 1]} : vector<2x128xf32> to vector<2x32xf32>
    %433 = math.tanh %432 : vector<2x32xf32>
    %434 = vector.extract_strided_slice %431 {offsets = [0, 32], sizes = [2, 32], strides = [1, 1]} : vector<2x96xf32> to vector<2x32xf32>
    %435 = arith.mulf %434, %419 : vector<2x32xf32>
    %436 = vector.extract_strided_slice %431 {offsets = [0, 0], sizes = [2, 32], strides = [1, 1]} : vector<2x96xf32> to vector<2x32xf32>
    %437 = arith.mulf %436, %433 : vector<2x32xf32>
    %438 = arith.addf %435, %437 : vector<2x32xf32>
    %439 = vector.extract_strided_slice %431 {offsets = [0, 64], sizes = [2, 32], strides = [1, 1]} : vector<2x96xf32> to vector<2x32xf32>
    %440 = math.tanh %438 : vector<2x32xf32>
    %441 = arith.mulf %439, %440 : vector<2x32xf32>
    %442 = vector.extract_strided_slice %347 {offsets = [10, 0], sizes = [2, 128], strides = [1, 1]} : vector<16x128xf32> to vector<2x128xf32>
    %cst_54 = arith.constant dense<0.000000e+00> : vector<2x128xf32>
    %443 = tpu.matmul %441, %348, %cst_54 {dimension_numbers = #tpu.dot_dimension_numbers<[1], [0], [0], [1], [0, 0, 1, 1], [], []>} : vector<2x32xf32>, vector<32x128xf32>, vector<2x128xf32> -> vector<2x128xf32>
    %444 = arith.addf %442, %443 : vector<2x128xf32>
    %445 = vector.extract_strided_slice %444 {offsets = [0, 0], sizes = [2, 96], strides = [1, 1]} : vector<2x128xf32> to vector<2x96xf32>
    %446 = arith.negf %445 : vector<2x96xf32>
    %447 = math.exp %446 : vector<2x96xf32>
    %cst_55 = arith.constant 1.000000e+00 : f32
    %448 = vector.broadcast %cst_55 : f32 to vector<2x96xf32>
    %449 = arith.addf %448, %447 : vector<2x96xf32>
    %450 = arith.divf %448, %449 : vector<2x96xf32>
    %451 = vector.extract_strided_slice %444 {offsets = [0, 96], sizes = [2, 32], strides = [1, 1]} : vector<2x128xf32> to vector<2x32xf32>
    %452 = math.tanh %451 : vector<2x32xf32>
    %453 = vector.extract_strided_slice %450 {offsets = [0, 32], sizes = [2, 32], strides = [1, 1]} : vector<2x96xf32> to vector<2x32xf32>
    %454 = arith.mulf %453, %438 : vector<2x32xf32>
    %455 = vector.extract_strided_slice %450 {offsets = [0, 0], sizes = [2, 32], strides = [1, 1]} : vector<2x96xf32> to vector<2x32xf32>
    %456 = arith.mulf %455, %452 : vector<2x32xf32>
    %457 = arith.addf %454, %456 : vector<2x32xf32>
    %458 = vector.extract_strided_slice %450 {offsets = [0, 64], sizes = [2, 32], strides = [1, 1]} : vector<2x96xf32> to vector<2x32xf32>
    %459 = math.tanh %457 : vector<2x32xf32>
    %460 = arith.mulf %458, %459 : vector<2x32xf32>
    %461 = vector.extract_strided_slice %347 {offsets = [12, 0], sizes = [2, 128], strides = [1, 1]} : vector<16x128xf32> to vector<2x128xf32>
    %cst_56 = arith.constant dense<0.000000e+00> : vector<2x128xf32>
    %462 = tpu.matmul %460, %348, %cst_56 {dimension_numbers = #tpu.dot_dimension_numbers<[1], [0], [0], [1], [0, 0, 1, 1], [], []>} : vector<2x32xf32>, vector<32x128xf32>, vector<2x128xf32> -> vector<2x128xf32>
    %463 = arith.addf %461, %462 : vector<2x128xf32>
    %464 = vector.extract_strided_slice %463 {offsets = [0, 0], sizes = [2, 96], strides = [1, 1]} : vector<2x128xf32> to vector<2x96xf32>
    %465 = arith.negf %464 : vector<2x96xf32>
    %466 = math.exp %465 : vector<2x96xf32>
    %cst_57 = arith.constant 1.000000e+00 : f32
    %467 = vector.broadcast %cst_57 : f32 to vector<2x96xf32>
    %468 = arith.addf %467, %466 : vector<2x96xf32>
    %469 = arith.divf %467, %468 : vector<2x96xf32>
    %470 = vector.extract_strided_slice %463 {offsets = [0, 96], sizes = [2, 32], strides = [1, 1]} : vector<2x128xf32> to vector<2x32xf32>
    %471 = math.tanh %470 : vector<2x32xf32>
    %472 = vector.extract_strided_slice %469 {offsets = [0, 32], sizes = [2, 32], strides = [1, 1]} : vector<2x96xf32> to vector<2x32xf32>
    %473 = arith.mulf %472, %457 : vector<2x32xf32>
    %474 = vector.extract_strided_slice %469 {offsets = [0, 0], sizes = [2, 32], strides = [1, 1]} : vector<2x96xf32> to vector<2x32xf32>
    %475 = arith.mulf %474, %471 : vector<2x32xf32>
    %476 = arith.addf %473, %475 : vector<2x32xf32>
    %477 = vector.extract_strided_slice %469 {offsets = [0, 64], sizes = [2, 32], strides = [1, 1]} : vector<2x96xf32> to vector<2x32xf32>
    %478 = math.tanh %476 : vector<2x32xf32>
    %479 = arith.mulf %477, %478 : vector<2x32xf32>
    %480 = vector.extract_strided_slice %347 {offsets = [14, 0], sizes = [2, 128], strides = [1, 1]} : vector<16x128xf32> to vector<2x128xf32>
    %cst_58 = arith.constant dense<0.000000e+00> : vector<2x128xf32>
    %481 = tpu.matmul %479, %348, %cst_58 {dimension_numbers = #tpu.dot_dimension_numbers<[1], [0], [0], [1], [0, 0, 1, 1], [], []>} : vector<2x32xf32>, vector<32x128xf32>, vector<2x128xf32> -> vector<2x128xf32>
    %482 = arith.addf %480, %481 : vector<2x128xf32>
    %483 = vector.extract_strided_slice %482 {offsets = [0, 0], sizes = [2, 96], strides = [1, 1]} : vector<2x128xf32> to vector<2x96xf32>
    %484 = arith.negf %483 : vector<2x96xf32>
    %485 = math.exp %484 : vector<2x96xf32>
    %cst_59 = arith.constant 1.000000e+00 : f32
    %486 = vector.broadcast %cst_59 : f32 to vector<2x96xf32>
    %487 = arith.addf %486, %485 : vector<2x96xf32>
    %488 = arith.divf %486, %487 : vector<2x96xf32>
    %489 = vector.extract_strided_slice %482 {offsets = [0, 96], sizes = [2, 32], strides = [1, 1]} : vector<2x128xf32> to vector<2x32xf32>
    %490 = math.tanh %489 : vector<2x32xf32>
    %491 = vector.extract_strided_slice %488 {offsets = [0, 32], sizes = [2, 32], strides = [1, 1]} : vector<2x96xf32> to vector<2x32xf32>
    %492 = arith.mulf %491, %476 : vector<2x32xf32>
    %493 = vector.extract_strided_slice %488 {offsets = [0, 0], sizes = [2, 32], strides = [1, 1]} : vector<2x96xf32> to vector<2x32xf32>
    %494 = arith.mulf %493, %490 : vector<2x32xf32>
    %495 = arith.addf %492, %494 : vector<2x32xf32>
    %496 = vector.extract_strided_slice %488 {offsets = [0, 64], sizes = [2, 32], strides = [1, 1]} : vector<2x96xf32> to vector<2x32xf32>
    %497 = math.tanh %495 : vector<2x32xf32>
    %498 = arith.mulf %496, %497 : vector<2x32xf32>
    %499 = vector.extract_strided_slice %342 {offsets = [14, 0], sizes = [2, 64], strides = [1, 1]} : vector<16x64xf32> to vector<2x64xf32>
    %c0_60 = arith.constant 0 : index
    %c0_61 = arith.constant 0 : index
    %500 = vector.load %arg9[%c0_60, %c0_61] : memref<64x128xf32, #tpu.memory_space<vmem>>, vector<64x128xf32>
    %cst_62 = arith.constant dense<0.000000e+00> : vector<2x128xf32>
    %501 = tpu.matmul %499, %500, %cst_62 {dimension_numbers = #tpu.dot_dimension_numbers<[1], [0], [0], [1], [0, 0, 1, 1], [], []>} : vector<2x64xf32>, vector<64x128xf32>, vector<2x128xf32> -> vector<2x128xf32>
    %c0_63 = arith.constant 0 : index
    %c0_64 = arith.constant 0 : index
    %502 = vector.load %arg10[%c0_63, %c0_64] : memref<1x128xf32, #tpu.memory_space<vmem>>, vector<1x128xf32>
    %503 = vector.broadcast %502 : vector<1x128xf32> to vector<2x128xf32>
    %504 = arith.addf %501, %503 : vector<2x128xf32>
    %505 = vector.extract_strided_slice %504 {offsets = [0, 0], sizes = [2, 96], strides = [1, 1]} : vector<2x128xf32> to vector<2x96xf32>
    %506 = arith.negf %505 : vector<2x96xf32>
    %507 = math.exp %506 : vector<2x96xf32>
    %cst_65 = arith.constant 1.000000e+00 : f32
    %508 = vector.broadcast %cst_65 : f32 to vector<2x96xf32>
    %509 = arith.addf %508, %507 : vector<2x96xf32>
    %510 = arith.divf %508, %509 : vector<2x96xf32>
    %511 = vector.extract_strided_slice %510 {offsets = [0, 0], sizes = [2, 32], strides = [1, 1]} : vector<2x96xf32> to vector<2x32xf32>
    %512 = vector.extract_strided_slice %504 {offsets = [0, 96], sizes = [2, 32], strides = [1, 1]} : vector<2x128xf32> to vector<2x32xf32>
    %513 = math.tanh %512 : vector<2x32xf32>
    %514 = arith.mulf %511, %513 : vector<2x32xf32>
    %515 = vector.extract_strided_slice %510 {offsets = [0, 64], sizes = [2, 32], strides = [1, 1]} : vector<2x96xf32> to vector<2x32xf32>
    %516 = math.tanh %514 : vector<2x32xf32>
    %517 = arith.mulf %515, %516 : vector<2x32xf32>
    %518 = tpu.concatenate %498, %517 in 1 : vector<2x32xf32>, vector<2x32xf32> -> vector<2x64xf32>
    %c0_66 = arith.constant 0 : index
    %c0_67 = arith.constant 0 : index
    %519 = vector.load %arg11[%c0_66, %c0_67] : memref<64x4xf32, #tpu.memory_space<vmem>>, vector<64x4xf32>
    %cst_68 = arith.constant dense<0.000000e+00> : vector<2x4xf32>
    %520 = tpu.matmul %518, %519, %cst_68 {dimension_numbers = #tpu.dot_dimension_numbers<[1], [0], [0], [1], [0, 0, 1, 1], [], []>} : vector<2x64xf32>, vector<64x4xf32>, vector<2x4xf32> -> vector<2x4xf32>
    %c0_69 = arith.constant 0 : index
    %c0_70 = arith.constant 0 : index
    %521 = vector.load %arg12[%c0_69, %c0_70] : memref<1x4xf32, #tpu.memory_space<vmem>>, vector<1x4xf32>
    %522 = vector.broadcast %521 : vector<1x4xf32> to vector<2x4xf32>
    %523 = arith.addf %520, %522 : vector<2x4xf32>
    %524 = arith.negf %523 : vector<2x4xf32>
    %525 = math.exp %524 : vector<2x4xf32>
    %cst_71 = arith.constant 1.000000e+00 : f32
    %526 = vector.broadcast %cst_71 : f32 to vector<2x4xf32>
    %527 = arith.addf %526, %525 : vector<2x4xf32>
    %528 = arith.divf %526, %527 : vector<2x4xf32>
    %c0_72 = arith.constant 0 : index
    %c0_73 = arith.constant 0 : index
    %529 = vector.load %arg13[%c0_72, %c0_73] : memref<2x4xf32, #tpu.memory_space<vmem>>, vector<2x4xf32>
    tpu.vector_store %arg13[%c0_72, %c0_73], %528 {strides = array<i32>} : memref<2x4xf32, #tpu.memory_space<vmem>>, vector<2x4xf32>,
    return
  }
}

</mosaic_0001>

<llo_original>
// kernel: birnn_forward.1
$region0: #{birnn_forward.1}
  #allocation0 [shape = 'u32[]', space=smem, size = 0x4, offset = 0x4, fixed_abs, tag = 'smem constant byte address 0x4 - core index']
  #allocation1 [shape = 'u32[144,128]{1,0:T(1,128)}', space=vmem, size = 0x12000, scoped, tag = 'internal scratch']
  %s0 = inlined_call_operand.vmem [shape: f32[16,16], index: 0, kind: input, shape index: {}]
  %s1 = inlined_call_operand.hbm [shape: f32[16,32], index: 1, kind: input, shape index: {}]
  %s2 = inlined_call_operand.vmem [shape: f32[1,32], index: 2, kind: input, shape index: {}]
  %s3 = inlined_call_operand.vmem [shape: f32[32,256], index: 3, kind: input, shape index: {}]
  %s4 = inlined_call_operand.hbm [shape: f32[1,256], index: 4, kind: input, shape index: {}]
  %s5 = inlined_call_operand.hbm [shape: f32[64,256], index: 5, kind: input, shape index: {}]
  %s6 = inlined_call_operand.vmem [shape: f32[64,128], index: 6, kind: input, shape index: {}]
  %s7 = inlined_call_operand.hbm [shape: f32[1,128], index: 7, kind: input, shape index: {}]
  %s8 = inlined_call_operand.hbm [shape: f32[32,128], index: 8, kind: input, shape index: {}]
  %s9 = inlined_call_operand.hbm [shape: f32[64,128], index: 9, kind: input, shape index: {}]
  %s10 = inlined_call_operand.hbm [shape: f32[1,128], index: 10, kind: input, shape index: {}]
  %s11 = inlined_call_operand.vmem [shape: f32[64,4], index: 11, kind: input, shape index: {}]
  %s12 = inlined_call_operand.hbm [shape: f32[1,4], index: 12, kind: input, shape index: {}]
  %s13 = inlined_call_operand.hbm [shape: f32[2,4], index: 13, kind: output, shape index: {}]
  %s14 = sld [smem:[#allocation0]]
  $region94: #{birnn_forward.1} parent=0
    _
  %s16 = ssub.s32 1, %s14
  %s17 = scalar_select 0, %s16, %s14
  $region1: #{birnn_forward.1} parent=0
    #allocation2 [shape = 'u8[8192]{0}', space=vmem, size = 0x2000, scoped, tag = 'input window, operand 1, single buffered']
    #allocation3 [shape = 's32[1]{0}', space=sflag, size = 0x4, scoped, tag = 'scoped memory for birnn_forward.1']
    #allocation4 [shape = 's32[1]{0}', space=sflag, size = 0x4, scoped, tag = 'scoped memory for birnn_forward.1']
    #allocation5 [shape = 'u8[1024]{0}', space=vmem, size = 0x400, scoped, tag = 'input window, operand 4, single buffered']
    #allocation6 [shape = 's32[1]{0}', space=sflag, size = 0x4, scoped, tag = 'scoped memory for birnn_forward.1']
    #allocation7 [shape = 'u8[65536]{0}', space=vmem, size = 0x10000, scoped, tag = 'input window, operand 5, single buffered']
    #allocation8 [shape = 'u8[512]{0}', space=vmem, size = 0x400, scoped, tag = 'input window, operand 7, single buffered']
    #allocation9 [shape = 's32[1]{0}', space=sflag, size = 0x4, scoped, tag = 'scoped memory for birnn_forward.1']
    #allocation10 [shape = 'u8[16384]{0}', space=vmem, size = 0x4000, scoped, tag = 'input window, operand 8, single buffered']
    #allocation11 [shape = 'u8[32768]{0}', space=vmem, size = 0x8000, scoped, tag = 'input window, operand 9, single buffered']
    #allocation12 [shape = 's32[1]{0}', space=sflag, size = 0x4, scoped, tag = 'scoped memory for birnn_forward.1']
    #allocation13 [shape = 'u8[512]{0}', space=vmem, size = 0x400, scoped, tag = 'input window, operand 10, single buffered']
    #allocation14 [shape = 'u8[512]{0}', space=vmem, size = 0x400, scoped, tag = 'input window, operand 12, single buffered']
    #allocation15 [shape = 's32[1]{0}', space=sflag, size = 0x4, scoped, tag = 'scoped memory for birnn_forward.1']
    #allocation16 [shape = 'u8[1024]{0}', space=vmem, size = 0x400, scoped, tag = 'output window, operand 0, single buffered']
    %18 = vsyncpa [#allocation3], 0
    %19 = vsyncpa [#allocation6], 0
    %20 = vsyncpa [#allocation9], 0
    %21 = vsyncpa [#allocation12], 0
    %22 = vsyncpa [#allocation15], 0
    %23 = vsyncpa [#allocation4], 0
    // Predicated region
    $region2: #{birnn_forward.1} parent=1 // pred_check
      _
    $region3: #{birnn_forward.1} parent=1 // pred_check_branch
      %25 = sbr.rel (0) target = $region5
    $region4: #{birnn_forward.1} parent=1 // pred_region
      _
    $region5: #{birnn_forward.1} parent=1 // pred_fallthru
      _
    // Predicated region
    $region6: #{birnn_forward.1} parent=1 // pred_check
      _
    $region7: #{birnn_forward.1} parent=1 // pred_check_branch
      %27 = sbr.rel (0) target = $region9
    $region8: #{birnn_forward.1} parent=1 // pred_region
      %s29 = ssub.s32 256, 256
      %30 = vsyncadd [#allocation3], %s29
      %s31 = sshll.u32 [#allocation2], 4
      %s32 = int_to_ptr.vmem [resolvable:$true] %s31
      %37 = dma.hbm_to_vmem [thread:$0]  %s1, 256, %s32, [#allocation3], 128, 128, 8
    $region9: #{birnn_forward.1} parent=1 // pred_fallthru
      _
    // Predicated region
    $region10: #{birnn_forward.1} parent=1 // pred_check
      _
    $region11: #{birnn_forward.1} parent=1 // pred_check_branch
      %39 = sbr.rel (0) target = $region13
    $region12: #{birnn_forward.1} parent=1 // pred_region
      _
    $region13: #{birnn_forward.1} parent=1 // pred_fallthru
      _
    // Predicated region
    $region14: #{birnn_forward.1} parent=1 // pred_check
      _
    $region15: #{birnn_forward.1} parent=1 // pred_check_branch
      %41 = sbr.rel (0) target = $region17
    $region16: #{birnn_forward.1} parent=1 // pred_region
      _
    $region17: #{birnn_forward.1} parent=1 // pred_fallthru
      _
    // Predicated region
    $region18: #{birnn_forward.1} parent=1 // pred_check
      _
    $region19: #{birnn_forward.1} parent=1 // pred_check_branch
      %43 = sbr.rel (0) target = $region21
    $region20: #{birnn_forward.1} parent=1 // pred_region
      %s45 = ssub.s32 32, 32
      %46 = vsyncadd [#allocation6], %s45
      %s48 = sshll.u32 [#allocation5], 4
      %s49 = int_to_ptr.vmem [resolvable:$true] %s48
      %51 = dma.hbm_to_vmem [thread:$0]  %s4, 32, %s49, [#allocation6]
    $region21: #{birnn_forward.1} parent=1 // pred_fallthru
      _
    // Predicated region
    $region22: #{birnn_forward.1} parent=1 // pred_check
      _
    $region23: #{birnn_forward.1} parent=1 // pred_check_branch
      %53 = sbr.rel (0) target = $region25
    $region24: #{birnn_forward.1} parent=1 // pred_region
      %s55 = ssub.s32 2048, 2048
      %56 = vsyncadd [#allocation6], %s55
      %s57 = sshll.u32 [#allocation7], 4
      %s58 = int_to_ptr.vmem [resolvable:$true] %s57
      %63 = dma.hbm_to_vmem [thread:$0]  %s5, 2048, %s58, [#allocation6], 256, 256, 16
    $region25: #{birnn_forward.1} parent=1 // pred_fallthru
      _
    // Predicated region
    $region26: #{birnn_forward.1} parent=1 // pred_check
      _
    $region27: #{birnn_forward.1} parent=1 // pred_check_branch
      %65 = sbr.rel (0) target = $region29
    $region28: #{birnn_forward.1} parent=1 // pred_region
      _
    $region29: #{birnn_forward.1} parent=1 // pred_fallthru
      _
    // Predicated region
    $region30: #{birnn_forward.1} parent=1 // pred_check
      _
    $region31: #{birnn_forward.1} parent=1 // pred_check_branch
      %67 = sbr.rel (0) target = $region33
    $region32: #{birnn_forward.1} parent=1 // pred_region
      %s69 = ssub.s32 16, 16
      %70 = vsyncadd [#allocation9], %s69
      %s72 = sshll.u32 [#allocation8], 4
      %s73 = int_to_ptr.vmem [resolvable:$true] %s72
      %75 = dma.hbm_to_vmem [thread:$0]  %s7, 16, %s73, [#allocation9]
    $region33: #{birnn_forward.1} parent=1 // pred_fallthru
      _
    // Predicated region
    $region34: #{birnn_forward.1} parent=1 // pred_check
      _
    $region35: #{birnn_forward.1} parent=1 // pred_check_branch
      %77 = sbr.rel (0) target = $region37
    $region36: #{birnn_forward.1} parent=1 // pred_region
      %s79 = ssub.s32 512, 512
      %80 = vsyncadd [#allocation9], %s79
      %s81 = sshll.u32 [#allocation10], 4
      %s82 = int_to_ptr.vmem [resolvable:$true] %s81
      %87 = dma.hbm_to_vmem [thread:$0]  %s8, 512, %s82, [#allocation9], 128, 128, 8
    $region37: #{birnn_forward.1} parent=1 // pred_fallthru
      _
    // Predicated region
    $region38: #{birnn_forward.1} parent=1 // pred_check
      _
    $region39: #{birnn_forward.1} parent=1 // pred_check_branch
      %89 = sbr.rel (0) target = $region41
    $region40: #{birnn_forward.1} parent=1 // pred_region
      %s91 = ssub.s32 1024, 1024
      %92 = vsyncadd [#allocation12], %s91
      %s93 = sshll.u32 [#allocation11], 4
      %s94 = int_to_ptr.vmem [resolvable:$true] %s93
      %99 = dma.hbm_to_vmem [thread:$0]  %s9, 1024, %s94, [#allocation12], 128, 128, 8
    $region41: #{birnn_forward.1} parent=1 // pred_fallthru
      _
    // Predicated region
    $region42: #{birnn_forward.1} parent=1 // pred_check
      _
    $region43: #{birnn_forward.1} parent=1 // pred_check_branch
      %101 = sbr.rel (0) target = $region45
    $region44: #{birnn_forward.1} parent=1 // pred_region
      %s103 = ssub.s32 16, 16
      %104 = vsyncadd [#allocation12], %s103
      %s106 = sshll.u32 [#allocation13], 4
      %s107 = int_to_ptr.vmem [resolvable:$true] %s106
      %109 = dma.hbm_to_vmem [thread:$0]  %s10, 16, %s107, [#allocation12]
    $region45: #{birnn_forward.1} parent=1 // pred_fallthru
      _
    // Predicated region
    $region46: #{birnn_forward.1} parent=1 // pred_check
      _
    $region47: #{birnn_forward.1} parent=1 // pred_check_branch
      %111 = sbr.rel (0) target = $region49
    $region48: #{birnn_forward.1} parent=1 // pred_region
      _
    $region49: #{birnn_forward.1} parent=1 // pred_fallthru
      _
    // Predicated region
    $region50: #{birnn_forward.1} parent=1 // pred_check
      _
    $region51: #{birnn_forward.1} parent=1 // pred_check_branch
      %113 = sbr.rel (0) target = $region53
    $region52: #{birnn_forward.1} parent=1 // pred_region
      %s115 = ssub.s32 16, 16
      %116 = vsyncadd [#allocation15], %s115
      %s118 = sshll.u32 [#allocation14], 4
      %s119 = int_to_ptr.vmem [resolvable:$true] %s118
      %121 = dma.hbm_to_vmem [thread:$0]  %s12, 16, %s119, [#allocation15]
    $region53: #{birnn_forward.1} parent=1 // pred_fallthru
      _
    // Predicated region
    $region54: #{birnn_forward.1} parent=1 // pred_check
      _
    $region55: #{birnn_forward.1} parent=1 // pred_check_branch
      %123 = sbr.rel (0) target = $region57
    $region56: #{birnn_forward.1} parent=1 // pred_region
      %124 = dma.done [#allocation3], 256
    $region57: #{birnn_forward.1} parent=1 // pred_fallthru
      _
    // Predicated region
    $region58: #{birnn_forward.1} parent=1 // pred_check
      _
    $region59: #{birnn_forward.1} parent=1 // pred_check_branch
      %126 = sbr.rel (0) target = $region61
    $region60: #{birnn_forward.1} parent=1 // pred_region
      %127 = dma.done [#allocation6], 32
    $region61: #{birnn_forward.1} parent=1 // pred_fallthru
      _
    // Predicated region
    $region62: #{birnn_forward.1} parent=1 // pred_check
      _
    $region63: #{birnn_forward.1} parent=1 // pred_check_branch
      %129 = sbr.rel (0) target = $region65
    $region64: #{birnn_forward.1} parent=1 // pred_region
      %130 = dma.done [#allocation6], 2048
    $region65: #{birnn_forward.1} parent=1 // pred_fallthru
      _
    // Predicated region
    $region66: #{birnn_forward.1} parent=1 // pred_check
      _
    $region67: #{birnn_forward.1} parent=1 // pred_check_branch
      %132 = sbr.rel (0) target = $region69
    $region68: #{birnn_forward.1} parent=1 // pred_region
      %133 = dma.done [#allocation9], 16
    $region69: #{birnn_forward.1} parent=1 // pred_fallthru
      _
    // Predicated region
    $region70: #{birnn_forward.1} parent=1 // pred_check
      _
    $region71: #{birnn_forward.1} parent=1 // pred_check_branch
      %135 = sbr.rel (0) target = $region73
    $region72: #{birnn_forward.1} parent=1 // pred_region
      %136 = dma.done [#allocation9], 512
    $region73: #{birnn_forward.1} parent=1 // pred_fallthru
      _
    // Predicated region
    $region74: #{birnn_forward.1} parent=1 // pred_check
      _
    $region75: #{birnn_forward.1} parent=1 // pred_check_branch
      %138 = sbr.rel (0) target = $region77
    $region76: #{birnn_forward.1} parent=1 // pred_region
      %139 = dma.done [#allocation12], 1024
    $region77: #{birnn_forward.1} parent=1 // pred_fallthru
      _
    // Predicated region
    $region78: #{birnn_forward.1} parent=1 // pred_check
      _
    $region79: #{birnn_forward.1} parent=1 // pred_check_branch
      %141 = sbr.rel (0) target = $region81
    $region80: #{birnn_forward.1} parent=1 // pred_region
      %142 = dma.done [#allocation12], 16
    $region81: #{birnn_forward.1} parent=1 // pred_fallthru
      _
    // Predicated region
    $region82: #{birnn_forward.1} parent=1 // pred_check
      _
    $region83: #{birnn_forward.1} parent=1 // pred_check_branch
      %144 = sbr.rel (0) target = $region85
    $region84: #{birnn_forward.1} parent=1 // pred_region
      %145 = dma.done [#allocation15], 16
    $region85: #{birnn_forward.1} parent=1 // pred_fallthru
      _
    %v146 = vld [vmem:[%s0] sm:$0xff]
    %v147 = vld [vmem:[%s0 + $0x8] sm:$0xff]
    %v148 = vld [vmem:[#allocation2] sm:$0xff]
    %v149 = vld [vmem:[#allocation2 + $0x8] sm:$0xff]
    %v150 = vld [vmem:[%s2] sm:$0x1]
    %v152 = vlaneseq
    %v153 = vshrl.u32 %v152, 7
    %v154 = vsub.s32 0, %v153
    %v155 = vrot.slane %v150, %v154
    %vm157 = vcmask 130048
    %v159 = vsel %vm157, %v146, 0
    %v162 = vsel %vm157, %v147, 0
    %164 = vmatprep.subr.mxu0 0.0
    %165 = vmatpush1.msra.mxu0 %v148
    %166 = vmatprep.subr.mxu0 0.0
    %167 = vmatpush1.msra.mxu0 %v149
    %168 = vmatprep.subr.mxu0 0.0
    %169 = vmatpush1.msra.mxu0 0.0
    %170 = vmatprep.subr.mxu0 0.0
    %171 = vmatpush1.msra.mxu0 0.0
    %172 = vmatprep.subr.mxu0 0.0
    %173 = vmatpush1.msra.mxu0 0.0
    %174 = vmatprep.subr.mxu0 0.0
    %175 = vmatpush1.msra.mxu0 0.0
    %176 = vmatprep.subr.mxu0 0.0
    %177 = vmatpush1.msra.mxu0 0.0
    %178 = vmatprep.subr.mxu0 0.0
    %179 = vmatpush1.msra.mxu0 0.0
    %180 = vmatprep.subr.mxu0 0.0
    %181 = vmatpush1.msra.mxu0 0.0
    %182 = vmatprep.subr.mxu0 0.0
    %183 = vmatpush1.msra.mxu0 0.0
    %184 = vmatprep.subr.mxu0 0.0
    %185 = vmatpush1.msra.mxu0 0.0
    %186 = vmatprep.subr.mxu0 0.0
    %187 = vmatpush1.msra.mxu0 0.0
    %188 = vmatprep.subr.mxu0 0.0
    %189 = vmatpush1.msra.mxu0 0.0
    %190 = vmatprep.subr.mxu0 0.0
    %191 = vmatpush1.msra.mxu0 0.0
    %192 = vmatprep.subr.mxu0 0.0
    %193 = vmatpush1.msra.mxu0 0.0
    %194 = vmatprep.subr.mxu0 0.0
    %195 = vmatpush1.msra.mxu0 0.0
    %196 = vmatprep.subr.mxu0 0.0
    %197 = vmatpush1.msra.mxu0 0.0
    %198 = vmatprep.subr.mxu0 0.0
    %199 = vmatpush1.msra.mxu0 0.0
    %200 = vmatprep.subr.mxu0 0.0
    %201 = vmatpush1.msra.mxu0 0.0
    %202 = vmatprep.subr.mxu0 0.0
    %203 = vmatpush1.msra.mxu0 0.0
    %204 = vmatprep.subr.mxu0 0.0
    %205 = vmatpush1.msra.mxu0 0.0
    %206 = vmatprep.subr.mxu0 0.0
    %207 = vmatpush1.msra.mxu0 0.0
    %208 = vmatprep.subr.mxu0 0.0
    %209 = vmatpush1.msra.mxu0 0.0
    %210 = vmatprep.subr.mxu0 0.0
    %211 = vmatpush1.msra.mxu0 0.0
    %212 = vmatprep.subr.mxu0 0.0
    %213 = vmatpush1.msra.mxu0 0.0
    %214 = vmatprep.subr.mxu0 0.0
    %215 = vmatpush1.msra.mxu0 0.0
    %216 = vmatprep.subr.mxu0 0.0
    %217 = vmatpush1.msra.mxu0 0.0
    %218 = vmatprep.subr.mxu0 0.0
    %219 = vmatpush1.msra.mxu0 0.0
    %220 = vmatprep.subr.mxu0 0.0
    %221 = vmatpush1.msra.mxu0 0.0
    %222 = vmatprep.subr.mxu0 0.0
    %223 = vmatpush1.msra.mxu0 0.0
    %224 = vmatprep.subr.mxu0 0.0
    %225 = vmatpush1.msra.mxu0 0.0
    %226 = vmatprep.subr.mxu0 0.0
    %227 = vmatpush1.msra.mxu0 0.0
    %228 = vmatprep.mubr.f32.mxu0 0.0
    %229 = vmatmul.mubr.f32.gmra.mrb[0].mxu0 %v159
    %v230 = vpop.f32.mrb[0].mxu0
    %v231 = vadd.f32 %v155, %v230
    %v232 = vpop.f32.mrb[0].mxu0
    %233 = vmatprep.mubr.f32.mxu0 0.0
    %234 = vmatmul.mubr.f32.gmra.mrb[0].mxu0 %v162
    %v235 = vpop.f32.mrb[0].mxu0
    %v236 = vadd.f32 %v155, %v235
    %v237 = vpop.f32.mrb[0].mxu0
    %238 = vdwg.mxu0
    %v239 = vmax.f32 %v231, 0.0
    %v240 = vmax.f32 %v236, 0.0
    %v241 = vld [vmem:[%s3] sm:$0xff]
    %v242 = vld [vmem:[%s3 + $0x8] sm:$0xff]
    %v243 = vld [vmem:[%s3 + $0x10] sm:$0xff]
    %v244 = vld [vmem:[%s3 + $0x18] sm:$0xff]
    %v245 = vld [vmem:[%s3 + $0x20] sm:$0xff]
    %v246 = vld [vmem:[%s3 + $0x28] sm:$0xff]
    %v247 = vld [vmem:[%s3 + $0x30] sm:$0xff]
    %v248 = vld [vmem:[%s3 + $0x38] sm:$0xff]
    %v249 = vld [vmem:[#allocation5] sm:$0x3]
    %v251 = vlaneseq
    %v252 = vshrl.u32 %v251, 7
    %v253 = vsub.s32 0, %v252
    %v254 = vrot.slane %v249, %v253
    %v255 = vlaneseq
    %v256 = vshrl.u32 %v255, 7
    %v257 = vsub.s32 1, %v256
    %v258 = vrot.slane %v249, %v257
    %vm261 = vcmask 261120
    %v263 = vsel %vm261, %v239, 0
    %v266 = vsel %vm261, %v240, 0
    %268 = vmatprep.subr.mxu0 %v242
    %269 = vmatpush1.msra.mxu0 %v241
    %270 = vmatprep.subr.mxu0 %v244
    %271 = vmatpush1.msra.mxu0 %v243
    %272 = vmatprep.subr.mxu0 %v246
    %273 = vmatpush1.msra.mxu0 %v245
    %274 = vmatprep.subr.mxu0 %v248
    %275 = vmatpush1.msra.mxu0 %v247
    %276 = vmatprep.subr.mxu0 0.0
    %277 = vmatpush1.msra.mxu0 0.0
    %278 = vmatprep.subr.mxu0 0.0
    %279 = vmatpush1.msra.mxu0 0.0
    %280 = vmatprep.subr.mxu0 0.0
    %281 = vmatpush1.msra.mxu0 0.0
    %282 = vmatprep.subr.mxu0 0.0
    %283 = vmatpush1.msra.mxu0 0.0
    %284 = vmatprep.subr.mxu0 0.0
    %285 = vmatpush1.msra.mxu0 0.0
    %286 = vmatprep.subr.mxu0 0.0
    %287 = vmatpush1.msra.mxu0 0.0
    %288 = vmatprep.subr.mxu0 0.0
    %289 = vmatpush1.msra.mxu0 0.0
    %290 = vmatprep.subr.mxu0 0.0
    %291 = vmatpush1.msra.mxu0 0.0
    %292 = vmatprep.subr.mxu0 0.0
    %293 = vmatpush1.msra.mxu0 0.0
    %294 = vmatprep.subr.mxu0 0.0
    %295 = vmatpush1.msra.mxu0 0.0
    %296 = vmatprep.subr.mxu0 0.0
    %297 = vmatpush1.msra.mxu0 0.0
    %298 = vmatprep.subr.mxu0 0.0
    %299 = vmatpush1.msra.mxu0 0.0
    %300 = vmatprep.subr.mxu0 0.0
    %301 = vmatpush1.msra.mxu0 0.0
    %302 = vmatprep.subr.mxu0 0.0
    %303 = vmatpush1.msra.mxu0 0.0
    %304 = vmatprep.subr.mxu0 0.0
    %305 = vmatpush1.msra.mxu0 0.0
    %306 = vmatprep.subr.mxu0 0.0
    %307 = vmatpush1.msra.mxu0 0.0
    %308 = vmatprep.subr.mxu0 0.0
    %309 = vmatpush1.msra.mxu0 0.0
    %310 = vmatprep.subr.mxu0 0.0
    %311 = vmatpush1.msra.mxu0 0.0
    %312 = vmatprep.subr.mxu0 0.0
    %313 = vmatpush1.msra.mxu0 0.0
    %314 = vmatprep.subr.mxu0 0.0
    %315 = vmatpush1.msra.mxu0 0.0
    %316 = vmatprep.subr.mxu0 0.0
    %317 = vmatpush1.msra.mxu0 0.0
    %318 = vmatprep.subr.mxu0 0.0
    %319 = vmatpush1.msra.mxu0 0.0
    %320 = vmatprep.subr.mxu0 0.0
    %321 = vmatpush1.msra.mxu0 0.0
    %322 = vmatprep.subr.mxu0 0.0
    %323 = vmatpush1.msra.mxu0 0.0
    %324 = vmatprep.subr.mxu0 0.0
    %325 = vmatpush1.msra.mxu0 0.0
    %326 = vmatprep.subr.mxu0 0.0
    %327 = vmatpush1.msra.mxu0 0.0
    %328 = vmatprep.subr.mxu0 0.0
    %329 = vmatpush1.msra.mxu0 0.0
    %330 = vmatprep.subr.mxu0 0.0
    %331 = vmatpush1.msra.mxu0 0.0
    %332 = vmatprep.mubr.f32.mxu0 0.0
    %333 = vmatmul.mubr.f32.gmra.mrb[0].mxu0 %v263
    %v334 = vpop.f32.mrb[0].mxu0
    %v335 = vadd.f32 %v254, %v334
    %v336 = vpop.f32.mrb[0].mxu0
    %v337 = vadd.f32 %v258, %v336
    %338 = vmatprep.mubr.f32.mxu0 0.0
    %339 = vmatmul.mubr.f32.gmra.mrb[0].mxu0 %v266
    %v340 = vpop.f32.mrb[0].mxu0
    %v341 = vadd.f32 %v254, %v340
    %v342 = vpop.f32.mrb[0].mxu0
    %v343 = vadd.f32 %v258, %v342
    %344 = vdwg.mxu0
    %v345 = vld [vmem:[#allocation7] sm:$0xff]
    %v346 = vld [vmem:[#allocation7 + $0x8] sm:$0xff]
    %v347 = vld [vmem:[#allocation7 + $0x10] sm:$0xff]
    %v348 = vld [vmem:[#allocation7 + $0x18] sm:$0xff]
    %v349 = vld [vmem:[#allocation7 + $0x20] sm:$0xff]
    %v350 = vld [vmem:[#allocation7 + $0x28] sm:$0xff]
    %v351 = vld [vmem:[#allocation7 + $0x30] sm:$0xff]
    %v352 = vld [vmem:[#allocation7 + $0x38] sm:$0xff]
    %v353 = vld [vmem:[#allocation7 + $0x40] sm:$0xff]
    %v354 = vld [vmem:[#allocation7 + $0x48] sm:$0xff]
    %v355 = vld [vmem:[#allocation7 + $0x50] sm:$0xff]
    %v356 = vld [vmem:[#allocation7 + $0x58] sm:$0xff]
    %v357 = vld [vmem:[#allocation7 + $0x60] sm:$0xff]
    %v358 = vld [vmem:[#allocation7 + $0x68] sm:$0xff]
    %v359 = vld [vmem:[#allocation7 + $0x70] sm:$0xff]
    %v360 = vld [vmem:[#allocation7 + $0x78] sm:$0xff]
    %v361 = vadd.f32 %v335, 0.0
    %v362 = vadd.f32 %v343, 0.0
    %v363 = vxor.u32 %v361, 2147483648
    %v364 = vmul.f32 %v363, 1.442695
    %v365 = vpow.pop %v364
    %v366 = vadd.f32 %v365, 1.0
    %v367 = vrcp.pop %v366
    %v368 = vmul.f32 1.0, %v367
    %v369 = vtanh.pop %v361
    %v370 = vmul.f32 %v368, 0.0
    %372 = vrot.lane.b32.xlu0 %v369, 32
    %v373 = vpop.permute.xlu0 %372
    %v375 = vmul.f32 %v368, %v373
    %377 = vrot.lane.b32.xlu0 %v375, 32
    %v378 = vpop.permute.xlu0 %377
    %v380 = vadd.f32 %v370, %v378
    %v381 = vtanh.pop %v380
    %383 = vrot.lane.b32.xlu0 %v381, 32
    %v384 = vpop.permute.xlu0 %383
    %v386 = vmul.f32 %v368, %v384
    %v387 = vxor.u32 %v362, 2147483648
    %v388 = vmul.f32 %v387, 1.442695
    %v389 = vpow.pop %v388
    %v390 = vadd.f32 %v389, 1.0
    %v391 = vrcp.pop %v390
    %v392 = vmul.f32 1.0, %v391
    %v393 = vtanh.pop %v362
    %v394 = vmul.f32 %v392, 0.0
    %396 = vrot.lane.b32.xlu0 %v393, 32
    %v397 = vpop.permute.xlu0 %396
    %v399 = vmul.f32 %v392, %v397
    %401 = vrot.lane.b32.xlu0 %v399, 32
    %v402 = vpop.permute.xlu0 %401
    %v404 = vadd.f32 %v394, %v402
    %v405 = vtanh.pop %v404
    %407 = vrot.lane.b32.xlu0 %v405, 32
    %v408 = vpop.permute.xlu0 %407
    %v410 = vmul.f32 %v392, %v408
    %412 = vrot.lane.b32.xlu0 %v386, 64
    %v413 = vpop.permute.xlu0 %412
    %v416 = vrot.slane %v410, 6
    %417 = vrot.lane.b32.xlu0 %v416, 96
    %v418 = vpop.permute.xlu0 %417
    %v420 = vsel %vm261, %v413, %v418
    %vm421 = vcmask 523264
    %v423 = vsel %vm421, %v420, 0
    %425 = vmatprep.subr.mxu0 %v346
    %426 = vmatpush1.msra.mxu0 %v345
    %427 = vmatprep.subr.mxu0 %v348
    %428 = vmatpush1.msra.mxu0 %v347
    %429 = vmatprep.subr.mxu0 %v350
    %430 = vmatpush1.msra.mxu0 %v349
    %431 = vmatprep.subr.mxu0 %v352
    %432 = vmatpush1.msra.mxu0 %v351
    %433 = vmatprep.subr.mxu0 %v354
    %434 = vmatpush1.msra.mxu0 %v353
    %435 = vmatprep.subr.mxu0 %v356
    %436 = vmatpush1.msra.mxu0 %v355
    %437 = vmatprep.subr.mxu0 %v358
    %438 = vmatpush1.msra.mxu0 %v357
    %439 = vmatprep.subr.mxu0 %v360
    %440 = vmatpush1.msra.mxu0 %v359
    %441 = vmatprep.subr.mxu0 0.0
    %442 = vmatpush1.msra.mxu0 0.0
    %443 = vmatprep.subr.mxu0 0.0
    %444 = vmatpush1.msra.mxu0 0.0
    %445 = vmatprep.subr.mxu0 0.0
    %446 = vmatpush1.msra.mxu0 0.0
    %447 = vmatprep.subr.mxu0 0.0
    %448 = vmatpush1.msra.mxu0 0.0
    %449 = vmatprep.subr.mxu0 0.0
    %450 = vmatpush1.msra.mxu0 0.0
    %451 = vmatprep.subr.mxu0 0.0
    %452 = vmatpush1.msra.mxu0 0.0
    %453 = vmatprep.subr.mxu0 0.0
    %454 = vmatpush1.msra.mxu0 0.0
    %455 = vmatprep.subr.mxu0 0.0
    %456 = vmatpush1.msra.mxu0 0.0
    %457 = vmatprep.subr.mxu0 0.0
    %458 = vmatpush1.msra.mxu0 0.0
    %459 = vmatprep.subr.mxu0 0.0
    %460 = vmatpush1.msra.mxu0 0.0
    %461 = vmatprep.subr.mxu0 0.0
    %462 = vmatpush1.msra.mxu0 0.0
    %463 = vmatprep.subr.mxu0 0.0
    %464 = vmatpush1.msra.mxu0 0.0
    %465 = vmatprep.subr.mxu0 0.0
    %466 = vmatpush1.msra.mxu0 0.0
    %467 = vmatprep.subr.mxu0 0.0
    %468 = vmatpush1.msra.mxu0 0.0
    %469 = vmatprep.subr.mxu0 0.0
    %470 = vmatpush1.msra.mxu0 0.0
    %471 = vmatprep.subr.mxu0 0.0
    %472 = vmatpush1.msra.mxu0 0.0
    %473 = vmatprep.subr.mxu0 0.0
    %474 = vmatpush1.msra.mxu0 0.0
    %475 = vmatprep.subr.mxu0 0.0
    %476 = vmatpush1.msra.mxu0 0.0
    %477 = vmatprep.subr.mxu0 0.0
    %478 = vmatpush1.msra.mxu0 0.0
    %479 = vmatprep.subr.mxu0 0.0
    %480 = vmatpush1.msra.mxu0 0.0
    %481 = vmatprep.subr.mxu0 0.0
    %482 = vmatpush1.msra.mxu0 0.0
    %483 = vmatprep.subr.mxu0 0.0
    %484 = vmatpush1.msra.mxu0 0.0
    %485 = vmatprep.subr.mxu0 0.0
    %486 = vmatpush1.msra.mxu0 0.0
    %487 = vmatprep.subr.mxu0 0.0
    %488 = vmatpush1.msra.mxu0 0.0
    %489 = vmatprep.mubr.f32.mxu0 0.0
    %490 = vmatmul.mubr.f32.gmra.mrb[0].mxu0 %v423
    %v491 = vpop.f32.mrb[0].mxu0
    %v492 = vadd.f32 0.0, %v491
    %v493 = vpop.f32.mrb[0].mxu0
    %v494 = vadd.f32 0.0, %v493
    %495 = vdwg.mxu0
    %v497 = vrot.slane %v492, 6
    %v499 = vadd.f32 %v335, %v497
    %v501 = vrot.slane %v494, 4
    %v503 = vadd.f32 %v343, %v501
    %v504 = vxor.u32 %v499, 2147483648
    %v505 = vmul.f32 %v504, 1.442695
    %v506 = vpow.pop %v505
    %v507 = vadd.f32 %v506, 1.0
    %v508 = vrcp.pop %v507
    %v509 = vmul.f32 1.0, %v508
    %v510 = vtanh.pop %v499
    %v512 = vrot.slane %v380, 6
    %v514 = vmul.f32 %v509, %v512
    %516 = vrot.lane.b32.xlu0 %v510, 32
    %v517 = vpop.permute.xlu0 %516
    %v519 = vmul.f32 %v509, %v517
    %521 = vrot.lane.b32.xlu0 %v519, 32
    %v522 = vpop.permute.xlu0 %521
    %v524 = vadd.f32 %v514, %v522
    %v525 = vtanh.pop %v524
    %527 = vrot.lane.b32.xlu0 %v525, 32
    %v528 = vpop.permute.xlu0 %527
    %v530 = vmul.f32 %v509, %v528
    %v531 = vxor.u32 %v503, 2147483648
    %v532 = vmul.f32 %v531, 1.442695
    %v533 = vpow.pop %v532
    %v534 = vadd.f32 %v533, 1.0
    %v535 = vrcp.pop %v534
    %v536 = vmul.f32 1.0, %v535
    %v537 = vtanh.pop %v503
    %v539 = vrot.slane %v404, 2
    %v541 = vmul.f32 %v536, %v539
    %543 = vrot.lane.b32.xlu0 %v537, 32
    %v544 = vpop.permute.xlu0 %543
    %v546 = vmul.f32 %v536, %v544
    %548 = vrot.lane.b32.xlu0 %v546, 32
    %v549 = vpop.permute.xlu0 %548
    %v551 = vadd.f32 %v541, %v549
    %v552 = vtanh.pop %v551
    %554 = vrot.lane.b32.xlu0 %v552, 32
    %v555 = vpop.permute.xlu0 %554
    %v557 = vmul.f32 %v536, %v555
    %559 = vrot.lane.b32.xlu0 %v530, 64
    %v560 = vpop.permute.xlu0 %559
    %v563 = vrot.slane %v557, 2
    %564 = vrot.lane.b32.xlu0 %v563, 96
    %v565 = vpop.permute.xlu0 %564
    %v567 = vsel %vm261, %v560, %v565
    %v569 = vrot.slane %v567, 2
    %v570 = vsel %vm421, %v569, 0
    %572 = vmatprep.subr.mxu0 %v346
    %573 = vmatpush1.msra.mxu0 %v345
    %574 = vmatprep.subr.mxu0 %v348
    %575 = vmatpush1.msra.mxu0 %v347
    %576 = vmatprep.subr.mxu0 %v350
    %577 = vmatpush1.msra.mxu0 %v349
    %578 = vmatprep.subr.mxu0 %v352
    %579 = vmatpush1.msra.mxu0 %v351
    %580 = vmatprep.subr.mxu0 %v354
    %581 = vmatpush1.msra.mxu0 %v353
    %582 = vmatprep.subr.mxu0 %v356
    %583 = vmatpush1.msra.mxu0 %v355
    %584 = vmatprep.subr.mxu0 %v358
    %585 = vmatpush1.msra.mxu0 %v357
    %586 = vmatprep.subr.mxu0 %v360
    %587 = vmatpush1.msra.mxu0 %v359
    %588 = vmatprep.subr.mxu0 0.0
    %589 = vmatpush1.msra.mxu0 0.0
    %590 = vmatprep.subr.mxu0 0.0
    %591 = vmatpush1.msra.mxu0 0.0
    %592 = vmatprep.subr.mxu0 0.0
    %593 = vmatpush1.msra.mxu0 0.0
    %594 = vmatprep.subr.mxu0 0.0
    %595 = vmatpush1.msra.mxu0 0.0
    %596 = vmatprep.subr.mxu0 0.0
    %597 = vmatpush1.msra.mxu0 0.0
    %598 = vmatprep.subr.mxu0 0.0
    %599 = vmatpush1.msra.mxu0 0.0
    %600 = vmatprep.subr.mxu0 0.0
    %601 = vmatpush1.msra.mxu0 0.0
    %602 = vmatprep.subr.mxu0 0.0
    %603 = vmatpush1.msra.mxu0 0.0
    %604 = vmatprep.subr.mxu0 0.0
    %605 = vmatpush1.msra.mxu0 0.0
    %606 = vmatprep.subr.mxu0 0.0
    %607 = vmatpush1.msra.mxu0 0.0
    %608 = vmatprep.subr.mxu0 0.0
    %609 = vmatpush1.msra.mxu0 0.0
    %610 = vmatprep.subr.mxu0 0.0
    %611 = vmatpush1.msra.mxu0 0.0
    %612 = vmatprep.subr.mxu0 0.0
    %613 = vmatpush1.msra.mxu0 0.0
    %614 = vmatprep.subr.mxu0 0.0
    %615 = vmatpush1.msra.mxu0 0.0
    %616 = vmatprep.subr.mxu0 0.0
    %617 = vmatpush1.msra.mxu0 0.0
    %618 = vmatprep.subr.mxu0 0.0
    %619 = vmatpush1.msra.mxu0 0.0
    %620 = vmatprep.subr.mxu0 0.0
    %621 = vmatpush1.msra.mxu0 0.0
    %622 = vmatprep.subr.mxu0 0.0
    %623 = vmatpush1.msra.mxu0 0.0
    %624 = vmatprep.subr.mxu0 0.0
    %625 = vmatpush1.msra.mxu0 0.0
    %626 = vmatprep.subr.mxu0 0.0
    %627 = vmatpush1.msra.mxu0 0.0
    %628 = vmatprep.subr.mxu0 0.0
    %629 = vmatpush1.msra.mxu0 0.0
    %630 = vmatprep.subr.mxu0 0.0
    %631 = vmatpush1.msra.mxu0 0.0
    %632 = vmatprep.subr.mxu0 0.0
    %633 = vmatpush1.msra.mxu0 0.0
    %634 = vmatprep.subr.mxu0 0.0
    %635 = vmatpush1.msra.mxu0 0.0
    %636 = vmatprep.mubr.f32.mxu0 0.0
    %637 = vmatmul.mubr.f32.gmra.mrb[0].mxu0 %v570
    %v638 = vpop.f32.mrb[0].mxu0
    %v639 = vadd.f32 0.0, %v638
    %v640 = vpop.f32.mrb[0].mxu0
    %v641 = vadd.f32 0.0, %v640
    %642 = vdwg.mxu0
    %v644 = vrot.slane %v639, 4
    %v646 = vadd.f32 %v335, %v644
    %v648 = vrot.slane %v641, 6
    %v650 = vadd.f32 %v343, %v648
    %v651 = vxor.u32 %v646, 2147483648
    %v652 = vmul.f32 %v651, 1.442695
    %v653 = vpow.pop %v652
    %v654 = vadd.f32 %v653, 1.0
    %v655 = vrcp.pop %v654
    %v656 = vmul.f32 1.0, %v655
    %v657 = vtanh.pop %v646
    %v659 = vrot.slane %v524, 6
    %v661 = vmul.f32 %v656, %v659
    %663 = vrot.lane.b32.xlu0 %v657, 32
    %v664 = vpop.permute.xlu0 %663
    %v666 = vmul.f32 %v656, %v664
    %668 = vrot.lane.b32.xlu0 %v666, 32
    %v669 = vpop.permute.xlu0 %668
    %v671 = vadd.f32 %v661, %v669
    %v672 = vtanh.pop %v671
    %674 = vrot.lane.b32.xlu0 %v672, 32
    %v675 = vpop.permute.xlu0 %674
    %v677 = vmul.f32 %v656, %v675
    %v678 = vxor.u32 %v650, 2147483648
    %v679 = vmul.f32 %v678, 1.442695
    %v680 = vpow.pop %v679
    %v681 = vadd.f32 %v680, 1.0
    %v682 = vrcp.pop %v681
    %v683 = vmul.f32 1.0, %v682
    %v684 = vtanh.pop %v650
    %v686 = vrot.slane %v551, 2
    %v688 = vmul.f32 %v683, %v686
    %690 = vrot.lane.b32.xlu0 %v684, 32
    %v691 = vpop.permute.xlu0 %690
    %v693 = vmul.f32 %v683, %v691
    %695 = vrot.lane.b32.xlu0 %v693, 32
    %v696 = vpop.permute.xlu0 %695
    %v698 = vadd.f32 %v688, %v696
    %v699 = vtanh.pop %v698
    %701 = vrot.lane.b32.xlu0 %v699, 32
    %v702 = vpop.permute.xlu0 %701
    %v704 = vmul.f32 %v683, %v702
    %706 = vrot.lane.b32.xlu0 %v677, 64
    %v707 = vpop.permute.xlu0 %706
    %v710 = vrot.slane %v704, 6
    %711 = vrot.lane.b32.xlu0 %v710, 96
    %v712 = vpop.permute.xlu0 %711
    %v714 = vsel %vm261, %v707, %v712
    %v716 = vrot.slane %v714, 4
    %v717 = vsel %vm421, %v716, 0
    %719 = vmatprep.subr.mxu0 %v346
    %720 = vmatpush1.msra.mxu0 %v345
    %721 = vmatprep.subr.mxu0 %v348
    %722 = vmatpush1.msra.mxu0 %v347
    %723 = vmatprep.subr.mxu0 %v350
    %724 = vmatpush1.msra.mxu0 %v349
    %725 = vmatprep.subr.mxu0 %v352
    %726 = vmatpush1.msra.mxu0 %v351
    %727 = vmatprep.subr.mxu0 %v354
    %728 = vmatpush1.msra.mxu0 %v353
    %729 = vmatprep.subr.mxu0 %v356
    %730 = vmatpush1.msra.mxu0 %v355
    %731 = vmatprep.subr.mxu0 %v358
    %732 = vmatpush1.msra.mxu0 %v357
    %733 = vmatprep.subr.mxu0 %v360
    %734 = vmatpush1.msra.mxu0 %v359
    %735 = vmatprep.subr.mxu0 0.0
    %736 = vmatpush1.msra.mxu0 0.0
    %737 = vmatprep.subr.mxu0 0.0
    %738 = vmatpush1.msra.mxu0 0.0
    %739 = vmatprep.subr.mxu0 0.0
    %740 = vmatpush1.msra.mxu0 0.0
    %741 = vmatprep.subr.mxu0 0.0
    %742 = vmatpush1.msra.mxu0 0.0
    %743 = vmatprep.subr.mxu0 0.0
    %744 = vmatpush1.msra.mxu0 0.0
    %745 = vmatprep.subr.mxu0 0.0
    %746 = vmatpush1.msra.mxu0 0.0
    %747 = vmatprep.subr.mxu0 0.0
    %748 = vmatpush1.msra.mxu0 0.0
    %749 = vmatprep.subr.mxu0 0.0
    %750 = vmatpush1.msra.mxu0 0.0
    %751 = vmatprep.subr.mxu0 0.0
    %752 = vmatpush1.msra.mxu0 0.0
    %753 = vmatprep.subr.mxu0 0.0
    %754 = vmatpush1.msra.mxu0 0.0
    %755 = vmatprep.subr.mxu0 0.0
    %756 = vmatpush1.msra.mxu0 0.0
    %757 = vmatprep.subr.mxu0 0.0
    %758 = vmatpush1.msra.mxu0 0.0
    %759 = vmatprep.subr.mxu0 0.0
    %760 = vmatpush1.msra.mxu0 0.0
    %761 = vmatprep.subr.mxu0 0.0
    %762 = vmatpush1.msra.mxu0 0.0
    %763 = vmatprep.subr.mxu0 0.0
    %764 = vmatpush1.msra.mxu0 0.0
    %765 = vmatprep.subr.mxu0 0.0
    %766 = vmatpush1.msra.mxu0 0.0
    %767 = vmatprep.subr.mxu0 0.0
    %768 = vmatpush1.msra.mxu0 0.0
    %769 = vmatprep.subr.mxu0 0.0
    %770 = vmatpush1.msra.mxu0 0.0
    %771 = vmatprep.subr.mxu0 0.0
    %772 = vmatpush1.msra.mxu0 0.0
    %773 = vmatprep.subr.mxu0 0.0
    %774 = vmatpush1.msra.mxu0 0.0
    %775 = vmatprep.subr.mxu0 0.0
    %776 = vmatpush1.msra.mxu0 0.0
    %777 = vmatprep.subr.mxu0 0.0
    %778 = vmatpush1.msra.mxu0 0.0
    %779 = vmatprep.subr.mxu0 0.0
    %780 = vmatpush1.msra.mxu0 0.0
    %781 = vmatprep.subr.mxu0 0.0
    %782 = vmatpush1.msra.mxu0 0.0
    %783 = vmatprep.mubr.f32.mxu0 0.0
    %784 = vmatmul.mubr.f32.gmra.mrb[0].mxu0 %v717
    %v785 = vpop.f32.mrb[0].mxu0
    %v786 = vadd.f32 0.0, %v785
    %v787 = vpop.f32.mrb[0].mxu0
    %v788 = vadd.f32 0.0, %v787
    %789 = vdwg.mxu0
    %v791 = vrot.slane %v786, 2
    %v793 = vadd.f32 %v335, %v791
    %v794 = vadd.f32 %v343, %v788
    %v795 = vxor.u32 %v793, 2147483648
    %v796 = vmul.f32 %v795, 1.442695
    %v797 = vpow.pop %v796
    %v798 = vadd.f32 %v797, 1.0
    %v799 = vrcp.pop %v798
    %v800 = vmul.f32 1.0, %v799
    %v801 = vtanh.pop %v793
    %v803 = vrot.slane %v671, 6
    %v805 = vmul.f32 %v800, %v803
    %807 = vrot.lane.b32.xlu0 %v801, 32
    %v808 = vpop.permute.xlu0 %807
    %v810 = vmul.f32 %v800, %v808
    %812 = vrot.lane.b32.xlu0 %v810, 32
    %v813 = vpop.permute.xlu0 %812
    %v815 = vadd.f32 %v805, %v813
    %v816 = vtanh.pop %v815
    %818 = vrot.lane.b32.xlu0 %v816, 32
    %v819 = vpop.permute.xlu0 %818
    %v821 = vmul.f32 %v800, %v819
    %v822 = vxor.u32 %v794, 2147483648
    %v823 = vmul.f32 %v822, 1.442695
    %v824 = vpow.pop %v823
    %v825 = vadd.f32 %v824, 1.0
    %v826 = vrcp.pop %v825
    %v827 = vmul.f32 1.0, %v826
    %v828 = vtanh.pop %v794
    %v830 = vrot.slane %v698, 2
    %v832 = vmul.f32 %v827, %v830
    %834 = vrot.lane.b32.xlu0 %v828, 32
    %v835 = vpop.permute.xlu0 %834
    %v837 = vmul.f32 %v827, %v835
    %839 = vrot.lane.b32.xlu0 %v837, 32
    %v840 = vpop.permute.xlu0 %839
    %v842 = vadd.f32 %v832, %v840
    %v843 = vtanh.pop %v842
    %845 = vrot.lane.b32.xlu0 %v843, 32
    %v846 = vpop.permute.xlu0 %845
    %v848 = vmul.f32 %v827, %v846
    %850 = vrot.lane.b32.xlu0 %v821, 64
    %v851 = vpop.permute.xlu0 %850
    %v854 = vrot.slane %v848, 2
    %855 = vrot.lane.b32.xlu0 %v854, 96
    %v856 = vpop.permute.xlu0 %855
    %v858 = vsel %vm261, %v851, %v856
    %v860 = vrot.slane %v858, 6
    %v861 = vsel %vm421, %v860, 0
    %863 = vmatprep.subr.mxu0 %v346
    %864 = vmatpush1.msra.mxu0 %v345
    %865 = vmatprep.subr.mxu0 %v348
    %866 = vmatpush1.msra.mxu0 %v347
    %867 = vmatprep.subr.mxu0 %v350
    %868 = vmatpush1.msra.mxu0 %v349
    %869 = vmatprep.subr.mxu0 %v352
    %870 = vmatpush1.msra.mxu0 %v351
    %871 = vmatprep.subr.mxu0 %v354
    %872 = vmatpush1.msra.mxu0 %v353
    %873 = vmatprep.subr.mxu0 %v356
    %874 = vmatpush1.msra.mxu0 %v355
    %875 = vmatprep.subr.mxu0 %v358
    %876 = vmatpush1.msra.mxu0 %v357
    %877 = vmatprep.subr.mxu0 %v360
    %878 = vmatpush1.msra.mxu0 %v359
    %879 = vmatprep.subr.mxu0 0.0
    %880 = vmatpush1.msra.mxu0 0.0
    %881 = vmatprep.subr.mxu0 0.0
    %882 = vmatpush1.msra.mxu0 0.0
    %883 = vmatprep.subr.mxu0 0.0
    %884 = vmatpush1.msra.mxu0 0.0
    %885 = vmatprep.subr.mxu0 0.0
    %886 = vmatpush1.msra.mxu0 0.0
    %887 = vmatprep.subr.mxu0 0.0
    %888 = vmatpush1.msra.mxu0 0.0
    %889 = vmatprep.subr.mxu0 0.0
    %890 = vmatpush1.msra.mxu0 0.0
    %891 = vmatprep.subr.mxu0 0.0
    %892 = vmatpush1.msra.mxu0 0.0
    %893 = vmatprep.subr.mxu0 0.0
    %894 = vmatpush1.msra.mxu0 0.0
    %895 = vmatprep.subr.mxu0 0.0
    %896 = vmatpush1.msra.mxu0 0.0
    %897 = vmatprep.subr.mxu0 0.0
    %898 = vmatpush1.msra.mxu0 0.0
    %899 = vmatprep.subr.mxu0 0.0
    %900 = vmatpush1.msra.mxu0 0.0
    %901 = vmatprep.subr.mxu0 0.0
    %902 = vmatpush1.msra.mxu0 0.0
    %903 = vmatprep.subr.mxu0 0.0
    %904 = vmatpush1.msra.mxu0 0.0
    %905 = vmatprep.subr.mxu0 0.0
    %906 = vmatpush1.msra.mxu0 0.0
    %907 = vmatprep.subr.mxu0 0.0
    %908 = vmatpush1.msra.mxu0 0.0
    %909 = vmatprep.subr.mxu0 0.0
    %910 = vmatpush1.msra.mxu0 0.0
    %911 = vmatprep.subr.mxu0 0.0
    %912 = vmatpush1.msra.mxu0 0.0
    %913 = vmatprep.subr.mxu0 0.0
    %914 = vmatpush1.msra.mxu0 0.0
    %915 = vmatprep.subr.mxu0 0.0
    %916 = vmatpush1.msra.mxu0 0.0
    %917 = vmatprep.subr.mxu0 0.0
    %918 = vmatpush1.msra.mxu0 0.0
    %919 = vmatprep.subr.mxu0 0.0
    %920 = vmatpush1.msra.mxu0 0.0
    %921 = vmatprep.subr.mxu0 0.0
    %922 = vmatpush1.msra.mxu0 0.0
    %923 = vmatprep.subr.mxu0 0.0
    %924 = vmatpush1.msra.mxu0 0.0
    %925 = vmatprep.subr.mxu0 0.0
    %926 = vmatpush1.msra.mxu0 0.0
    %927 = vmatprep.mubr.f32.mxu0 0.0
    %928 = vmatmul.mubr.f32.gmra.mrb[0].mxu0 %v861
    %v929 = vpop.f32.mrb[0].mxu0
    %v930 = vadd.f32 0.0, %v929
    %v931 = vpop.f32.mrb[0].mxu0
    %v932 = vadd.f32 0.0, %v931
    %933 = vdwg.mxu0
    %v934 = vadd.f32 %v341, %v930
    %v936 = vrot.slane %v932, 2
    %v938 = vadd.f32 %v337, %v936
    %v939 = vxor.u32 %v934, 2147483648
    %v940 = vmul.f32 %v939, 1.442695
    %v941 = vpow.pop %v940
    %v942 = vadd.f32 %v941, 1.0
    %v943 = vrcp.pop %v942
    %v944 = vmul.f32 1.0, %v943
    %v945 = vtanh.pop %v934
    %v947 = vrot.slane %v815, 6
    %v949 = vmul.f32 %v944, %v947
    %951 = vrot.lane.b32.xlu0 %v945, 32
    %v952 = vpop.permute.xlu0 %951
    %v954 = vmul.f32 %v944, %v952
    %956 = vrot.lane.b32.xlu0 %v954, 32
    %v957 = vpop.permute.xlu0 %956
    %v959 = vadd.f32 %v949, %v957
    %v960 = vtanh.pop %v959
    %962 = vrot.lane.b32.xlu0 %v960, 32
    %v963 = vpop.permute.xlu0 %962
    %v965 = vmul.f32 %v944, %v963
    %v966 = vxor.u32 %v938, 2147483648
    %v967 = vmul.f32 %v966, 1.442695
    %v968 = vpow.pop %v967
    %v969 = vadd.f32 %v968, 1.0
    %v970 = vrcp.pop %v969
    %v971 = vmul.f32 1.0, %v970
    %v972 = vtanh.pop %v938
    %v974 = vrot.slane %v842, 2
    %v976 = vmul.f32 %v971, %v974
    %978 = vrot.lane.b32.xlu0 %v972, 32
    %v979 = vpop.permute.xlu0 %978
    %v981 = vmul.f32 %v971, %v979
    %983 = vrot.lane.b32.xlu0 %v981, 32
    %v984 = vpop.permute.xlu0 %983
    %v986 = vadd.f32 %v976, %v984
    %v987 = vtanh.pop %v986
    %989 = vrot.lane.b32.xlu0 %v987, 32
    %v990 = vpop.permute.xlu0 %989
    %v992 = vmul.f32 %v971, %v990
    %994 = vrot.lane.b32.xlu0 %v965, 64
    %v995 = vpop.permute.xlu0 %994
    %v998 = vrot.slane %v992, 6
    %999 = vrot.lane.b32.xlu0 %v998, 96
    %v1000 = vpop.permute.xlu0 %999
    %v1002 = vsel %vm261, %v995, %v1000
    %v1004 = vsel %vm421, %v1002, 0
    %1006 = vmatprep.subr.mxu0 %v346
    %1007 = vmatpush1.msra.mxu0 %v345
    %1008 = vmatprep.subr.mxu0 %v348
    %1009 = vmatpush1.msra.mxu0 %v347
    %1010 = vmatprep.subr.mxu0 %v350
    %1011 = vmatpush1.msra.mxu0 %v349
    %1012 = vmatprep.subr.mxu0 %v352
    %1013 = vmatpush1.msra.mxu0 %v351
    %1014 = vmatprep.subr.mxu0 %v354
    %1015 = vmatpush1.msra.mxu0 %v353
    %1016 = vmatprep.subr.mxu0 %v356
    %1017 = vmatpush1.msra.mxu0 %v355
    %1018 = vmatprep.subr.mxu0 %v358
    %1019 = vmatpush1.msra.mxu0 %v357
    %1020 = vmatprep.subr.mxu0 %v360
    %1021 = vmatpush1.msra.mxu0 %v359
    %1022 = vmatprep.subr.mxu0 0.0
    %1023 = vmatpush1.msra.mxu0 0.0
    %1024 = vmatprep.subr.mxu0 0.0
    %1025 = vmatpush1.msra.mxu0 0.0
    %1026 = vmatprep.subr.mxu0 0.0
    %1027 = vmatpush1.msra.mxu0 0.0
    %1028 = vmatprep.subr.mxu0 0.0
    %1029 = vmatpush1.msra.mxu0 0.0
    %1030 = vmatprep.subr.mxu0 0.0
    %1031 = vmatpush1.msra.mxu0 0.0
    %1032 = vmatprep.subr.mxu0 0.0
    %1033 = vmatpush1.msra.mxu0 0.0
    %1034 = vmatprep.subr.mxu0 0.0
    %1035 = vmatpush1.msra.mxu0 0.0
    %1036 = vmatprep.subr.mxu0 0.0
    %1037 = vmatpush1.msra.mxu0 0.0
    %1038 = vmatprep.subr.mxu0 0.0
    %1039 = vmatpush1.msra.mxu0 0.0
    %1040 = vmatprep.subr.mxu0 0.0
    %1041 = vmatpush1.msra.mxu0 0.0
    %1042 = vmatprep.subr.mxu0 0.0
    %1043 = vmatpush1.msra.mxu0 0.0
    %1044 = vmatprep.subr.mxu0 0.0
    %1045 = vmatpush1.msra.mxu0 0.0
    %1046 = vmatprep.subr.mxu0 0.0
    %1047 = vmatpush1.msra.mxu0 0.0
    %1048 = vmatprep.subr.mxu0 0.0
    %1049 = vmatpush1.msra.mxu0 0.0
    %1050 = vmatprep.subr.mxu0 0.0
    %1051 = vmatpush1.msra.mxu0 0.0
    %1052 = vmatprep.subr.mxu0 0.0
    %1053 = vmatpush1.msra.mxu0 0.0
    %1054 = vmatprep.subr.mxu0 0.0
    %1055 = vmatpush1.msra.mxu0 0.0
    %1056 = vmatprep.subr.mxu0 0.0
    %1057 = vmatpush1.msra.mxu0 0.0
    %1058 = vmatprep.subr.mxu0 0.0
    %1059 = vmatpush1.msra.mxu0 0.0
    %1060 = vmatprep.subr.mxu0 0.0
    %1061 = vmatpush1.msra.mxu0 0.0
    %1062 = vmatprep.subr.mxu0 0.0
    %1063 = vmatpush1.msra.mxu0 0.0
    %1064 = vmatprep.subr.mxu0 0.0
    %1065 = vmatpush1.msra.mxu0 0.0
    %1066 = vmatprep.subr.mxu0 0.0
    %1067 = vmatpush1.msra.mxu0 0.0
    %1068 = vmatprep.subr.mxu0 0.0
    %1069 = vmatpush1.msra.mxu0 0.0
    %1070 = vmatprep.mubr.f32.mxu0 0.0
    %1071 = vmatmul.mubr.f32.gmra.mrb[0].mxu0 %v1004
    %v1072 = vpop.f32.mrb[0].mxu0
    %v1073 = vadd.f32 0.0, %v1072
    %v1074 = vpop.f32.mrb[0].mxu0
    %v1075 = vadd.f32 0.0, %v1074
    %1076 = vdwg.mxu0
    %v1078 = vrot.slane %v1073, 6
    %v1080 = vadd.f32 %v341, %v1078
    %v1082 = vrot.slane %v1075, 4
    %v1084 = vadd.f32 %v337, %v1082
    %v1085 = vxor.u32 %v1080, 2147483648
    %v1086 = vmul.f32 %v1085, 1.442695
    %v1087 = vpow.pop %v1086
    %v1088 = vadd.f32 %v1087, 1.0
    %v1089 = vrcp.pop %v1088
    %v1090 = vmul.f32 1.0, %v1089
    %v1091 = vtanh.pop %v1080
    %v1093 = vrot.slane %v959, 6
    %v1095 = vmul.f32 %v1090, %v1093
    %1097 = vrot.lane.b32.xlu0 %v1091, 32
    %v1098 = vpop.permute.xlu0 %1097
    %v1100 = vmul.f32 %v1090, %v1098
    %1102 = vrot.lane.b32.xlu0 %v1100, 32
    %v1103 = vpop.permute.xlu0 %1102
    %v1105 = vadd.f32 %v1095, %v1103
    %v1106 = vtanh.pop %v1105
    %1108 = vrot.lane.b32.xlu0 %v1106, 32
    %v1109 = vpop.permute.xlu0 %1108
    %v1111 = vmul.f32 %v1090, %v1109
    %v1112 = vxor.u32 %v1084, 2147483648
    %v1113 = vmul.f32 %v1112, 1.442695
    %v1114 = vpow.pop %v1113
    %v1115 = vadd.f32 %v1114, 1.0
    %v1116 = vrcp.pop %v1115
    %v1117 = vmul.f32 1.0, %v1116
    %v1118 = vtanh.pop %v1084
    %v1120 = vrot.slane %v986, 2
    %v1122 = vmul.f32 %v1117, %v1120
    %1124 = vrot.lane.b32.xlu0 %v1118, 32
    %v1125 = vpop.permute.xlu0 %1124
    %v1127 = vmul.f32 %v1117, %v1125
    %1129 = vrot.lane.b32.xlu0 %v1127, 32
    %v1130 = vpop.permute.xlu0 %1129
    %v1132 = vadd.f32 %v1122, %v1130
    %v1133 = vtanh.pop %v1132
    %1135 = vrot.lane.b32.xlu0 %v1133, 32
    %v1136 = vpop.permute.xlu0 %1135
    %v1138 = vmul.f32 %v1117, %v1136
    %1140 = vrot.lane.b32.xlu0 %v1111, 64
    %v1141 = vpop.permute.xlu0 %1140
    %v1144 = vrot.slane %v1138, 2
    %1145 = vrot.lane.b32.xlu0 %v1144, 96
    %v1146 = vpop.permute.xlu0 %1145
    %v1148 = vsel %vm261, %v1141, %v1146
    %v1150 = vrot.slane %v1148, 2
    %v1151 = vsel %vm421, %v1150, 0
    %1153 = vmatprep.subr.mxu0 %v346
    %1154 = vmatpush1.msra.mxu0 %v345
    %1155 = vmatprep.subr.mxu0 %v348
    %1156 = vmatpush1.msra.mxu0 %v347
    %1157 = vmatprep.subr.mxu0 %v350
    %1158 = vmatpush1.msra.mxu0 %v349
    %1159 = vmatprep.subr.mxu0 %v352
    %1160 = vmatpush1.msra.mxu0 %v351
    %1161 = vmatprep.subr.mxu0 %v354
    %1162 = vmatpush1.msra.mxu0 %v353
    %1163 = vmatprep.subr.mxu0 %v356
    %1164 = vmatpush1.msra.mxu0 %v355
    %1165 = vmatprep.subr.mxu0 %v358
    %1166 = vmatpush1.msra.mxu0 %v357
    %1167 = vmatprep.subr.mxu0 %v360
    %1168 = vmatpush1.msra.mxu0 %v359
    %1169 = vmatprep.subr.mxu0 0.0
    %1170 = vmatpush1.msra.mxu0 0.0
    %1171 = vmatprep.subr.mxu0 0.0
    %1172 = vmatpush1.msra.mxu0 0.0
    %1173 = vmatprep.subr.mxu0 0.0
    %1174 = vmatpush1.msra.mxu0 0.0
    %1175 = vmatprep.subr.mxu0 0.0
    %1176 = vmatpush1.msra.mxu0 0.0
    %1177 = vmatprep.subr.mxu0 0.0
    %1178 = vmatpush1.msra.mxu0 0.0
    %1179 = vmatprep.subr.mxu0 0.0
    %1180 = vmatpush1.msra.mxu0 0.0
    %1181 = vmatprep.subr.mxu0 0.0
    %1182 = vmatpush1.msra.mxu0 0.0
    %1183 = vmatprep.subr.mxu0 0.0
    %1184 = vmatpush1.msra.mxu0 0.0
    %1185 = vmatprep.subr.mxu0 0.0
    %1186 = vmatpush1.msra.mxu0 0.0
    %1187 = vmatprep.subr.mxu0 0.0
    %1188 = vmatpush1.msra.mxu0 0.0
    %1189 = vmatprep.subr.mxu0 0.0
    %1190 = vmatpush1.msra.mxu0 0.0
    %1191 = vmatprep.subr.mxu0 0.0
    %1192 = vmatpush1.msra.mxu0 0.0
    %1193 = vmatprep.subr.mxu0 0.0
    %1194 = vmatpush1.msra.mxu0 0.0
    %1195 = vmatprep.subr.mxu0 0.0
    %1196 = vmatpush1.msra.mxu0 0.0
    %1197 = vmatprep.subr.mxu0 0.0
    %1198 = vmatpush1.msra.mxu0 0.0
    %1199 = vmatprep.subr.mxu0 0.0
    %1200 = vmatpush1.msra.mxu0 0.0
    %1201 = vmatprep.subr.mxu0 0.0
    %1202 = vmatpush1.msra.mxu0 0.0
    %1203 = vmatprep.subr.mxu0 0.0
    %1204 = vmatpush1.msra.mxu0 0.0
    %1205 = vmatprep.subr.mxu0 0.0
    %1206 = vmatpush1.msra.mxu0 0.0
    %1207 = vmatprep.subr.mxu0 0.0
    %1208 = vmatpush1.msra.mxu0 0.0
    %1209 = vmatprep.subr.mxu0 0.0
    %1210 = vmatpush1.msra.mxu0 0.0
    %1211 = vmatprep.subr.mxu0 0.0
    %1212 = vmatpush1.msra.mxu0 0.0
    %1213 = vmatprep.subr.mxu0 0.0
    %1214 = vmatpush1.msra.mxu0 0.0
    %1215 = vmatprep.subr.mxu0 0.0
    %1216 = vmatpush1.msra.mxu0 0.0
    %1217 = vmatprep.mubr.f32.mxu0 0.0
    %1218 = vmatmul.mubr.f32.gmra.mrb[0].mxu0 %v1151
    %v1219 = vpop.f32.mrb[0].mxu0
    %v1220 = vadd.f32 0.0, %v1219
    %v1221 = vpop.f32.mrb[0].mxu0
    %v1222 = vadd.f32 0.0, %v1221
    %1223 = vdwg.mxu0
    %v1225 = vrot.slane %v1220, 4
    %v1227 = vadd.f32 %v341, %v1225
    %v1229 = vrot.slane %v1222, 6
    %v1231 = vadd.f32 %v337, %v1229
    %v1232 = vxor.u32 %v1227, 2147483648
    %v1233 = vmul.f32 %v1232, 1.442695
    %v1234 = vpow.pop %v1233
    %v1235 = vadd.f32 %v1234, 1.0
    %v1236 = vrcp.pop %v1235
    %v1237 = vmul.f32 1.0, %v1236
    %v1238 = vtanh.pop %v1227
    %v1240 = vrot.slane %v1105, 6
    %v1242 = vmul.f32 %v1237, %v1240
    %1244 = vrot.lane.b32.xlu0 %v1238, 32
    %v1245 = vpop.permute.xlu0 %1244
    %v1247 = vmul.f32 %v1237, %v1245
    %1249 = vrot.lane.b32.xlu0 %v1247, 32
    %v1250 = vpop.permute.xlu0 %1249
    %v1252 = vadd.f32 %v1242, %v1250
    %v1253 = vtanh.pop %v1252
    %1255 = vrot.lane.b32.xlu0 %v1253, 32
    %v1256 = vpop.permute.xlu0 %1255
    %v1258 = vmul.f32 %v1237, %v1256
    %v1259 = vxor.u32 %v1231, 2147483648
    %v1260 = vmul.f32 %v1259, 1.442695
    %v1261 = vpow.pop %v1260
    %v1262 = vadd.f32 %v1261, 1.0
    %v1263 = vrcp.pop %v1262
    %v1264 = vmul.f32 1.0, %v1263
    %v1265 = vtanh.pop %v1231
    %v1267 = vrot.slane %v1132, 2
    %v1269 = vmul.f32 %v1264, %v1267
    %1271 = vrot.lane.b32.xlu0 %v1265, 32
    %v1272 = vpop.permute.xlu0 %1271
    %v1274 = vmul.f32 %v1264, %v1272
    %1276 = vrot.lane.b32.xlu0 %v1274, 32
    %v1277 = vpop.permute.xlu0 %1276
    %v1279 = vadd.f32 %v1269, %v1277
    %v1280 = vtanh.pop %v1279
    %1282 = vrot.lane.b32.xlu0 %v1280, 32
    %v1283 = vpop.permute.xlu0 %1282
    %v1285 = vmul.f32 %v1264, %v1283
    %1287 = vrot.lane.b32.xlu0 %v1258, 64
    %v1288 = vpop.permute.xlu0 %1287
    %v1291 = vrot.slane %v1285, 6
    %1292 = vrot.lane.b32.xlu0 %v1291, 96
    %v1293 = vpop.permute.xlu0 %1292
    %v1295 = vsel %vm261, %v1288, %v1293
    %v1297 = vrot.slane %v1295, 4
    %v1298 = vsel %vm421, %v1297, 0
    %1300 = vmatprep.subr.mxu0 %v346
    %1301 = vmatpush1.msra.mxu0 %v345
    %1302 = vmatprep.subr.mxu0 %v348
    %1303 = vmatpush1.msra.mxu0 %v347
    %1304 = vmatprep.subr.mxu0 %v350
    %1305 = vmatpush1.msra.mxu0 %v349
    %1306 = vmatprep.subr.mxu0 %v352
    %1307 = vmatpush1.msra.mxu0 %v351
    %1308 = vmatprep.subr.mxu0 %v354
    %1309 = vmatpush1.msra.mxu0 %v353
    %1310 = vmatprep.subr.mxu0 %v356
    %1311 = vmatpush1.msra.mxu0 %v355
    %1312 = vmatprep.subr.mxu0 %v358
    %1313 = vmatpush1.msra.mxu0 %v357
    %1314 = vmatprep.subr.mxu0 %v360
    %1315 = vmatpush1.msra.mxu0 %v359
    %1316 = vmatprep.subr.mxu0 0.0
    %1317 = vmatpush1.msra.mxu0 0.0
    %1318 = vmatprep.subr.mxu0 0.0
    %1319 = vmatpush1.msra.mxu0 0.0
    %1320 = vmatprep.subr.mxu0 0.0
    %1321 = vmatpush1.msra.mxu0 0.0
    %1322 = vmatprep.subr.mxu0 0.0
    %1323 = vmatpush1.msra.mxu0 0.0
    %1324 = vmatprep.subr.mxu0 0.0
    %1325 = vmatpush1.msra.mxu0 0.0
    %1326 = vmatprep.subr.mxu0 0.0
    %1327 = vmatpush1.msra.mxu0 0.0
    %1328 = vmatprep.subr.mxu0 0.0
    %1329 = vmatpush1.msra.mxu0 0.0
    %1330 = vmatprep.subr.mxu0 0.0
    %1331 = vmatpush1.msra.mxu0 0.0
    %1332 = vmatprep.subr.mxu0 0.0
    %1333 = vmatpush1.msra.mxu0 0.0
    %1334 = vmatprep.subr.mxu0 0.0
    %1335 = vmatpush1.msra.mxu0 0.0
    %1336 = vmatprep.subr.mxu0 0.0
    %1337 = vmatpush1.msra.mxu0 0.0
    %1338 = vmatprep.subr.mxu0 0.0
    %1339 = vmatpush1.msra.mxu0 0.0
    %1340 = vmatprep.subr.mxu0 0.0
    %1341 = vmatpush1.msra.mxu0 0.0
    %1342 = vmatprep.subr.mxu0 0.0
    %1343 = vmatpush1.msra.mxu0 0.0
    %1344 = vmatprep.subr.mxu0 0.0
    %1345 = vmatpush1.msra.mxu0 0.0
    %1346 = vmatprep.subr.mxu0 0.0
    %1347 = vmatpush1.msra.mxu0 0.0
    %1348 = vmatprep.subr.mxu0 0.0
    %1349 = vmatpush1.msra.mxu0 0.0
    %1350 = vmatprep.subr.mxu0 0.0
    %1351 = vmatpush1.msra.mxu0 0.0
    %1352 = vmatprep.subr.mxu0 0.0
    %1353 = vmatpush1.msra.mxu0 0.0
    %1354 = vmatprep.subr.mxu0 0.0
    %1355 = vmatpush1.msra.mxu0 0.0
    %1356 = vmatprep.subr.mxu0 0.0
    %1357 = vmatpush1.msra.mxu0 0.0
    %1358 = vmatprep.subr.mxu0 0.0
    %1359 = vmatpush1.msra.mxu0 0.0
    %1360 = vmatprep.subr.mxu0 0.0
    %1361 = vmatpush1.msra.mxu0 0.0
    %1362 = vmatprep.subr.mxu0 0.0
    %1363 = vmatpush1.msra.mxu0 0.0
    %1364 = vmatprep.mubr.f32.mxu0 0.0
    %1365 = vmatmul.mubr.f32.gmra.mrb[0].mxu0 %v1298
    %v1366 = vpop.f32.mrb[0].mxu0
    %v1367 = vadd.f32 0.0, %v1366
    %v1368 = vpop.f32.mrb[0].mxu0
    %v1369 = vadd.f32 0.0, %v1368
    %1370 = vdwg.mxu0
    %v1372 = vrot.slane %v1367, 2
    %v1374 = vadd.f32 %v341, %v1372
    %v1375 = vadd.f32 %v337, %v1369
    %v1376 = vxor.u32 %v1374, 2147483648
    %v1377 = vmul.f32 %v1376, 1.442695
    %v1378 = vpow.pop %v1377
    %v1379 = vadd.f32 %v1378, 1.0
    %v1380 = vrcp.pop %v1379
    %v1381 = vmul.f32 1.0, %v1380
    %v1382 = vtanh.pop %v1374
    %v1384 = vrot.slane %v1252, 6
    %v1386 = vmul.f32 %v1381, %v1384
    %1388 = vrot.lane.b32.xlu0 %v1382, 32
    %v1389 = vpop.permute.xlu0 %1388
    %v1391 = vmul.f32 %v1381, %v1389
    %1393 = vrot.lane.b32.xlu0 %v1391, 32
    %v1394 = vpop.permute.xlu0 %1393
    %v1396 = vadd.f32 %v1386, %v1394
    %v1397 = vtanh.pop %v1396
    %1399 = vrot.lane.b32.xlu0 %v1397, 32
    %v1400 = vpop.permute.xlu0 %1399
    %v1402 = vmul.f32 %v1381, %v1400
    %v1403 = vxor.u32 %v1375, 2147483648
    %v1404 = vmul.f32 %v1403, 1.442695
    %v1405 = vpow.pop %v1404
    %v1406 = vadd.f32 %v1405, 1.0
    %v1407 = vrcp.pop %v1406
    %v1408 = vmul.f32 1.0, %v1407
    %v1409 = vtanh.pop %v1375
    %v1411 = vrot.slane %v1279, 2
    %v1413 = vmul.f32 %v1408, %v1411
    %1415 = vrot.lane.b32.xlu0 %v1409, 32
    %v1416 = vpop.permute.xlu0 %1415
    %v1418 = vmul.f32 %v1408, %v1416
    %1420 = vrot.lane.b32.xlu0 %v1418, 32
    %v1421 = vpop.permute.xlu0 %1420
    %v1423 = vadd.f32 %v1413, %v1421
    %v1424 = vtanh.pop %v1423
    %1426 = vrot.lane.b32.xlu0 %v1424, 32
    %v1427 = vpop.permute.xlu0 %1426
    %v1429 = vmul.f32 %v1408, %v1427
    %1431 = vrot.lane.b32.xlu0 %v1429, 96
    %v1432 = vpop.permute.xlu0 %1431
    %v1434 = vsel %vm261, %v413, %v1432
    %1435 = vrot.lane.b32.xlu0 %v1285, 96
    %v1436 = vpop.permute.xlu0 %1435
    %v1438 = vsel %vm261, %v560, %v1436
    %1439 = vrot.lane.b32.xlu0 %v1138, 96
    %v1440 = vpop.permute.xlu0 %1439
    %v1442 = vsel %vm261, %v707, %v1440
    %1443 = vrot.lane.b32.xlu0 %v992, 96
    %v1444 = vpop.permute.xlu0 %1443
    %v1446 = vsel %vm261, %v851, %v1444
    %1447 = vrot.lane.b32.xlu0 %v848, 96
    %v1448 = vpop.permute.xlu0 %1447
    %v1450 = vsel %vm261, %v995, %v1448
    %1451 = vrot.lane.b32.xlu0 %v704, 96
    %v1452 = vpop.permute.xlu0 %1451
    %v1454 = vsel %vm261, %v1141, %v1452
    %1455 = vrot.lane.b32.xlu0 %v557, 96
    %v1456 = vpop.permute.xlu0 %1455
    %v1458 = vsel %vm261, %v1288, %v1456
    %1460 = vrot.lane.b32.xlu0 %v1402, 64
    %v1461 = vpop.permute.xlu0 %1460
    %1463 = vrot.lane.b32.xlu0 %v410, 96
    %v1464 = vpop.permute.xlu0 %1463
    %v1466 = vsel %vm261, %v1461, %v1464
    %vm1467 = vcmask 1041408
    %v1468 = vsel %vm1467, %v1434, %v1438
    %vm1469 = vcmask 1043456
    %v1470 = vsel %vm1469, %v1468, %v1442
    %vm1471 = vcmask 1045504
    %v1472 = vsel %vm1471, %v1470, %v1446
    %v1473 = vsel %vm1467, %v1450, %v1454
    %v1474 = vsel %vm1469, %v1473, %v1458
    %v1475 = vsel %vm1471, %v1474, %v1466
    %v1476 = vld [vmem:[%s6] sm:$0xff]
    %v1477 = vld [vmem:[%s6 + $0x8] sm:$0xff]
    %v1478 = vld [vmem:[%s6 + $0x10] sm:$0xff]
    %v1479 = vld [vmem:[%s6 + $0x18] sm:$0xff]
    %v1480 = vld [vmem:[%s6 + $0x20] sm:$0xff]
    %v1481 = vld [vmem:[%s6 + $0x28] sm:$0xff]
    %v1482 = vld [vmem:[%s6 + $0x30] sm:$0xff]
    %v1483 = vld [vmem:[%s6 + $0x38] sm:$0xff]
    %v1484 = vld [vmem:[#allocation8] sm:$0x1]
    %v1486 = vlaneseq
    %v1487 = vshrl.u32 %v1486, 7
    %v1488 = vsub.s32 0, %v1487
    %v1489 = vrot.slane %v1484, %v1488
    %v1492 = vsel %vm421, %v1472, 0
    %v1495 = vsel %vm421, %v1475, 0
    %1497 = vmatprep.subr.mxu0 0.0
    %1498 = vmatpush1.msra.mxu0 %v1476
    %1499 = vmatprep.subr.mxu0 0.0
    %1500 = vmatpush1.msra.mxu0 %v1477
    %1501 = vmatprep.subr.mxu0 0.0
    %1502 = vmatpush1.msra.mxu0 %v1478
    %1503 = vmatprep.subr.mxu0 0.0
    %1504 = vmatpush1.msra.mxu0 %v1479
    %1505 = vmatprep.subr.mxu0 0.0
    %1506 = vmatpush1.msra.mxu0 %v1480
    %1507 = vmatprep.subr.mxu0 0.0
    %1508 = vmatpush1.msra.mxu0 %v1481
    %1509 = vmatprep.subr.mxu0 0.0
    %1510 = vmatpush1.msra.mxu0 %v1482
    %1511 = vmatprep.subr.mxu0 0.0
    %1512 = vmatpush1.msra.mxu0 %v1483
    %1513 = vmatprep.subr.mxu0 0.0
    %1514 = vmatpush1.msra.mxu0 0.0
    %1515 = vmatprep.subr.mxu0 0.0
    %1516 = vmatpush1.msra.mxu0 0.0
    %1517 = vmatprep.subr.mxu0 0.0
    %1518 = vmatpush1.msra.mxu0 0.0
    %1519 = vmatprep.subr.mxu0 0.0
    %1520 = vmatpush1.msra.mxu0 0.0
    %1521 = vmatprep.subr.mxu0 0.0
    %1522 = vmatpush1.msra.mxu0 0.0
    %1523 = vmatprep.subr.mxu0 0.0
    %1524 = vmatpush1.msra.mxu0 0.0
    %1525 = vmatprep.subr.mxu0 0.0
    %1526 = vmatpush1.msra.mxu0 0.0
    %1527 = vmatprep.subr.mxu0 0.0
    %1528 = vmatpush1.msra.mxu0 0.0
    %1529 = vmatprep.subr.mxu0 0.0
    %1530 = vmatpush1.msra.mxu0 0.0
    %1531 = vmatprep.subr.mxu0 0.0
    %1532 = vmatpush1.msra.mxu0 0.0
    %1533 = vmatprep.subr.mxu0 0.0
    %1534 = vmatpush1.msra.mxu0 0.0
    %1535 = vmatprep.subr.mxu0 0.0
    %1536 = vmatpush1.msra.mxu0 0.0
    %1537 = vmatprep.subr.mxu0 0.0
    %1538 = vmatpush1.msra.mxu0 0.0
    %1539 = vmatprep.subr.mxu0 0.0
    %1540 = vmatpush1.msra.mxu0 0.0
    %1541 = vmatprep.subr.mxu0 0.0
    %1542 = vmatpush1.msra.mxu0 0.0
    %1543 = vmatprep.subr.mxu0 0.0
    %1544 = vmatpush1.msra.mxu0 0.0
    %1545 = vmatprep.subr.mxu0 0.0
    %1546 = vmatpush1.msra.mxu0 0.0
    %1547 = vmatprep.subr.mxu0 0.0
    %1548 = vmatpush1.msra.mxu0 0.0
    %1549 = vmatprep.subr.mxu0 0.0
    %1550 = vmatpush1.msra.mxu0 0.0
    %1551 = vmatprep.subr.mxu0 0.0
    %1552 = vmatpush1.msra.mxu0 0.0
    %1553 = vmatprep.subr.mxu0 0.0
    %1554 = vmatpush1.msra.mxu0 0.0
    %1555 = vmatprep.subr.mxu0 0.0
    %1556 = vmatpush1.msra.mxu0 0.0
    %1557 = vmatprep.subr.mxu0 0.0
    %1558 = vmatpush1.msra.mxu0 0.0
    %1559 = vmatprep.subr.mxu0 0.0
    %1560 = vmatpush1.msra.mxu0 0.0
    %1561 = vmatprep.mubr.f32.mxu0 0.0
    %1562 = vmatmul.mubr.f32.gmra.mrb[0].mxu0 %v1492
    %v1563 = vpop.f32.mrb[0].mxu0
    %v1564 = vadd.f32 %v1489, %v1563
    %v1565 = vpop.f32.mrb[0].mxu0
    %1566 = vmatprep.mubr.f32.mxu0 0.0
    %1567 = vmatmul.mubr.f32.gmra.mrb[0].mxu0 %v1495
    %v1568 = vpop.f32.mrb[0].mxu0
    %v1569 = vadd.f32 %v1489, %v1568
    %v1570 = vpop.f32.mrb[0].mxu0
    %1571 = vdwg.mxu0
    %v1572 = vld [vmem:[#allocation10] sm:$0xff]
    %v1573 = vld [vmem:[#allocation10 + $0x8] sm:$0xff]
    %v1574 = vld [vmem:[#allocation10 + $0x10] sm:$0xff]
    %v1575 = vld [vmem:[#allocation10 + $0x18] sm:$0xff]
    %v1576 = vxor.u32 %v1564, 2147483648
    %v1577 = vmul.f32 %v1576, 1.442695
    %v1578 = vpow.pop %v1577
    %v1579 = vadd.f32 %v1578, 1.0
    %v1580 = vrcp.pop %v1579
    %v1581 = vmul.f32 1.0, %v1580
    %v1582 = vtanh.pop %v1564
    %v1583 = vmul.f32 %v1581, 0.0
    %1585 = vrot.lane.b32.xlu0 %v1582, 32
    %v1586 = vpop.permute.xlu0 %1585
    %v1588 = vmul.f32 %v1581, %v1586
    %1590 = vrot.lane.b32.xlu0 %v1588, 32
    %v1591 = vpop.permute.xlu0 %1590
    %v1593 = vadd.f32 %v1583, %v1591
    %v1594 = vtanh.pop %v1593
    %1596 = vrot.lane.b32.xlu0 %v1594, 32
    %v1597 = vpop.permute.xlu0 %1596
    %v1599 = vmul.f32 %v1581, %v1597
    %1601 = vrot.lane.b32.xlu0 %v1599, 64
    %v1602 = vpop.permute.xlu0 %1601
    %v1603 = vsel %vm261, %v1602, 0
    %1605 = vmatprep.subr.mxu0 0.0
    %1606 = vmatpush1.msra.mxu0 %v1572
    %1607 = vmatprep.subr.mxu0 0.0
    %1608 = vmatpush1.msra.mxu0 %v1573
    %1609 = vmatprep.subr.mxu0 0.0
    %1610 = vmatpush1.msra.mxu0 %v1574
    %1611 = vmatprep.subr.mxu0 0.0
    %1612 = vmatpush1.msra.mxu0 %v1575
    %1613 = vmatprep.subr.mxu0 0.0
    %1614 = vmatpush1.msra.mxu0 0.0
    %1615 = vmatprep.subr.mxu0 0.0
    %1616 = vmatpush1.msra.mxu0 0.0
    %1617 = vmatprep.subr.mxu0 0.0
    %1618 = vmatpush1.msra.mxu0 0.0
    %1619 = vmatprep.subr.mxu0 0.0
    %1620 = vmatpush1.msra.mxu0 0.0
    %1621 = vmatprep.subr.mxu0 0.0
    %1622 = vmatpush1.msra.mxu0 0.0
    %1623 = vmatprep.subr.mxu0 0.0
    %1624 = vmatpush1.msra.mxu0 0.0
    %1625 = vmatprep.subr.mxu0 0.0
    %1626 = vmatpush1.msra.mxu0 0.0
    %1627 = vmatprep.subr.mxu0 0.0
    %1628 = vmatpush1.msra.mxu0 0.0
    %1629 = vmatprep.subr.mxu0 0.0
    %1630 = vmatpush1.msra.mxu0 0.0
    %1631 = vmatprep.subr.mxu0 0.0
    %1632 = vmatpush1.msra.mxu0 0.0
    %1633 = vmatprep.subr.mxu0 0.0
    %1634 = vmatpush1.msra.mxu0 0.0
    %1635 = vmatprep.subr.mxu0 0.0
    %1636 = vmatpush1.msra.mxu0 0.0
    %1637 = vmatprep.subr.mxu0 0.0
    %1638 = vmatpush1.msra.mxu0 0.0
    %1639 = vmatprep.subr.mxu0 0.0
    %1640 = vmatpush1.msra.mxu0 0.0
    %1641 = vmatprep.subr.mxu0 0.0
    %1642 = vmatpush1.msra.mxu0 0.0
    %1643 = vmatprep.subr.mxu0 0.0
    %1644 = vmatpush1.msra.mxu0 0.0
    %1645 = vmatprep.subr.mxu0 0.0
    %1646 = vmatpush1.msra.mxu0 0.0
    %1647 = vmatprep.subr.mxu0 0.0
    %1648 = vmatpush1.msra.mxu0 0.0
    %1649 = vmatprep.subr.mxu0 0.0
    %1650 = vmatpush1.msra.mxu0 0.0
    %1651 = vmatprep.subr.mxu0 0.0
    %1652 = vmatpush1.msra.mxu0 0.0
    %1653 = vmatprep.subr.mxu0 0.0
    %1654 = vmatpush1.msra.mxu0 0.0
    %1655 = vmatprep.subr.mxu0 0.0
    %1656 = vmatpush1.msra.mxu0 0.0
    %1657 = vmatprep.subr.mxu0 0.0
    %1658 = vmatpush1.msra.mxu0 0.0
    %1659 = vmatprep.subr.mxu0 0.0
    %1660 = vmatpush1.msra.mxu0 0.0
    %1661 = vmatprep.subr.mxu0 0.0
    %1662 = vmatpush1.msra.mxu0 0.0
    %1663 = vmatprep.subr.mxu0 0.0
    %1664 = vmatpush1.msra.mxu0 0.0
    %1665 = vmatprep.subr.mxu0 0.0
    %1666 = vmatpush1.msra.mxu0 0.0
    %1667 = vmatprep.subr.mxu0 0.0
    %1668 = vmatpush1.msra.mxu0 0.0
    %1669 = vmatprep.mubr.f32.mxu0 0.0
    %1670 = vmatmul.mubr.f32.gmra.mrb[0].mxu0 %v1603
    %v1671 = vpop.f32.mrb[0].mxu0
    %v1672 = vadd.f32 0.0, %v1671
    %v1673 = vpop.f32.mrb[0].mxu0
    %1674 = vdwg.mxu0
    %v1676 = vrot.slane %v1672, 6
    %v1678 = vadd.f32 %v1564, %v1676
    %v1679 = vxor.u32 %v1678, 2147483648
    %v1680 = vmul.f32 %v1679, 1.442695
    %v1681 = vpow.pop %v1680
    %v1682 = vadd.f32 %v1681, 1.0
    %v1683 = vrcp.pop %v1682
    %v1684 = vmul.f32 1.0, %v1683
    %v1685 = vtanh.pop %v1678
    %v1687 = vrot.slane %v1593, 6
    %v1689 = vmul.f32 %v1684, %v1687
    %1691 = vrot.lane.b32.xlu0 %v1685, 32
    %v1692 = vpop.permute.xlu0 %1691
    %v1694 = vmul.f32 %v1684, %v1692
    %1696 = vrot.lane.b32.xlu0 %v1694, 32
    %v1697 = vpop.permute.xlu0 %1696
    %v1699 = vadd.f32 %v1689, %v1697
    %v1700 = vtanh.pop %v1699
    %1702 = vrot.lane.b32.xlu0 %v1700, 32
    %v1703 = vpop.permute.xlu0 %1702
    %v1705 = vmul.f32 %v1684, %v1703
    %v1707 = vrot.slane %v1705, 2
    %1708 = vrot.lane.b32.xlu0 %v1707, 64
    %v1709 = vpop.permute.xlu0 %1708
    %v1710 = vsel %vm261, %v1709, 0
    %1712 = vmatprep.subr.mxu0 0.0
    %1713 = vmatpush1.msra.mxu0 %v1572
    %1714 = vmatprep.subr.mxu0 0.0
    %1715 = vmatpush1.msra.mxu0 %v1573
    %1716 = vmatprep.subr.mxu0 0.0
    %1717 = vmatpush1.msra.mxu0 %v1574
    %1718 = vmatprep.subr.mxu0 0.0
    %1719 = vmatpush1.msra.mxu0 %v1575
    %1720 = vmatprep.subr.mxu0 0.0
    %1721 = vmatpush1.msra.mxu0 0.0
    %1722 = vmatprep.subr.mxu0 0.0
    %1723 = vmatpush1.msra.mxu0 0.0
    %1724 = vmatprep.subr.mxu0 0.0
    %1725 = vmatpush1.msra.mxu0 0.0
    %1726 = vmatprep.subr.mxu0 0.0
    %1727 = vmatpush1.msra.mxu0 0.0
    %1728 = vmatprep.subr.mxu0 0.0
    %1729 = vmatpush1.msra.mxu0 0.0
    %1730 = vmatprep.subr.mxu0 0.0
    %1731 = vmatpush1.msra.mxu0 0.0
    %1732 = vmatprep.subr.mxu0 0.0
    %1733 = vmatpush1.msra.mxu0 0.0
    %1734 = vmatprep.subr.mxu0 0.0
    %1735 = vmatpush1.msra.mxu0 0.0
    %1736 = vmatprep.subr.mxu0 0.0
    %1737 = vmatpush1.msra.mxu0 0.0
    %1738 = vmatprep.subr.mxu0 0.0
    %1739 = vmatpush1.msra.mxu0 0.0
    %1740 = vmatprep.subr.mxu0 0.0
    %1741 = vmatpush1.msra.mxu0 0.0
    %1742 = vmatprep.subr.mxu0 0.0
    %1743 = vmatpush1.msra.mxu0 0.0
    %1744 = vmatprep.subr.mxu0 0.0
    %1745 = vmatpush1.msra.mxu0 0.0
    %1746 = vmatprep.subr.mxu0 0.0
    %1747 = vmatpush1.msra.mxu0 0.0
    %1748 = vmatprep.subr.mxu0 0.0
    %1749 = vmatpush1.msra.mxu0 0.0
    %1750 = vmatprep.subr.mxu0 0.0
    %1751 = vmatpush1.msra.mxu0 0.0
    %1752 = vmatprep.subr.mxu0 0.0
    %1753 = vmatpush1.msra.mxu0 0.0
    %1754 = vmatprep.subr.mxu0 0.0
    %1755 = vmatpush1.msra.mxu0 0.0
    %1756 = vmatprep.subr.mxu0 0.0
    %1757 = vmatpush1.msra.mxu0 0.0
    %1758 = vmatprep.subr.mxu0 0.0
    %1759 = vmatpush1.msra.mxu0 0.0
    %1760 = vmatprep.subr.mxu0 0.0
    %1761 = vmatpush1.msra.mxu0 0.0
    %1762 = vmatprep.subr.mxu0 0.0
    %1763 = vmatpush1.msra.mxu0 0.0
    %1764 = vmatprep.subr.mxu0 0.0
    %1765 = vmatpush1.msra.mxu0 0.0
    %1766 = vmatprep.subr.mxu0 0.0
    %1767 = vmatpush1.msra.mxu0 0.0
    %1768 = vmatprep.subr.mxu0 0.0
    %1769 = vmatpush1.msra.mxu0 0.0
    %1770 = vmatprep.subr.mxu0 0.0
    %1771 = vmatpush1.msra.mxu0 0.0
    %1772 = vmatprep.subr.mxu0 0.0
    %1773 = vmatpush1.msra.mxu0 0.0
    %1774 = vmatprep.subr.mxu0 0.0
    %1775 = vmatpush1.msra.mxu0 0.0
    %1776 = vmatprep.mubr.f32.mxu0 0.0
    %1777 = vmatmul.mubr.f32.gmra.mrb[0].mxu0 %v1710
    %v1778 = vpop.f32.mrb[0].mxu0
    %v1779 = vadd.f32 0.0, %v1778
    %v1780 = vpop.f32.mrb[0].mxu0
    %1781 = vdwg.mxu0
    %v1783 = vrot.slane %v1779, 4
    %v1785 = vadd.f32 %v1564, %v1783
    %v1786 = vxor.u32 %v1785, 2147483648
    %v1787 = vmul.f32 %v1786, 1.442695
    %v1788 = vpow.pop %v1787
    %v1789 = vadd.f32 %v1788, 1.0
    %v1790 = vrcp.pop %v1789
    %v1791 = vmul.f32 1.0, %v1790
    %v1792 = vtanh.pop %v1785
    %v1794 = vrot.slane %v1699, 6
    %v1796 = vmul.f32 %v1791, %v1794
    %1798 = vrot.lane.b32.xlu0 %v1792, 32
    %v1799 = vpop.permute.xlu0 %1798
    %v1801 = vmul.f32 %v1791, %v1799
    %1803 = vrot.lane.b32.xlu0 %v1801, 32
    %v1804 = vpop.permute.xlu0 %1803
    %v1806 = vadd.f32 %v1796, %v1804
    %v1807 = vtanh.pop %v1806
    %1809 = vrot.lane.b32.xlu0 %v1807, 32
    %v1810 = vpop.permute.xlu0 %1809
    %v1812 = vmul.f32 %v1791, %v1810
    %v1814 = vrot.slane %v1812, 4
    %1815 = vrot.lane.b32.xlu0 %v1814, 64
    %v1816 = vpop.permute.xlu0 %1815
    %v1817 = vsel %vm261, %v1816, 0
    %1819 = vmatprep.subr.mxu0 0.0
    %1820 = vmatpush1.msra.mxu0 %v1572
    %1821 = vmatprep.subr.mxu0 0.0
    %1822 = vmatpush1.msra.mxu0 %v1573
    %1823 = vmatprep.subr.mxu0 0.0
    %1824 = vmatpush1.msra.mxu0 %v1574
    %1825 = vmatprep.subr.mxu0 0.0
    %1826 = vmatpush1.msra.mxu0 %v1575
    %1827 = vmatprep.subr.mxu0 0.0
    %1828 = vmatpush1.msra.mxu0 0.0
    %1829 = vmatprep.subr.mxu0 0.0
    %1830 = vmatpush1.msra.mxu0 0.0
    %1831 = vmatprep.subr.mxu0 0.0
    %1832 = vmatpush1.msra.mxu0 0.0
    %1833 = vmatprep.subr.mxu0 0.0
    %1834 = vmatpush1.msra.mxu0 0.0
    %1835 = vmatprep.subr.mxu0 0.0
    %1836 = vmatpush1.msra.mxu0 0.0
    %1837 = vmatprep.subr.mxu0 0.0
    %1838 = vmatpush1.msra.mxu0 0.0
    %1839 = vmatprep.subr.mxu0 0.0
    %1840 = vmatpush1.msra.mxu0 0.0
    %1841 = vmatprep.subr.mxu0 0.0
    %1842 = vmatpush1.msra.mxu0 0.0
    %1843 = vmatprep.subr.mxu0 0.0
    %1844 = vmatpush1.msra.mxu0 0.0
    %1845 = vmatprep.subr.mxu0 0.0
    %1846 = vmatpush1.msra.mxu0 0.0
    %1847 = vmatprep.subr.mxu0 0.0
    %1848 = vmatpush1.msra.mxu0 0.0
    %1849 = vmatprep.subr.mxu0 0.0
    %1850 = vmatpush1.msra.mxu0 0.0
    %1851 = vmatprep.subr.mxu0 0.0
    %1852 = vmatpush1.msra.mxu0 0.0
    %1853 = vmatprep.subr.mxu0 0.0
    %1854 = vmatpush1.msra.mxu0 0.0
    %1855 = vmatprep.subr.mxu0 0.0
    %1856 = vmatpush1.msra.mxu0 0.0
    %1857 = vmatprep.subr.mxu0 0.0
    %1858 = vmatpush1.msra.mxu0 0.0
    %1859 = vmatprep.subr.mxu0 0.0
    %1860 = vmatpush1.msra.mxu0 0.0
    %1861 = vmatprep.subr.mxu0 0.0
    %1862 = vmatpush1.msra.mxu0 0.0
    %1863 = vmatprep.subr.mxu0 0.0
    %1864 = vmatpush1.msra.mxu0 0.0
    %1865 = vmatprep.subr.mxu0 0.0
    %1866 = vmatpush1.msra.mxu0 0.0
    %1867 = vmatprep.subr.mxu0 0.0
    %1868 = vmatpush1.msra.mxu0 0.0
    %1869 = vmatprep.subr.mxu0 0.0
    %1870 = vmatpush1.msra.mxu0 0.0
    %1871 = vmatprep.subr.mxu0 0.0
    %1872 = vmatpush1.msra.mxu0 0.0
    %1873 = vmatprep.subr.mxu0 0.0
    %1874 = vmatpush1.msra.mxu0 0.0
    %1875 = vmatprep.subr.mxu0 0.0
    %1876 = vmatpush1.msra.mxu0 0.0
    %1877 = vmatprep.subr.mxu0 0.0
    %1878 = vmatpush1.msra.mxu0 0.0
    %1879 = vmatprep.subr.mxu0 0.0
    %1880 = vmatpush1.msra.mxu0 0.0
    %1881 = vmatprep.subr.mxu0 0.0
    %1882 = vmatpush1.msra.mxu0 0.0
    %1883 = vmatprep.mubr.f32.mxu0 0.0
    %1884 = vmatmul.mubr.f32.gmra.mrb[0].mxu0 %v1817
    %v1885 = vpop.f32.mrb[0].mxu0
    %v1886 = vadd.f32 0.0, %v1885
    %v1887 = vpop.f32.mrb[0].mxu0
    %1888 = vdwg.mxu0
    %v1890 = vrot.slane %v1886, 2
    %v1892 = vadd.f32 %v1564, %v1890
    %v1893 = vxor.u32 %v1892, 2147483648
    %v1894 = vmul.f32 %v1893, 1.442695
    %v1895 = vpow.pop %v1894
    %v1896 = vadd.f32 %v1895, 1.0
    %v1897 = vrcp.pop %v1896
    %v1898 = vmul.f32 1.0, %v1897
    %v1899 = vtanh.pop %v1892
    %v1901 = vrot.slane %v1806, 6
    %v1903 = vmul.f32 %v1898, %v1901
    %1905 = vrot.lane.b32.xlu0 %v1899, 32
    %v1906 = vpop.permute.xlu0 %1905
    %v1908 = vmul.f32 %v1898, %v1906
    %1910 = vrot.lane.b32.xlu0 %v1908, 32
    %v1911 = vpop.permute.xlu0 %1910
    %v1913 = vadd.f32 %v1903, %v1911
    %v1914 = vtanh.pop %v1913
    %1916 = vrot.lane.b32.xlu0 %v1914, 32
    %v1917 = vpop.permute.xlu0 %1916
    %v1919 = vmul.f32 %v1898, %v1917
    %v1921 = vrot.slane %v1919, 6
    %1922 = vrot.lane.b32.xlu0 %v1921, 64
    %v1923 = vpop.permute.xlu0 %1922
    %v1924 = vsel %vm261, %v1923, 0
    %1926 = vmatprep.subr.mxu0 0.0
    %1927 = vmatpush1.msra.mxu0 %v1572
    %1928 = vmatprep.subr.mxu0 0.0
    %1929 = vmatpush1.msra.mxu0 %v1573
    %1930 = vmatprep.subr.mxu0 0.0
    %1931 = vmatpush1.msra.mxu0 %v1574
    %1932 = vmatprep.subr.mxu0 0.0
    %1933 = vmatpush1.msra.mxu0 %v1575
    %1934 = vmatprep.subr.mxu0 0.0
    %1935 = vmatpush1.msra.mxu0 0.0
    %1936 = vmatprep.subr.mxu0 0.0
    %1937 = vmatpush1.msra.mxu0 0.0
    %1938 = vmatprep.subr.mxu0 0.0
    %1939 = vmatpush1.msra.mxu0 0.0
    %1940 = vmatprep.subr.mxu0 0.0
    %1941 = vmatpush1.msra.mxu0 0.0
    %1942 = vmatprep.subr.mxu0 0.0
    %1943 = vmatpush1.msra.mxu0 0.0
    %1944 = vmatprep.subr.mxu0 0.0
    %1945 = vmatpush1.msra.mxu0 0.0
    %1946 = vmatprep.subr.mxu0 0.0
    %1947 = vmatpush1.msra.mxu0 0.0
    %1948 = vmatprep.subr.mxu0 0.0
    %1949 = vmatpush1.msra.mxu0 0.0
    %1950 = vmatprep.subr.mxu0 0.0
    %1951 = vmatpush1.msra.mxu0 0.0
    %1952 = vmatprep.subr.mxu0 0.0
    %1953 = vmatpush1.msra.mxu0 0.0
    %1954 = vmatprep.subr.mxu0 0.0
    %1955 = vmatpush1.msra.mxu0 0.0
    %1956 = vmatprep.subr.mxu0 0.0
    %1957 = vmatpush1.msra.mxu0 0.0
    %1958 = vmatprep.subr.mxu0 0.0
    %1959 = vmatpush1.msra.mxu0 0.0
    %1960 = vmatprep.subr.mxu0 0.0
    %1961 = vmatpush1.msra.mxu0 0.0
    %1962 = vmatprep.subr.mxu0 0.0
    %1963 = vmatpush1.msra.mxu0 0.0
    %1964 = vmatprep.subr.mxu0 0.0
    %1965 = vmatpush1.msra.mxu0 0.0
    %1966 = vmatprep.subr.mxu0 0.0
    %1967 = vmatpush1.msra.mxu0 0.0
    %1968 = vmatprep.subr.mxu0 0.0
    %1969 = vmatpush1.msra.mxu0 0.0
    %1970 = vmatprep.subr.mxu0 0.0
    %1971 = vmatpush1.msra.mxu0 0.0
    %1972 = vmatprep.subr.mxu0 0.0
    %1973 = vmatpush1.msra.mxu0 0.0
    %1974 = vmatprep.subr.mxu0 0.0
    %1975 = vmatpush1.msra.mxu0 0.0
    %1976 = vmatprep.subr.mxu0 0.0
    %1977 = vmatpush1.msra.mxu0 0.0
    %1978 = vmatprep.subr.mxu0 0.0
    %1979 = vmatpush1.msra.mxu0 0.0
    %1980 = vmatprep.subr.mxu0 0.0
    %1981 = vmatpush1.msra.mxu0 0.0
    %1982 = vmatprep.subr.mxu0 0.0
    %1983 = vmatpush1.msra.mxu0 0.0
    %1984 = vmatprep.subr.mxu0 0.0
    %1985 = vmatpush1.msra.mxu0 0.0
    %1986 = vmatprep.subr.mxu0 0.0
    %1987 = vmatpush1.msra.mxu0 0.0
    %1988 = vmatprep.subr.mxu0 0.0
    %1989 = vmatpush1.msra.mxu0 0.0
    %1990 = vmatprep.mubr.f32.mxu0 0.0
    %1991 = vmatmul.mubr.f32.gmra.mrb[0].mxu0 %v1924
    %v1992 = vpop.f32.mrb[0].mxu0
    %v1993 = vadd.f32 0.0, %v1992
    %v1994 = vpop.f32.mrb[0].mxu0
    %1995 = vdwg.mxu0
    %v1996 = vadd.f32 %v1569, %v1993
    %v1997 = vxor.u32 %v1996, 2147483648
    %v1998 = vmul.f32 %v1997, 1.442695
    %v1999 = vpow.pop %v1998
    %v2000 = vadd.f32 %v1999, 1.0
    %v2001 = vrcp.pop %v2000
    %v2002 = vmul.f32 1.0, %v2001
    %v2003 = vtanh.pop %v1996
    %v2005 = vrot.slane %v1913, 6
    %v2007 = vmul.f32 %v2002, %v2005
    %2009 = vrot.lane.b32.xlu0 %v2003, 32
    %v2010 = vpop.permute.xlu0 %2009
    %v2012 = vmul.f32 %v2002, %v2010
    %2014 = vrot.lane.b32.xlu0 %v2012, 32
    %v2015 = vpop.permute.xlu0 %2014
    %v2017 = vadd.f32 %v2007, %v2015
    %v2018 = vtanh.pop %v2017
    %2020 = vrot.lane.b32.xlu0 %v2018, 32
    %v2021 = vpop.permute.xlu0 %2020
    %v2023 = vmul.f32 %v2002, %v2021
    %2025 = vrot.lane.b32.xlu0 %v2023, 64
    %v2026 = vpop.permute.xlu0 %2025
    %v2027 = vsel %vm261, %v2026, 0
    %2029 = vmatprep.subr.mxu0 0.0
    %2030 = vmatpush1.msra.mxu0 %v1572
    %2031 = vmatprep.subr.mxu0 0.0
    %2032 = vmatpush1.msra.mxu0 %v1573
    %2033 = vmatprep.subr.mxu0 0.0
    %2034 = vmatpush1.msra.mxu0 %v1574
    %2035 = vmatprep.subr.mxu0 0.0
    %2036 = vmatpush1.msra.mxu0 %v1575
    %2037 = vmatprep.subr.mxu0 0.0
    %2038 = vmatpush1.msra.mxu0 0.0
    %2039 = vmatprep.subr.mxu0 0.0
    %2040 = vmatpush1.msra.mxu0 0.0
    %2041 = vmatprep.subr.mxu0 0.0
    %2042 = vmatpush1.msra.mxu0 0.0
    %2043 = vmatprep.subr.mxu0 0.0
    %2044 = vmatpush1.msra.mxu0 0.0
    %2045 = vmatprep.subr.mxu0 0.0
    %2046 = vmatpush1.msra.mxu0 0.0
    %2047 = vmatprep.subr.mxu0 0.0
    %2048 = vmatpush1.msra.mxu0 0.0
    %2049 = vmatprep.subr.mxu0 0.0
    %2050 = vmatpush1.msra.mxu0 0.0
    %2051 = vmatprep.subr.mxu0 0.0
    %2052 = vmatpush1.msra.mxu0 0.0
    %2053 = vmatprep.subr.mxu0 0.0
    %2054 = vmatpush1.msra.mxu0 0.0
    %2055 = vmatprep.subr.mxu0 0.0
    %2056 = vmatpush1.msra.mxu0 0.0
    %2057 = vmatprep.subr.mxu0 0.0
    %2058 = vmatpush1.msra.mxu0 0.0
    %2059 = vmatprep.subr.mxu0 0.0
    %2060 = vmatpush1.msra.mxu0 0.0
    %2061 = vmatprep.subr.mxu0 0.0
    %2062 = vmatpush1.msra.mxu0 0.0
    %2063 = vmatprep.subr.mxu0 0.0
    %2064 = vmatpush1.msra.mxu0 0.0
    %2065 = vmatprep.subr.mxu0 0.0
    %2066 = vmatpush1.msra.mxu0 0.0
    %2067 = vmatprep.subr.mxu0 0.0
    %2068 = vmatpush1.msra.mxu0 0.0
    %2069 = vmatprep.subr.mxu0 0.0
    %2070 = vmatpush1.msra.mxu0 0.0
    %2071 = vmatprep.subr.mxu0 0.0
    %2072 = vmatpush1.msra.mxu0 0.0
    %2073 = vmatprep.subr.mxu0 0.0
    %2074 = vmatpush1.msra.mxu0 0.0
    %2075 = vmatprep.subr.mxu0 0.0
    %2076 = vmatpush1.msra.mxu0 0.0
    %2077 = vmatprep.subr.mxu0 0.0
    %2078 = vmatpush1.msra.mxu0 0.0
    %2079 = vmatprep.subr.mxu0 0.0
    %2080 = vmatpush1.msra.mxu0 0.0
    %2081 = vmatprep.subr.mxu0 0.0
    %2082 = vmatpush1.msra.mxu0 0.0
    %2083 = vmatprep.subr.mxu0 0.0
    %2084 = vmatpush1.msra.mxu0 0.0
    %2085 = vmatprep.subr.mxu0 0.0
    %2086 = vmatpush1.msra.mxu0 0.0
    %2087 = vmatprep.subr.mxu0 0.0
    %2088 = vmatpush1.msra.mxu0 0.0
    %2089 = vmatprep.subr.mxu0 0.0
    %2090 = vmatpush1.msra.mxu0 0.0
    %2091 = vmatprep.subr.mxu0 0.0
    %2092 = vmatpush1.msra.mxu0 0.0
    %2093 = vmatprep.mubr.f32.mxu0 0.0
    %2094 = vmatmul.mubr.f32.gmra.mrb[0].mxu0 %v2027
    %v2095 = vpop.f32.mrb[0].mxu0
    %v2096 = vadd.f32 0.0, %v2095
    %v2097 = vpop.f32.mrb[0].mxu0
    %2098 = vdwg.mxu0
    %v2100 = vrot.slane %v2096, 6
    %v2102 = vadd.f32 %v1569, %v2100
    %v2103 = vxor.u32 %v2102, 2147483648
    %v2104 = vmul.f32 %v2103, 1.442695
    %v2105 = vpow.pop %v2104
    %v2106 = vadd.f32 %v2105, 1.0
    %v2107 = vrcp.pop %v2106
    %v2108 = vmul.f32 1.0, %v2107
    %v2109 = vtanh.pop %v2102
    %v2111 = vrot.slane %v2017, 6
    %v2113 = vmul.f32 %v2108, %v2111
    %2115 = vrot.lane.b32.xlu0 %v2109, 32
    %v2116 = vpop.permute.xlu0 %2115
    %v2118 = vmul.f32 %v2108, %v2116
    %2120 = vrot.lane.b32.xlu0 %v2118, 32
    %v2121 = vpop.permute.xlu0 %2120
    %v2123 = vadd.f32 %v2113, %v2121
    %v2124 = vtanh.pop %v2123
    %2126 = vrot.lane.b32.xlu0 %v2124, 32
    %v2127 = vpop.permute.xlu0 %2126
    %v2129 = vmul.f32 %v2108, %v2127
    %v2131 = vrot.slane %v2129, 2
    %2132 = vrot.lane.b32.xlu0 %v2131, 64
    %v2133 = vpop.permute.xlu0 %2132
    %v2134 = vsel %vm261, %v2133, 0
    %2136 = vmatprep.subr.mxu0 0.0
    %2137 = vmatpush1.msra.mxu0 %v1572
    %2138 = vmatprep.subr.mxu0 0.0
    %2139 = vmatpush1.msra.mxu0 %v1573
    %2140 = vmatprep.subr.mxu0 0.0
    %2141 = vmatpush1.msra.mxu0 %v1574
    %2142 = vmatprep.subr.mxu0 0.0
    %2143 = vmatpush1.msra.mxu0 %v1575
    %2144 = vmatprep.subr.mxu0 0.0
    %2145 = vmatpush1.msra.mxu0 0.0
    %2146 = vmatprep.subr.mxu0 0.0
    %2147 = vmatpush1.msra.mxu0 0.0
    %2148 = vmatprep.subr.mxu0 0.0
    %2149 = vmatpush1.msra.mxu0 0.0
    %2150 = vmatprep.subr.mxu0 0.0
    %2151 = vmatpush1.msra.mxu0 0.0
    %2152 = vmatprep.subr.mxu0 0.0
    %2153 = vmatpush1.msra.mxu0 0.0
    %2154 = vmatprep.subr.mxu0 0.0
    %2155 = vmatpush1.msra.mxu0 0.0
    %2156 = vmatprep.subr.mxu0 0.0
    %2157 = vmatpush1.msra.mxu0 0.0
    %2158 = vmatprep.subr.mxu0 0.0
    %2159 = vmatpush1.msra.mxu0 0.0
    %2160 = vmatprep.subr.mxu0 0.0
    %2161 = vmatpush1.msra.mxu0 0.0
    %2162 = vmatprep.subr.mxu0 0.0
    %2163 = vmatpush1.msra.mxu0 0.0
    %2164 = vmatprep.subr.mxu0 0.0
    %2165 = vmatpush1.msra.mxu0 0.0
    %2166 = vmatprep.subr.mxu0 0.0
    %2167 = vmatpush1.msra.mxu0 0.0
    %2168 = vmatprep.subr.mxu0 0.0
    %2169 = vmatpush1.msra.mxu0 0.0
    %2170 = vmatprep.subr.mxu0 0.0
    %2171 = vmatpush1.msra.mxu0 0.0
    %2172 = vmatprep.subr.mxu0 0.0
    %2173 = vmatpush1.msra.mxu0 0.0
    %2174 = vmatprep.subr.mxu0 0.0
    %2175 = vmatpush1.msra.mxu0 0.0
    %2176 = vmatprep.subr.mxu0 0.0
    %2177 = vmatpush1.msra.mxu0 0.0
    %2178 = vmatprep.subr.mxu0 0.0
    %2179 = vmatpush1.msra.mxu0 0.0
    %2180 = vmatprep.subr.mxu0 0.0
    %2181 = vmatpush1.msra.mxu0 0.0
    %2182 = vmatprep.subr.mxu0 0.0
    %2183 = vmatpush1.msra.mxu0 0.0
    %2184 = vmatprep.subr.mxu0 0.0
    %2185 = vmatpush1.msra.mxu0 0.0
    %2186 = vmatprep.subr.mxu0 0.0
    %2187 = vmatpush1.msra.mxu0 0.0
    %2188 = vmatprep.subr.mxu0 0.0
    %2189 = vmatpush1.msra.mxu0 0.0
    %2190 = vmatprep.subr.mxu0 0.0
    %2191 = vmatpush1.msra.mxu0 0.0
    %2192 = vmatprep.subr.mxu0 0.0
    %2193 = vmatpush1.msra.mxu0 0.0
    %2194 = vmatprep.subr.mxu0 0.0
    %2195 = vmatpush1.msra.mxu0 0.0
    %2196 = vmatprep.subr.mxu0 0.0
    %2197 = vmatpush1.msra.mxu0 0.0
    %2198 = vmatprep.subr.mxu0 0.0
    %2199 = vmatpush1.msra.mxu0 0.0
    %2200 = vmatprep.mubr.f32.mxu0 0.0
    %2201 = vmatmul.mubr.f32.gmra.mrb[0].mxu0 %v2134
    %v2202 = vpop.f32.mrb[0].mxu0
    %v2203 = vadd.f32 0.0, %v2202
    %v2204 = vpop.f32.mrb[0].mxu0
    %2205 = vdwg.mxu0
    %v2207 = vrot.slane %v2203, 4
    %v2209 = vadd.f32 %v1569, %v2207
    %v2210 = vxor.u32 %v2209, 2147483648
    %v2211 = vmul.f32 %v2210, 1.442695
    %v2212 = vpow.pop %v2211
    %v2213 = vadd.f32 %v2212, 1.0
    %v2214 = vrcp.pop %v2213
    %v2215 = vmul.f32 1.0, %v2214
    %v2216 = vtanh.pop %v2209
    %v2218 = vrot.slane %v2123, 6
    %v2220 = vmul.f32 %v2215, %v2218
    %2222 = vrot.lane.b32.xlu0 %v2216, 32
    %v2223 = vpop.permute.xlu0 %2222
    %v2225 = vmul.f32 %v2215, %v2223
    %2227 = vrot.lane.b32.xlu0 %v2225, 32
    %v2228 = vpop.permute.xlu0 %2227
    %v2230 = vadd.f32 %v2220, %v2228
    %v2231 = vtanh.pop %v2230
    %2233 = vrot.lane.b32.xlu0 %v2231, 32
    %v2234 = vpop.permute.xlu0 %2233
    %v2236 = vmul.f32 %v2215, %v2234
    %v2238 = vrot.slane %v2236, 4
    %2239 = vrot.lane.b32.xlu0 %v2238, 64
    %v2240 = vpop.permute.xlu0 %2239
    %v2241 = vsel %vm261, %v2240, 0
    %2243 = vmatprep.subr.mxu0 0.0
    %2244 = vmatpush1.msra.mxu0 %v1572
    %2245 = vmatprep.subr.mxu0 0.0
    %2246 = vmatpush1.msra.mxu0 %v1573
    %2247 = vmatprep.subr.mxu0 0.0
    %2248 = vmatpush1.msra.mxu0 %v1574
    %2249 = vmatprep.subr.mxu0 0.0
    %2250 = vmatpush1.msra.mxu0 %v1575
    %2251 = vmatprep.subr.mxu0 0.0
    %2252 = vmatpush1.msra.mxu0 0.0
    %2253 = vmatprep.subr.mxu0 0.0
    %2254 = vmatpush1.msra.mxu0 0.0
    %2255 = vmatprep.subr.mxu0 0.0
    %2256 = vmatpush1.msra.mxu0 0.0
    %2257 = vmatprep.subr.mxu0 0.0
    %2258 = vmatpush1.msra.mxu0 0.0
    %2259 = vmatprep.subr.mxu0 0.0
    %2260 = vmatpush1.msra.mxu0 0.0
    %2261 = vmatprep.subr.mxu0 0.0
    %2262 = vmatpush1.msra.mxu0 0.0
    %2263 = vmatprep.subr.mxu0 0.0
    %2264 = vmatpush1.msra.mxu0 0.0
    %2265 = vmatprep.subr.mxu0 0.0
    %2266 = vmatpush1.msra.mxu0 0.0
    %2267 = vmatprep.subr.mxu0 0.0
    %2268 = vmatpush1.msra.mxu0 0.0
    %2269 = vmatprep.subr.mxu0 0.0
    %2270 = vmatpush1.msra.mxu0 0.0
    %2271 = vmatprep.subr.mxu0 0.0
    %2272 = vmatpush1.msra.mxu0 0.0
    %2273 = vmatprep.subr.mxu0 0.0
    %2274 = vmatpush1.msra.mxu0 0.0
    %2275 = vmatprep.subr.mxu0 0.0
    %2276 = vmatpush1.msra.mxu0 0.0
    %2277 = vmatprep.subr.mxu0 0.0
    %2278 = vmatpush1.msra.mxu0 0.0
    %2279 = vmatprep.subr.mxu0 0.0
    %2280 = vmatpush1.msra.mxu0 0.0
    %2281 = vmatprep.subr.mxu0 0.0
    %2282 = vmatpush1.msra.mxu0 0.0
    %2283 = vmatprep.subr.mxu0 0.0
    %2284 = vmatpush1.msra.mxu0 0.0
    %2285 = vmatprep.subr.mxu0 0.0
    %2286 = vmatpush1.msra.mxu0 0.0
    %2287 = vmatprep.subr.mxu0 0.0
    %2288 = vmatpush1.msra.mxu0 0.0
    %2289 = vmatprep.subr.mxu0 0.0
    %2290 = vmatpush1.msra.mxu0 0.0
    %2291 = vmatprep.subr.mxu0 0.0
    %2292 = vmatpush1.msra.mxu0 0.0
    %2293 = vmatprep.subr.mxu0 0.0
    %2294 = vmatpush1.msra.mxu0 0.0
    %2295 = vmatprep.subr.mxu0 0.0
    %2296 = vmatpush1.msra.mxu0 0.0
    %2297 = vmatprep.subr.mxu0 0.0
    %2298 = vmatpush1.msra.mxu0 0.0
    %2299 = vmatprep.subr.mxu0 0.0
    %2300 = vmatpush1.msra.mxu0 0.0
    %2301 = vmatprep.subr.mxu0 0.0
    %2302 = vmatpush1.msra.mxu0 0.0
    %2303 = vmatprep.subr.mxu0 0.0
    %2304 = vmatpush1.msra.mxu0 0.0
    %2305 = vmatprep.subr.mxu0 0.0
    %2306 = vmatpush1.msra.mxu0 0.0
    %2307 = vmatprep.mubr.f32.mxu0 0.0
    %2308 = vmatmul.mubr.f32.gmra.mrb[0].mxu0 %v2241
    %v2309 = vpop.f32.mrb[0].mxu0
    %v2310 = vadd.f32 0.0, %v2309
    %v2311 = vpop.f32.mrb[0].mxu0
    %2312 = vdwg.mxu0
    %v2314 = vrot.slane %v2310, 2
    %v2316 = vadd.f32 %v1569, %v2314
    %v2317 = vxor.u32 %v2316, 2147483648
    %v2318 = vmul.f32 %v2317, 1.442695
    %v2319 = vpow.pop %v2318
    %v2320 = vadd.f32 %v2319, 1.0
    %v2321 = vrcp.pop %v2320
    %v2322 = vmul.f32 1.0, %v2321
    %v2323 = vtanh.pop %v2316
    %v2325 = vrot.slane %v2230, 6
    %v2327 = vmul.f32 %v2322, %v2325
    %2329 = vrot.lane.b32.xlu0 %v2323, 32
    %v2330 = vpop.permute.xlu0 %2329
    %v2332 = vmul.f32 %v2322, %v2330
    %2334 = vrot.lane.b32.xlu0 %v2332, 32
    %v2335 = vpop.permute.xlu0 %2334
    %v2337 = vadd.f32 %v2327, %v2335
    %v2338 = vtanh.pop %v2337
    %2340 = vrot.lane.b32.xlu0 %v2338, 32
    %v2341 = vpop.permute.xlu0 %2340
    %v2343 = vmul.f32 %v2322, %v2341
    %v2344 = vld [vmem:[#allocation11] sm:$0xff]
    %v2345 = vld [vmem:[#allocation11 + $0x8] sm:$0xff]
    %v2346 = vld [vmem:[#allocation11 + $0x10] sm:$0xff]
    %v2347 = vld [vmem:[#allocation11 + $0x18] sm:$0xff]
    %v2348 = vld [vmem:[#allocation11 + $0x20] sm:$0xff]
    %v2349 = vld [vmem:[#allocation11 + $0x28] sm:$0xff]
    %v2350 = vld [vmem:[#allocation11 + $0x30] sm:$0xff]
    %v2351 = vld [vmem:[#allocation11 + $0x38] sm:$0xff]
    %v2352 = vld [vmem:[#allocation13] sm:$0x1]
    %v2354 = vlaneseq
    %v2355 = vshrl.u32 %v2354, 7
    %v2356 = vsub.s32 0, %v2355
    %v2357 = vrot.slane %v2352, %v2356
    %v2359 = vrot.slane %v1475, 6
    %v2360 = vsel %vm421, %v2359, 0
    %2362 = vmatprep.subr.mxu0 0.0
    %2363 = vmatpush1.msra.mxu0 %v2344
    %2364 = vmatprep.subr.mxu0 0.0
    %2365 = vmatpush1.msra.mxu0 %v2345
    %2366 = vmatprep.subr.mxu0 0.0
    %2367 = vmatpush1.msra.mxu0 %v2346
    %2368 = vmatprep.subr.mxu0 0.0
    %2369 = vmatpush1.msra.mxu0 %v2347
    %2370 = vmatprep.subr.mxu0 0.0
    %2371 = vmatpush1.msra.mxu0 %v2348
    %2372 = vmatprep.subr.mxu0 0.0
    %2373 = vmatpush1.msra.mxu0 %v2349
    %2374 = vmatprep.subr.mxu0 0.0
    %2375 = vmatpush1.msra.mxu0 %v2350
    %2376 = vmatprep.subr.mxu0 0.0
    %2377 = vmatpush1.msra.mxu0 %v2351
    %2378 = vmatprep.subr.mxu0 0.0
    %2379 = vmatpush1.msra.mxu0 0.0
    %2380 = vmatprep.subr.mxu0 0.0
    %2381 = vmatpush1.msra.mxu0 0.0
    %2382 = vmatprep.subr.mxu0 0.0
    %2383 = vmatpush1.msra.mxu0 0.0
    %2384 = vmatprep.subr.mxu0 0.0
    %2385 = vmatpush1.msra.mxu0 0.0
    %2386 = vmatprep.subr.mxu0 0.0
    %2387 = vmatpush1.msra.mxu0 0.0
    %2388 = vmatprep.subr.mxu0 0.0
    %2389 = vmatpush1.msra.mxu0 0.0
    %2390 = vmatprep.subr.mxu0 0.0
    %2391 = vmatpush1.msra.mxu0 0.0
    %2392 = vmatprep.subr.mxu0 0.0
    %2393 = vmatpush1.msra.mxu0 0.0
    %2394 = vmatprep.subr.mxu0 0.0
    %2395 = vmatpush1.msra.mxu0 0.0
    %2396 = vmatprep.subr.mxu0 0.0
    %2397 = vmatpush1.msra.mxu0 0.0
    %2398 = vmatprep.subr.mxu0 0.0
    %2399 = vmatpush1.msra.mxu0 0.0
    %2400 = vmatprep.subr.mxu0 0.0
    %2401 = vmatpush1.msra.mxu0 0.0
    %2402 = vmatprep.subr.mxu0 0.0
    %2403 = vmatpush1.msra.mxu0 0.0
    %2404 = vmatprep.subr.mxu0 0.0
    %2405 = vmatpush1.msra.mxu0 0.0
    %2406 = vmatprep.subr.mxu0 0.0
    %2407 = vmatpush1.msra.mxu0 0.0
    %2408 = vmatprep.subr.mxu0 0.0
    %2409 = vmatpush1.msra.mxu0 0.0
    %2410 = vmatprep.subr.mxu0 0.0
    %2411 = vmatpush1.msra.mxu0 0.0
    %2412 = vmatprep.subr.mxu0 0.0
    %2413 = vmatpush1.msra.mxu0 0.0
    %2414 = vmatprep.subr.mxu0 0.0
    %2415 = vmatpush1.msra.mxu0 0.0
    %2416 = vmatprep.subr.mxu0 0.0
    %2417 = vmatpush1.msra.mxu0 0.0
    %2418 = vmatprep.subr.mxu0 0.0
    %2419 = vmatpush1.msra.mxu0 0.0
    %2420 = vmatprep.subr.mxu0 0.0
    %2421 = vmatpush1.msra.mxu0 0.0
    %2422 = vmatprep.subr.mxu0 0.0
    %2423 = vmatpush1.msra.mxu0 0.0
    %2424 = vmatprep.subr.mxu0 0.0
    %2425 = vmatpush1.msra.mxu0 0.0
    %2426 = vmatprep.mubr.f32.mxu0 0.0
    %2427 = vmatmul.mubr.f32.gmra.mrb[0].mxu0 %v2360
    %v2428 = vpop.f32.mrb[0].mxu0
    %v2429 = vadd.f32 %v2357, %v2428
    %v2430 = vpop.f32.mrb[0].mxu0
    %2431 = vdwg.mxu0
    %v2432 = vxor.u32 %v2429, 2147483648
    %v2433 = vmul.f32 %v2432, 1.442695
    %v2434 = vpow.pop %v2433
    %v2435 = vadd.f32 %v2434, 1.0
    %v2436 = vrcp.pop %v2435
    %v2437 = vmul.f32 1.0, %v2436
    %v2438 = vtanh.pop %v2429
    %2440 = vrot.lane.b32.xlu0 %v2438, 32
    %v2441 = vpop.permute.xlu0 %2440
    %v2443 = vmul.f32 %v2437, %v2441
    %v2444 = vtanh.pop %v2443
    %2446 = vrot.lane.b32.xlu0 %v2444, 64
    %v2447 = vpop.permute.xlu0 %2446
    %v2449 = vmul.f32 %v2437, %v2447
    %2451 = vrot.lane.b32.xlu0 %v2343, 64
    %v2452 = vpop.permute.xlu0 %2451
    %v2455 = vrot.slane %v2449, 2
    %2456 = vrot.lane.b32.xlu0 %v2455, 96
    %v2457 = vpop.permute.xlu0 %2456
    %v2459 = vsel %vm261, %v2452, %v2457
    %v2460 = vld [vmem:[%s11] sm:$0xff]
    %v2461 = vld [vmem:[%s11 + $0x8] sm:$0xff]
    %v2462 = vld [vmem:[%s11 + $0x10] sm:$0xff]
    %v2463 = vld [vmem:[%s11 + $0x18] sm:$0xff]
    %v2464 = vld [vmem:[%s11 + $0x20] sm:$0xff]
    %v2465 = vld [vmem:[%s11 + $0x28] sm:$0xff]
    %v2466 = vld [vmem:[%s11 + $0x30] sm:$0xff]
    %v2467 = vld [vmem:[%s11 + $0x38] sm:$0xff]
    %v2468 = vld [vmem:[#allocation14] sm:$0x1]
    %v2470 = vlaneseq
    %v2471 = vshrl.u32 %v2470, 7
    %v2472 = vsub.s32 0, %v2471
    %v2473 = vrot.slane %v2468, %v2472
    %v2476 = vrot.slane %v2459, 6
    %v2477 = vsel %vm421, %v2476, 0
    %2479 = vmatprep.subr.mxu0 0.0
    %2480 = vmatpush1.msra.mxu0 %v2460
    %2481 = vmatprep.subr.mxu0 0.0
    %2482 = vmatpush1.msra.mxu0 %v2461
    %2483 = vmatprep.subr.mxu0 0.0
    %2484 = vmatpush1.msra.mxu0 %v2462
    %2485 = vmatprep.subr.mxu0 0.0
    %2486 = vmatpush1.msra.mxu0 %v2463
    %2487 = vmatprep.subr.mxu0 0.0
    %2488 = vmatpush1.msra.mxu0 %v2464
    %2489 = vmatprep.subr.mxu0 0.0
    %2490 = vmatpush1.msra.mxu0 %v2465
    %2491 = vmatprep.subr.mxu0 0.0
    %2492 = vmatpush1.msra.mxu0 %v2466
    %2493 = vmatprep.subr.mxu0 0.0
    %2494 = vmatpush1.msra.mxu0 %v2467
    %2495 = vmatprep.subr.mxu0 0.0
    %2496 = vmatpush1.msra.mxu0 0.0
    %2497 = vmatprep.subr.mxu0 0.0
    %2498 = vmatpush1.msra.mxu0 0.0
    %2499 = vmatprep.subr.mxu0 0.0
    %2500 = vmatpush1.msra.mxu0 0.0
    %2501 = vmatprep.subr.mxu0 0.0
    %2502 = vmatpush1.msra.mxu0 0.0
    %2503 = vmatprep.subr.mxu0 0.0
    %2504 = vmatpush1.msra.mxu0 0.0
    %2505 = vmatprep.subr.mxu0 0.0
    %2506 = vmatpush1.msra.mxu0 0.0
    %2507 = vmatprep.subr.mxu0 0.0
    %2508 = vmatpush1.msra.mxu0 0.0
    %2509 = vmatprep.subr.mxu0 0.0
    %2510 = vmatpush1.msra.mxu0 0.0
    %2511 = vmatprep.subr.mxu0 0.0
    %2512 = vmatpush1.msra.mxu0 0.0
    %2513 = vmatprep.subr.mxu0 0.0
    %2514 = vmatpush1.msra.mxu0 0.0
    %2515 = vmatprep.subr.mxu0 0.0
    %2516 = vmatpush1.msra.mxu0 0.0
    %2517 = vmatprep.subr.mxu0 0.0
    %2518 = vmatpush1.msra.mxu0 0.0
    %2519 = vmatprep.subr.mxu0 0.0
    %2520 = vmatpush1.msra.mxu0 0.0
    %2521 = vmatprep.subr.mxu0 0.0
    %2522 = vmatpush1.msra.mxu0 0.0
    %2523 = vmatprep.subr.mxu0 0.0
    %2524 = vmatpush1.msra.mxu0 0.0
    %2525 = vmatprep.subr.mxu0 0.0
    %2526 = vmatpush1.msra.mxu0 0.0
    %2527 = vmatprep.subr.mxu0 0.0
    %2528 = vmatpush1.msra.mxu0 0.0
    %2529 = vmatprep.subr.mxu0 0.0
    %2530 = vmatpush1.msra.mxu0 0.0
    %2531 = vmatprep.subr.mxu0 0.0
    %2532 = vmatpush1.msra.mxu0 0.0
    %2533 = vmatprep.subr.mxu0 0.0
    %2534 = vmatpush1.msra.mxu0 0.0
    %2535 = vmatprep.subr.mxu0 0.0
    %2536 = vmatpush1.msra.mxu0 0.0
    %2537 = vmatprep.subr.mxu0 0.0
    %2538 = vmatpush1.msra.mxu0 0.0
    %2539 = vmatprep.subr.mxu0 0.0
    %2540 = vmatpush1.msra.mxu0 0.0
    %2541 = vmatprep.subr.mxu0 0.0
    %2542 = vmatpush1.msra.mxu0 0.0
    %2543 = vmatprep.mubr.f32.mxu0 0.0
    %2544 = vmatmul.mubr.f32.gmra.mrb[0].mxu0 %v2477
    %v2545 = vpop.f32.mrb[0].mxu0
    %v2546 = vadd.f32 %v2473, %v2545
    %v2547 = vpop.f32.mrb[0].mxu0
    %2548 = vdwg.mxu0
    %v2549 = vxor.u32 %v2546, 2147483648
    %v2550 = vmul.f32 %v2549, 1.442695
    %v2551 = vpow.pop %v2550
    %v2552 = vadd.f32 %v2551, 1.0
    %v2553 = vrcp.pop %v2552
    %v2554 = vmul.f32 1.0, %v2553
    %vm2555 = vcmask 25600
    %2556 = vst.msk [vmem:[#allocation16] sm:$0x3] %vm2555, %v2554
    // Predicated region
    $region86: #{birnn_forward.1} parent=1 // pred_check
      _
    $region87: #{birnn_forward.1} parent=1 // pred_check_branch
      %2558 = sbr.rel (0) target = $region89
    $region88: #{birnn_forward.1} parent=1 // pred_region
      %s2560 = ssub.s32 32, 32
      %2561 = vsyncadd [#allocation4], %s2560
      %s2563 = sshll.u32 [#allocation16], 4
      %s2564 = int_to_ptr.vmem [resolvable:$true] %s2563
      %2566 = dma.vmem_to_hbm [thread:$0]  %s2564, 32, %s13, [#allocation4]
    $region89: #{birnn_forward.1} parent=1 // pred_fallthru
      _
    // Predicated region
    $region90: #{birnn_forward.1} parent=1 // pred_check
      _
    $region91: #{birnn_forward.1} parent=1 // pred_check_branch
      %2568 = sbr.rel (0) target = $region93
    $region92: #{birnn_forward.1} parent=1 // pred_region
      %2569 = dma.done [#allocation4], 32
    $region93: #{birnn_forward.1} parent=1 // pred_fallthru
      _
    %2570 = vsyncpa [#allocation3], 1
    %2571 = vsyncpa [#allocation6], 1
    %2572 = vsyncpa [#allocation9], 1
    %2573 = vsyncpa [#allocation12], 1
    %2574 = vsyncpa [#allocation15], 1
    %2575 = vsyncpa [#allocation4], 1

</llo_original>
